<compile_context>
chip_gen: v6e
topology: v6e:2x2x1
jax: 0.10.0
libtpu: 0.0.40
codegen_flags: <defaults>
</compile_context>

<pallas_src>
import functools

import jax
import jax.numpy as jnp
from jax import lax
from jax.experimental import pallas as pl
from jax.experimental.pallas import tpu as pltpu

_MB = 1024 * 1024


# -----------------------------------------------------------------------------
# Small static helpers (tiling / core-count choices)
# -----------------------------------------------------------------------------
def _largest_divisor(n, cap):
    for d in range(min(cap, n), 0, -1):
        if n % d == 0:
            return d
    return 1


def _time_chunk(T, cap=32):
    """Return (chunk, padded_T). Prefer an exact divisor; otherwise pad + mask the tail."""
    d = _largest_divisor(T, cap)
    if d >= min(T, 8):
        return d, T
    best_c, best_tp = None, None
    for c in (8, 16, 32):
        if c > cap:
            continue
        tp = ((T + c - 1) // c) * c
        if best_tp is None or tp < best_tp or (tp == best_tp and c > best_c):
            best_c, best_tp = c, tp
    return best_c, best_tp


def _cores_per_chip():
    """2 TensorCores per chip on megacore parts (v4/v5p) and v7x; 1 on v5e/v6e."""
    try:
        kind = jax.devices()[0].device_kind.lower()
    except Exception:
        return 1
    return 2 if any(tag in kind for tag in ("v4", "v5p", "v7")) else 1


def _batch_split(b_pad):
    """Split the padded batch across TensorCores only on 2-core parts (v7x)."""
    if _cores_per_chip() >= 2 and b_pad >= 32 and (b_pad // 2) % 16 == 0:
        return 2, b_pad // 2
    return 1, b_pad


def _nbytes(shape, dtype):
    n = 1
    for d in shape:
        n *= int(d)
    return n * jnp.dtype(dtype).itemsize


def _vmem_limit(bytes_needed):
    """Scoped-VMEM budget with 2x headroom; floor at 32 MiB, cap below v7x's 64 MiB."""
    return int(min(max(2 * bytes_needed, 32 * _MB), 64 * _MB))


# -----------------------------------------------------------------------------
# One LSTM cell step (gate order matches PyTorch: i, f, g, o).
# f32 math / f32 state; MXU operands in bf16, accumulation in f32.
# -----------------------------------------------------------------------------
def _lstm_cell(gx_t, h, c, whh, H):
    gates = gx_t + jnp.dot(h.astype(whh.dtype), whh,
                           preferred_element_type=jnp.float32)
    i_g = jax.nn.sigmoid(gates[:, 0 * H:1 * H])
    f_g = jax.nn.sigmoid(gates[:, 1 * H:2 * H])
    g_g = jnp.tanh(gates[:, 2 * H:3 * H])
    o_g = jax.nn.sigmoid(gates[:, 3 * H:4 * H])
    c_new = f_g * c + i_g * g_g
    h_new = o_g * jnp.tanh(c_new)
    return h_new, c_new


# -----------------------------------------------------------------------------
# Kernel 1: fused (input-projection + recurrence) for intermediate layers.
# grid = (batch_blocks, time_chunks); (h, c) carried in VMEM scratch across chunks.
# x rows are flattened time-major: row s*B_blk + r is (timestep s, batch row r).
# -----------------------------------------------------------------------------
def _lstm_seq_kernel(x_ref, wih_ref, whh_ref, b_ref, y_ref, h_ref, c_ref, gx_ref,
                     *, hidden_size, chunk, batch_block, t_valid, mask_tail):
    t = pl.program_id(1)

    @pl.when(t == 0)
    def _():
        h_ref[...] = jnp.zeros_like(h_ref)
        c_ref[...] = jnp.zeros_like(c_ref)

    # Fused input projection for the whole chunk: one bf16 MXU matmul, f32 accumulation.
    # Result lives only in VMEM (gx never hits HBM).
    gx_ref[...] = (jnp.dot(x_ref[...], wih_ref[...],
                           preferred_element_type=jnp.float32) + b_ref[...])

    whh = whh_ref[...]

    def body(s, carry):
        h, c = carry
        r0 = pl.multiple_of(s * batch_block, batch_block)
        gx_t = gx_ref[pl.ds(r0, batch_block), :]
        h_new, c_new = _lstm_cell(gx_t, h, c, whh, hidden_size)
        if mask_tail:
            valid = (t * chunk + s) < t_valid
            h_new = jnp.where(valid, h_new, h)
            c_new = jnp.where(valid, c_new, c)
        y_ref[pl.ds(r0, batch_block), :] = h_new.astype(y_ref.dtype)
        return (h_new, c_new)

    h, c = lax.fori_loop(0, chunk, body, (h_ref[...], c_ref[...]),
                         unroll=min(chunk, 8))
    h_ref[...] = h
    c_ref[...] = c


def run_lstm_layer(x, wih_t, whh_t, bias, *, chunk, t_valid, batch_block):
    """x: (nb, T_pad*B_blk, D) bf16 -> hidden states (nb, T_pad*B_blk, H) bf16."""
    nb, rows, D = x.shape
    H4 = wih_t.shape[1]
    H = whh_t.shape[0]
    B_blk = batch_block
    blk_rows = chunk * B_blk
    n_chunks = rows // blk_rows
    mask_tail = (n_chunks * chunk != t_valid)

    bytes_needed = (2 * _nbytes((blk_rows, D), x.dtype)
                    + 2 * _nbytes((D, H4), wih_t.dtype)
                    + 2 * _nbytes((H, H4), whh_t.dtype)
                    + 2 * _nbytes((1, H4), bias.dtype)
                    + 2 * _nbytes((blk_rows, H), jnp.bfloat16)
                    + 2 * _nbytes((B_blk, H), jnp.float32)
                    + _nbytes((blk_rows, H4), jnp.float32))

    kernel = functools.partial(_lstm_seq_kernel, hidden_size=H, chunk=chunk,
                               batch_block=B_blk, t_valid=t_valid, mask_tail=mask_tail)
    return pl.pallas_call(
        kernel,
        out_shape=jax.ShapeDtypeStruct((nb, rows, H), jnp.bfloat16),
        grid_spec=pltpu.PrefetchScalarGridSpec(
            num_scalar_prefetch=0,
            grid=(nb, n_chunks),
            in_specs=[
                pl.BlockSpec((None, blk_rows, D), lambda b, t: (b, t, 0)),  # x chunk
                pl.BlockSpec((D, H4), lambda b, t: (0, 0)),                 # W_ih^T (resident)
                pl.BlockSpec((H, H4), lambda b, t: (0, 0)),                 # W_hh^T (resident)
                pl.BlockSpec((1, H4), lambda b, t: (0, 0)),                 # fused bias
            ],
            out_specs=pl.BlockSpec((None, blk_rows, H), lambda b, t: (b, t, 0)),
            scratch_shapes=[
                pltpu.VMEM((B_blk, H), jnp.float32),          # h state
                pltpu.VMEM((B_blk, H), jnp.float32),          # c state
                pltpu.VMEM((blk_rows, H4), jnp.float32),      # chunk gate pre-acts
            ],
        ),
        compiler_params=pltpu.CompilerParams(
            dimension_semantics=("parallel", "arbitrary"),
            vmem_limit_bytes=_vmem_limit(bytes_needed)),
    )(x, wih_t, whh_t, bias)


# -----------------------------------------------------------------------------
# Kernel 2: last LSTM layer fused with the final Linear.
# Only the (B_blk, O) result leaves the kernel (written on the last time chunk).
# -----------------------------------------------------------------------------
def _lstm_last_kernel(x_ref, wih_ref, whh_ref, b_ref, fcw_ref, fcb_ref,
                      o_ref, h_ref, c_ref, gx_ref,
                      *, hidden_size, chunk, batch_block, t_valid, mask_tail):
    t = pl.program_id(1)

    @pl.when(t == 0)
    def _():
        h_ref[...] = jnp.zeros_like(h_ref)
        c_ref[...] = jnp.zeros_like(c_ref)

    gx_ref[...] = (jnp.dot(x_ref[...], wih_ref[...],
                           preferred_element_type=jnp.float32) + b_ref[...])

    whh = whh_ref[...]

    def body(s, carry):
        h, c = carry
        r0 = pl.multiple_of(s * batch_block, batch_block)
        gx_t = gx_ref[pl.ds(r0, batch_block), :]
        h_new, c_new = _lstm_cell(gx_t, h, c, whh, hidden_size)
        if mask_tail:
            valid = (t * chunk + s) < t_valid
            h_new = jnp.where(valid, h_new, h)
            c_new = jnp.where(valid, c_new, c)
        return (h_new, c_new)

    h, c = lax.fori_loop(0, chunk, body, (h_ref[...], c_ref[...]),
                         unroll=min(chunk, 8))
    h_ref[...] = h
    c_ref[...] = c

    @pl.when(t == pl.num_programs(1) - 1)
    def _():
        o_ref[...] = (jnp.dot(h.astype(fcw_ref.dtype), fcw_ref[...],
                              preferred_element_type=jnp.float32)
                      + fcb_ref[...]).astype(o_ref.dtype)


def run_lstm_last_layer(x, wih_t, whh_t, bias, fc_wt, fc_b, *, chunk, t_valid, batch_block):
    """x: (nb, T_pad*B_blk, D) bf16 -> (nb, B_blk, O) f32 (last-timestep FC output)."""
    nb, rows, D = x.shape
    H4 = wih_t.shape[1]
    H = whh_t.shape[0]
    O = fc_wt.shape[1]
    B_blk = batch_block
    blk_rows = chunk * B_blk
    n_chunks = rows // blk_rows
    mask_tail = (n_chunks * chunk != t_valid)

    bytes_needed = (2 * _nbytes((blk_rows, D), x.dtype)
                    + 2 * _nbytes((D, H4), wih_t.dtype)
                    + 2 * _nbytes((H, H4), whh_t.dtype)
                    + 2 * _nbytes((1, H4), bias.dtype)
                    + 2 * _nbytes((H, O), fc_wt.dtype)
                    + 2 * _nbytes((1, O), fc_b.dtype)
                    + 2 * _nbytes((B_blk, O), jnp.float32)
                    + 2 * _nbytes((B_blk, H), jnp.float32)
                    + _nbytes((blk_rows, H4), jnp.float32))

    kernel = functools.partial(_lstm_last_kernel, hidden_size=H, chunk=chunk,
                               batch_block=B_blk, t_valid=t_valid, mask_tail=mask_tail)
    return pl.pallas_call(
        kernel,
        out_shape=jax.ShapeDtypeStruct((nb, B_blk, O), jnp.float32),
        grid_spec=pltpu.PrefetchScalarGridSpec(
            num_scalar_prefetch=0,
            grid=(nb, n_chunks),
            in_specs=[
                pl.BlockSpec((None, blk_rows, D), lambda b, t: (b, t, 0)),  # x chunk
                pl.BlockSpec((D, H4), lambda b, t: (0, 0)),                 # W_ih^T (resident)
                pl.BlockSpec((H, H4), lambda b, t: (0, 0)),                 # W_hh^T (resident)
                pl.BlockSpec((1, H4), lambda b, t: (0, 0)),                 # fused bias
                pl.BlockSpec((H, O), lambda b, t: (0, 0)),                  # fc W^T (resident)
                pl.BlockSpec((1, O), lambda b, t: (0, 0)),                  # fc bias
            ],
            out_specs=pl.BlockSpec((None, B_blk, O), lambda b, t: (b, 0, 0)),
            scratch_shapes=[
                pltpu.VMEM((B_blk, H), jnp.float32),          # h state
                pltpu.VMEM((B_blk, H), jnp.float32),          # c state
                pltpu.VMEM((blk_rows, H4), jnp.float32),      # chunk gate pre-acts
            ],
        ),
        compiler_params=pltpu.CompilerParams(
            dimension_semantics=("parallel", "arbitrary"),
            vmem_limit_bytes=_vmem_limit(bytes_needed)),
    )(x, wih_t, whh_t, bias, fc_wt, fc_b)


# -----------------------------------------------------------------------------
# Parameter prep (once) + full forward: x (B, T, input_size) -> (B, output_size)
# -----------------------------------------------------------------------------
def prepare_params(params, compute_dtype=jnp.bfloat16):
    """Pre-transpose weights to bf16 and fold the two biases once (out of the call path)."""
    layers = []
    for (w_ih, w_hh, b_ih, b_hh) in params["lstm"]:
        layers.append((jnp.transpose(w_ih).astype(compute_dtype),          # (D_in, 4H)
                       jnp.transpose(w_hh).astype(compute_dtype),          # (H, 4H)
                       (b_ih + b_hh)[None, :].astype(jnp.float32)))        # (1, 4H)
    return {"lstm": layers,
            "fc_wt": jnp.transpose(params["fc_w"]).astype(compute_dtype),  # (H, O)
            "fc_b": params["fc_b"][None, :].astype(jnp.float32)}           # (1, O)


def lstm_model_forward(x, prepared):
    B, T, D = x.shape
    B_pad = ((B + 15) // 16) * 16            # 16-row alignment: bf16 sublane tile
    Tc, T_pad = _time_chunk(T)
    nb, B_blk = _batch_split(B_pad)

    # Time-major, padded, bf16, and flattened so each time chunk is one dense 2D block:
    # layout (nb, T_pad*B_blk, D) with row s*B_blk + r = (timestep s, batch row r).
    x_t = jnp.transpose(x, (1, 0, 2)).astype(jnp.bfloat16)           # (T, B, D)
    x_t = jnp.pad(x_t, ((0, T_pad - T), (0, B_pad - B), (0, 0)))     # (T_pad, B_pad, D)
    cur = (x_t.reshape(T_pad, nb, B_blk, D)
               .transpose(1, 0, 2, 3)
               .reshape(nb, T_pad * B_blk, D))

    layers = prepared["lstm"]
    out = None
    for li, (wih_t, whh_t, bias) in enumerate(layers):
        if li < len(layers) - 1:
            cur = run_lstm_layer(cur, wih_t, whh_t, bias,
                                 chunk=Tc, t_valid=T, batch_block=B_blk)
        else:
            out = run_lstm_last_layer(cur, wih_t, whh_t, bias,
                                      prepared["fc_wt"], prepared["fc_b"],
                                      chunk=Tc, t_valid=T, batch_block=B_blk)
    return out.reshape(nb * B_blk, -1)[:B]


# -----------------------------------------------------------------------------
# Pure-JAX f32 reference (lax.scan) for correctness checking.
# -----------------------------------------------------------------------------
def lstm_model_reference(x, params):
    B = x.shape[0]
    out = x
    for (w_ih, w_hh, b_ih, b_hh) in params["lstm"]:
        H = w_hh.shape[1]

        def step(carry, x_t):
            h, c = carry
            gates = x_t @ w_ih.T + h @ w_hh.T + b_ih + b_hh
            i, f, g, o = jnp.split(gates, 4, axis=-1)
            i, f, o = jax.nn.sigmoid(i), jax.nn.sigmoid(f), jax.nn.sigmoid(o)
            g = jnp.tanh(g)
            c = f * c + i * g
            h = o * jnp.tanh(c)
            return (h, c), h

        init = (jnp.zeros((B, H), jnp.float32), jnp.zeros((B, H), jnp.float32))
        _, ys = jax.lax.scan(step, init, jnp.transpose(out, (1, 0, 2)))
        out = jnp.transpose(ys, (1, 0, 2))
    last = out[:, -1, :]
    return last @ params["fc_w"].T + params["fc_b"]


def init_params(key, input_size, hidden_size, output_size, num_layers):
    params = {"lstm": []}
    k = 1.0 / jnp.sqrt(hidden_size)
    for layer in range(num_layers):
        d_in = input_size if layer == 0 else hidden_size
        key, k1, k2, k3, k4 = jax.random.split(key, 5)
        params["lstm"].append((
            jax.random.uniform(k1, (4 * hidden_size, d_in), jnp.float32, -k, k),
            jax.random.uniform(k2, (4 * hidden_size, hidden_size), jnp.float32, -k, k),
            jax.random.uniform(k3, (4 * hidden_size,), jnp.float32, -k, k),
            jax.random.uniform(k4, (4 * hidden_size,), jnp.float32, -k, k),
        ))
    key, k5, k6 = jax.random.split(key, 3)
    kf = 1.0 / jnp.sqrt(hidden_size)
    params["fc_w"] = jax.random.uniform(k5, (output_size, hidden_size), jnp.float32, -kf, kf)
    params["fc_b"] = jax.random.uniform(k6, (output_size,), jnp.float32, -kf, kf)
    return params


if __name__ == "__main__":
    batch, seq = 2, 8
    input_size, hidden_size, output_size, num_layers = 16, 32, 8, 2

    key = jax.random.PRNGKey(0)
    key, kx = jax.random.split(key)
    x = jax.random.normal(kx, (batch, seq, input_size), jnp.float32)

    params = init_params(key, input_size, hidden_size, output_size, num_layers)
    prepared = prepare_params(params)

    fwd = jax.jit(lstm_model_forward)
    out = jax.block_until_ready(fwd(x, prepared))

    ref = lstm_model_reference(x, params)
    assert out.shape == (batch, output_size)
    # bf16 matmul operands / inter-layer activations -> slightly looser tolerance vs f32 ref.
    assert jnp.allclose(out, ref, rtol=2e-2, atol=2e-2), "mismatch vs reference"

    print("KERNEL_OK")
</pallas_src>

<mosaic_0001>
module attributes {stable_mosaic.version = 11 : i64} {
  func.func @_lstm_seq_kernel(%arg0: i32, %arg1: i32, %arg2: memref<1x128x16xbf16, #tpu.memory_space<vmem>>, %arg3: memref<16x128xbf16, #tpu.memory_space<vmem>>, %arg4: memref<32x128xbf16, #tpu.memory_space<vmem>>, %arg5: memref<1x128xf32, #tpu.memory_space<vmem>>, %arg6: memref<1x128x32xbf16, #tpu.memory_space<vmem>>, %arg7: memref<16x32xf32, #tpu.memory_space<vmem>>, %arg8: memref<16x32xf32, #tpu.memory_space<vmem>>, %arg9: memref<128x128xf32, #tpu.memory_space<vmem>>) attributes {dimension_semantics = [#tpu.dimension_semantics<parallel>, #tpu.dimension_semantics<arbitrary>], iteration_bounds = array<i64: 1, 1>, scalar_prefetch = 0 : i64, scratch_operands = 3 : i64, tpu.core_type = #tpu.core_type<tc>, window_params = [{transform_indices = @transform_0, window_bounds = array<i64: 1, 128, 16>}, {pipeline_mode = #tpu.pipeline_mode<synchronous>, transform_indices = @transform_1, window_bounds = array<i64: 16, 128>}, {pipeline_mode = #tpu.pipeline_mode<synchronous>, transform_indices = @transform_2, window_bounds = array<i64: 32, 128>}, {pipeline_mode = #tpu.pipeline_mode<synchronous>, transform_indices = @transform_3, window_bounds = array<i64: 1, 128>}, {transform_indices = @transform_4, window_bounds = array<i64: 1, 128, 32>}]} {
    %c0_i32 = arith.constant 0 : i32
    %0 = arith.cmpi eq, %arg1, %c0_i32 : i32
    %1 = arith.extui %0 : i1 to i32
    %c0_i32_0 = arith.constant 0 : i32
    %2 = arith.cmpi ne, %1, %c0_i32_0 : i32
    scf.if %2 {
      %cst_83 = arith.constant 0.000000e+00 : f32
      %312 = vector.broadcast %cst_83 : f32 to vector<16x32xf32>
      %c0_84 = arith.constant 0 : index
      %c0_85 = arith.constant 0 : index
      %313 = vector.load %arg7[%c0_84, %c0_85] : memref<16x32xf32, #tpu.memory_space<vmem>>, vector<16x32xf32>
      tpu.vector_store %arg7[%c0_84, %c0_85], %312 {strides = array<i32>} : memref<16x32xf32, #tpu.memory_space<vmem>>, vector<16x32xf32>,
      %cst_86 = arith.constant 0.000000e+00 : f32
      %314 = vector.broadcast %cst_86 : f32 to vector<16x32xf32>
      %c0_87 = arith.constant 0 : index
      %c0_88 = arith.constant 0 : index
      %315 = vector.load %arg8[%c0_87, %c0_88] : memref<16x32xf32, #tpu.memory_space<vmem>>, vector<16x32xf32>
      tpu.vector_store %arg8[%c0_87, %c0_88], %314 {strides = array<i32>} : memref<16x32xf32, #tpu.memory_space<vmem>>, vector<16x32xf32>,
    } else {
    }
    %c0 = arith.constant 0 : index
    %c0_1 = arith.constant 0 : index
    %c0_2 = arith.constant 0 : index
    %3 = vector.load %arg2[%c0, %c0_1, %c0_2] : memref<1x128x16xbf16, #tpu.memory_space<vmem>>, vector<1x128x16xbf16>
    %4 = vector.shape_cast %3 : vector<1x128x16xbf16> to vector<128x16xbf16>
    %c0_3 = arith.constant 0 : index
    %c0_4 = arith.constant 0 : index
    %5 = vector.load %arg3[%c0_3, %c0_4] : memref<16x128xbf16, #tpu.memory_space<vmem>>, vector<16x128xbf16>
    %cst = arith.constant dense<0.000000e+00> : vector<128x128xf32>
    %6 = tpu.matmul %4, %5, %cst {dimension_numbers = #tpu.dot_dimension_numbers<[1], [0], [0], [1], [0, 0, 1, 1], [], []>} : vector<128x16xbf16>, vector<16x128xbf16>, vector<128x128xf32> -> vector<128x128xf32>
    %c0_5 = arith.constant 0 : index
    %c0_6 = arith.constant 0 : index
    %7 = vector.load %arg5[%c0_5, %c0_6] : memref<1x128xf32, #tpu.memory_space<vmem>>, vector<1x128xf32>
    %8 = vector.broadcast %7 : vector<1x128xf32> to vector<128x128xf32>
    %9 = arith.addf %6, %8 : vector<128x128xf32>
    %c0_7 = arith.constant 0 : index
    %c0_8 = arith.constant 0 : index
    %10 = vector.load %arg9[%c0_7, %c0_8] : memref<128x128xf32, #tpu.memory_space<vmem>>, vector<128x128xf32>
    tpu.vector_store %arg9[%c0_7, %c0_8], %9 {strides = array<i32>} : memref<128x128xf32, #tpu.memory_space<vmem>>, vector<128x128xf32>,
    %c0_9 = arith.constant 0 : index
    %c0_10 = arith.constant 0 : index
    %11 = vector.load %arg4[%c0_9, %c0_10] : memref<32x128xbf16, #tpu.memory_space<vmem>>, vector<32x128xbf16>
    %c0_11 = arith.constant 0 : index
    %c0_12 = arith.constant 0 : index
    %12 = vector.load %arg7[%c0_11, %c0_12] : memref<16x32xf32, #tpu.memory_space<vmem>>, vector<16x32xf32>
    %c0_13 = arith.constant 0 : index
    %c0_14 = arith.constant 0 : index
    %13 = vector.load %arg8[%c0_13, %c0_14] : memref<16x32xf32, #tpu.memory_space<vmem>>, vector<16x32xf32>
    %c0_i32_15 = arith.constant 0 : i32
    %c16_i32 = arith.constant 16 : i32
    %14 = arith.muli %c0_i32_15, %c16_i32 : i32
    %15 = tpu.assume_multiple %14, 16 : i32
    %16 = arith.index_cast %15 : i32 to index
    %c0_16 = arith.constant 0 : index
    %17 = vector.load %arg9[%16, %c0_16] : memref<128x128xf32, #tpu.memory_space<vmem>>, vector<16x128xf32>
    %18 = arith.truncf %12 : vector<16x32xf32> to vector<16x32xbf16>
    %cst_17 = arith.constant dense<0.000000e+00> : vector<16x128xf32>
    %19 = tpu.matmul %18, %11, %cst_17 {dimension_numbers = #tpu.dot_dimension_numbers<[1], [0], [0], [1], [0, 0, 1, 1], [], []>} : vector<16x32xbf16>, vector<32x128xbf16>, vector<16x128xf32> -> vector<16x128xf32>
    %20 = arith.addf %17, %19 : vector<16x128xf32>
    %21 = vector.extract_strided_slice %20 {offsets = [0, 0], sizes = [16, 32], strides = [1, 1]} : vector<16x128xf32> to vector<16x32xf32>
    %22 = arith.negf %21 : vector<16x32xf32>
    %23 = math.exp %22 : vector<16x32xf32>
    %cst_18 = arith.constant 1.000000e+00 : f32
    %24 = vector.broadcast %cst_18 : f32 to vector<16x32xf32>
    %25 = arith.addf %24, %23 : vector<16x32xf32>
    %26 = arith.divf %24, %25 : vector<16x32xf32>
    %27 = vector.extract_strided_slice %20 {offsets = [0, 32], sizes = [16, 32], strides = [1, 1]} : vector<16x128xf32> to vector<16x32xf32>
    %28 = arith.negf %27 : vector<16x32xf32>
    %29 = math.exp %28 : vector<16x32xf32>
    %cst_19 = arith.constant 1.000000e+00 : f32
    %30 = vector.broadcast %cst_19 : f32 to vector<16x32xf32>
    %31 = arith.addf %30, %29 : vector<16x32xf32>
    %32 = arith.divf %30, %31 : vector<16x32xf32>
    %33 = vector.extract_strided_slice %20 {offsets = [0, 64], sizes = [16, 32], strides = [1, 1]} : vector<16x128xf32> to vector<16x32xf32>
    %34 = math.tanh %33 : vector<16x32xf32>
    %35 = vector.extract_strided_slice %20 {offsets = [0, 96], sizes = [16, 32], strides = [1, 1]} : vector<16x128xf32> to vector<16x32xf32>
    %36 = arith.negf %35 : vector<16x32xf32>
    %37 = math.exp %36 : vector<16x32xf32>
    %cst_20 = arith.constant 1.000000e+00 : f32
    %38 = vector.broadcast %cst_20 : f32 to vector<16x32xf32>
    %39 = arith.addf %38, %37 : vector<16x32xf32>
    %40 = arith.divf %38, %39 : vector<16x32xf32>
    %41 = arith.mulf %32, %13 : vector<16x32xf32>
    %42 = arith.mulf %26, %34 : vector<16x32xf32>
    %43 = arith.addf %41, %42 : vector<16x32xf32>
    %44 = math.tanh %43 : vector<16x32xf32>
    %45 = arith.mulf %40, %44 : vector<16x32xf32>
    %46 = arith.truncf %45 : vector<16x32xf32> to vector<16x32xbf16>
    %c0_21 = arith.constant 0 : index
    %47 = arith.index_cast %15 : i32 to index
    %c0_22 = arith.constant 0 : index
    %48 = vector.load %arg6[%c0_21, %47, %c0_22] : memref<1x128x32xbf16, #tpu.memory_space<vmem>>, vector<1x16x32xbf16>
    %49 = vector.shape_cast %48 : vector<1x16x32xbf16> to vector<16x32xbf16>
    %50 = vector.shape_cast %46 : vector<16x32xbf16> to vector<1x16x32xbf16>
    tpu.vector_store %arg6[%c0_21, %47, %c0_22], %50 {strides = array<i32>} : memref<1x128x32xbf16, #tpu.memory_space<vmem>>, vector<1x16x32xbf16>,
    %c1_i32 = arith.constant 1 : i32
    %c16_i32_23 = arith.constant 16 : i32
    %51 = arith.muli %c1_i32, %c16_i32_23 : i32
    %52 = tpu.assume_multiple %51, 16 : i32
    %53 = arith.index_cast %52 : i32 to index
    %c0_24 = arith.constant 0 : index
    %54 = vector.load %arg9[%53, %c0_24] : memref<128x128xf32, #tpu.memory_space<vmem>>, vector<16x128xf32>
    %55 = arith.truncf %45 : vector<16x32xf32> to vector<16x32xbf16>
    %cst_25 = arith.constant dense<0.000000e+00> : vector<16x128xf32>
    %56 = tpu.matmul %55, %11, %cst_25 {dimension_numbers = #tpu.dot_dimension_numbers<[1], [0], [0], [1], [0, 0, 1, 1], [], []>} : vector<16x32xbf16>, vector<32x128xbf16>, vector<16x128xf32> -> vector<16x128xf32>
    %57 = arith.addf %54, %56 : vector<16x128xf32>
    %58 = vector.extract_strided_slice %57 {offsets = [0, 0], sizes = [16, 32], strides = [1, 1]} : vector<16x128xf32> to vector<16x32xf32>
    %59 = arith.negf %58 : vector<16x32xf32>
    %60 = math.exp %59 : vector<16x32xf32>
    %cst_26 = arith.constant 1.000000e+00 : f32
    %61 = vector.broadcast %cst_26 : f32 to vector<16x32xf32>
    %62 = arith.addf %61, %60 : vector<16x32xf32>
    %63 = arith.divf %61, %62 : vector<16x32xf32>
    %64 = vector.extract_strided_slice %57 {offsets = [0, 32], sizes = [16, 32], strides = [1, 1]} : vector<16x128xf32> to vector<16x32xf32>
    %65 = arith.negf %64 : vector<16x32xf32>
    %66 = math.exp %65 : vector<16x32xf32>
    %cst_27 = arith.constant 1.000000e+00 : f32
    %67 = vector.broadcast %cst_27 : f32 to vector<16x32xf32>
    %68 = arith.addf %67, %66 : vector<16x32xf32>
    %69 = arith.divf %67, %68 : vector<16x32xf32>
    %70 = vector.extract_strided_slice %57 {offsets = [0, 64], sizes = [16, 32], strides = [1, 1]} : vector<16x128xf32> to vector<16x32xf32>
    %71 = math.tanh %70 : vector<16x32xf32>
    %72 = vector.extract_strided_slice %57 {offsets = [0, 96], sizes = [16, 32], strides = [1, 1]} : vector<16x128xf32> to vector<16x32xf32>
    %73 = arith.negf %72 : vector<16x32xf32>
    %74 = math.exp %73 : vector<16x32xf32>
    %cst_28 = arith.constant 1.000000e+00 : f32
    %75 = vector.broadcast %cst_28 : f32 to vector<16x32xf32>
    %76 = arith.addf %75, %74 : vector<16x32xf32>
    %77 = arith.divf %75, %76 : vector<16x32xf32>
    %78 = arith.mulf %69, %43 : vector<16x32xf32>
    %79 = arith.mulf %63, %71 : vector<16x32xf32>
    %80 = arith.addf %78, %79 : vector<16x32xf32>
    %81 = math.tanh %80 : vector<16x32xf32>
    %82 = arith.mulf %77, %81 : vector<16x32xf32>
    %83 = arith.truncf %82 : vector<16x32xf32> to vector<16x32xbf16>
    %c0_29 = arith.constant 0 : index
    %84 = arith.index_cast %52 : i32 to index
    %c0_30 = arith.constant 0 : index
    %85 = vector.load %arg6[%c0_29, %84, %c0_30] : memref<1x128x32xbf16, #tpu.memory_space<vmem>>, vector<1x16x32xbf16>
    %86 = vector.shape_cast %85 : vector<1x16x32xbf16> to vector<16x32xbf16>
    %87 = vector.shape_cast %83 : vector<16x32xbf16> to vector<1x16x32xbf16>
    tpu.vector_store %arg6[%c0_29, %84, %c0_30], %87 {strides = array<i32>} : memref<1x128x32xbf16, #tpu.memory_space<vmem>>, vector<1x16x32xbf16>,
    %c2_i32 = arith.constant 2 : i32
    %c16_i32_31 = arith.constant 16 : i32
    %88 = arith.muli %c2_i32, %c16_i32_31 : i32
    %89 = tpu.assume_multiple %88, 16 : i32
    %90 = arith.index_cast %89 : i32 to index
    %c0_32 = arith.constant 0 : index
    %91 = vector.load %arg9[%90, %c0_32] : memref<128x128xf32, #tpu.memory_space<vmem>>, vector<16x128xf32>
    %92 = arith.truncf %82 : vector<16x32xf32> to vector<16x32xbf16>
    %cst_33 = arith.constant dense<0.000000e+00> : vector<16x128xf32>
    %93 = tpu.matmul %92, %11, %cst_33 {dimension_numbers = #tpu.dot_dimension_numbers<[1], [0], [0], [1], [0, 0, 1, 1], [], []>} : vector<16x32xbf16>, vector<32x128xbf16>, vector<16x128xf32> -> vector<16x128xf32>
    %94 = arith.addf %91, %93 : vector<16x128xf32>
    %95 = vector.extract_strided_slice %94 {offsets = [0, 0], sizes = [16, 32], strides = [1, 1]} : vector<16x128xf32> to vector<16x32xf32>
    %96 = arith.negf %95 : vector<16x32xf32>
    %97 = math.exp %96 : vector<16x32xf32>
    %cst_34 = arith.constant 1.000000e+00 : f32
    %98 = vector.broadcast %cst_34 : f32 to vector<16x32xf32>
    %99 = arith.addf %98, %97 : vector<16x32xf32>
    %100 = arith.divf %98, %99 : vector<16x32xf32>
    %101 = vector.extract_strided_slice %94 {offsets = [0, 32], sizes = [16, 32], strides = [1, 1]} : vector<16x128xf32> to vector<16x32xf32>
    %102 = arith.negf %101 : vector<16x32xf32>
    %103 = math.exp %102 : vector<16x32xf32>
    %cst_35 = arith.constant 1.000000e+00 : f32
    %104 = vector.broadcast %cst_35 : f32 to vector<16x32xf32>
    %105 = arith.addf %104, %103 : vector<16x32xf32>
    %106 = arith.divf %104, %105 : vector<16x32xf32>
    %107 = vector.extract_strided_slice %94 {offsets = [0, 64], sizes = [16, 32], strides = [1, 1]} : vector<16x128xf32> to vector<16x32xf32>
    %108 = math.tanh %107 : vector<16x32xf32>
    %109 = vector.extract_strided_slice %94 {offsets = [0, 96], sizes = [16, 32], strides = [1, 1]} : vector<16x128xf32> to vector<16x32xf32>
    %110 = arith.negf %109 : vector<16x32xf32>
    %111 = math.exp %110 : vector<16x32xf32>
    %cst_36 = arith.constant 1.000000e+00 : f32
    %112 = vector.broadcast %cst_36 : f32 to vector<16x32xf32>
    %113 = arith.addf %112, %111 : vector<16x32xf32>
    %114 = arith.divf %112, %113 : vector<16x32xf32>
    %115 = arith.mulf %106, %80 : vector<16x32xf32>
    %116 = arith.mulf %100, %108 : vector<16x32xf32>
    %117 = arith.addf %115, %116 : vector<16x32xf32>
    %118 = math.tanh %117 : vector<16x32xf32>
    %119 = arith.mulf %114, %118 : vector<16x32xf32>
    %120 = arith.truncf %119 : vector<16x32xf32> to vector<16x32xbf16>
    %c0_37 = arith.constant 0 : index
    %121 = arith.index_cast %89 : i32 to index
    %c0_38 = arith.constant 0 : index
    %122 = vector.load %arg6[%c0_37, %121, %c0_38] : memref<1x128x32xbf16, #tpu.memory_space<vmem>>, vector<1x16x32xbf16>
    %123 = vector.shape_cast %122 : vector<1x16x32xbf16> to vector<16x32xbf16>
    %124 = vector.shape_cast %120 : vector<16x32xbf16> to vector<1x16x32xbf16>
    tpu.vector_store %arg6[%c0_37, %121, %c0_38], %124 {strides = array<i32>} : memref<1x128x32xbf16, #tpu.memory_space<vmem>>, vector<1x16x32xbf16>,
    %c3_i32 = arith.constant 3 : i32
    %c16_i32_39 = arith.constant 16 : i32
    %125 = arith.muli %c3_i32, %c16_i32_39 : i32
    %126 = tpu.assume_multiple %125, 16 : i32
    %127 = arith.index_cast %126 : i32 to index
    %c0_40 = arith.constant 0 : index
    %128 = vector.load %arg9[%127, %c0_40] : memref<128x128xf32, #tpu.memory_space<vmem>>, vector<16x128xf32>
    %129 = arith.truncf %119 : vector<16x32xf32> to vector<16x32xbf16>
    %cst_41 = arith.constant dense<0.000000e+00> : vector<16x128xf32>
    %130 = tpu.matmul %129, %11, %cst_41 {dimension_numbers = #tpu.dot_dimension_numbers<[1], [0], [0], [1], [0, 0, 1, 1], [], []>} : vector<16x32xbf16>, vector<32x128xbf16>, vector<16x128xf32> -> vector<16x128xf32>
    %131 = arith.addf %128, %130 : vector<16x128xf32>
    %132 = vector.extract_strided_slice %131 {offsets = [0, 0], sizes = [16, 32], strides = [1, 1]} : vector<16x128xf32> to vector<16x32xf32>
    %133 = arith.negf %132 : vector<16x32xf32>
    %134 = math.exp %133 : vector<16x32xf32>
    %cst_42 = arith.constant 1.000000e+00 : f32
    %135 = vector.broadcast %cst_42 : f32 to vector<16x32xf32>
    %136 = arith.addf %135, %134 : vector<16x32xf32>
    %137 = arith.divf %135, %136 : vector<16x32xf32>
    %138 = vector.extract_strided_slice %131 {offsets = [0, 32], sizes = [16, 32], strides = [1, 1]} : vector<16x128xf32> to vector<16x32xf32>
    %139 = arith.negf %138 : vector<16x32xf32>
    %140 = math.exp %139 : vector<16x32xf32>
    %cst_43 = arith.constant 1.000000e+00 : f32
    %141 = vector.broadcast %cst_43 : f32 to vector<16x32xf32>
    %142 = arith.addf %141, %140 : vector<16x32xf32>
    %143 = arith.divf %141, %142 : vector<16x32xf32>
    %144 = vector.extract_strided_slice %131 {offsets = [0, 64], sizes = [16, 32], strides = [1, 1]} : vector<16x128xf32> to vector<16x32xf32>
    %145 = math.tanh %144 : vector<16x32xf32>
    %146 = vector.extract_strided_slice %131 {offsets = [0, 96], sizes = [16, 32], strides = [1, 1]} : vector<16x128xf32> to vector<16x32xf32>
    %147 = arith.negf %146 : vector<16x32xf32>
    %148 = math.exp %147 : vector<16x32xf32>
    %cst_44 = arith.constant 1.000000e+00 : f32
    %149 = vector.broadcast %cst_44 : f32 to vector<16x32xf32>
    %150 = arith.addf %149, %148 : vector<16x32xf32>
    %151 = arith.divf %149, %150 : vector<16x32xf32>
    %152 = arith.mulf %143, %117 : vector<16x32xf32>
    %153 = arith.mulf %137, %145 : vector<16x32xf32>
    %154 = arith.addf %152, %153 : vector<16x32xf32>
    %155 = math.tanh %154 : vector<16x32xf32>
    %156 = arith.mulf %151, %155 : vector<16x32xf32>
    %157 = arith.truncf %156 : vector<16x32xf32> to vector<16x32xbf16>
    %c0_45 = arith.constant 0 : index
    %158 = arith.index_cast %126 : i32 to index
    %c0_46 = arith.constant 0 : index
    %159 = vector.load %arg6[%c0_45, %158, %c0_46] : memref<1x128x32xbf16, #tpu.memory_space<vmem>>, vector<1x16x32xbf16>
    %160 = vector.shape_cast %159 : vector<1x16x32xbf16> to vector<16x32xbf16>
    %161 = vector.shape_cast %157 : vector<16x32xbf16> to vector<1x16x32xbf16>
    tpu.vector_store %arg6[%c0_45, %158, %c0_46], %161 {strides = array<i32>} : memref<1x128x32xbf16, #tpu.memory_space<vmem>>, vector<1x16x32xbf16>,
    %c4_i32 = arith.constant 4 : i32
    %c16_i32_47 = arith.constant 16 : i32
    %162 = arith.muli %c4_i32, %c16_i32_47 : i32
    %163 = tpu.assume_multiple %162, 16 : i32
    %164 = arith.index_cast %163 : i32 to index
    %c0_48 = arith.constant 0 : index
    %165 = vector.load %arg9[%164, %c0_48] : memref<128x128xf32, #tpu.memory_space<vmem>>, vector<16x128xf32>
    %166 = arith.truncf %156 : vector<16x32xf32> to vector<16x32xbf16>
    %cst_49 = arith.constant dense<0.000000e+00> : vector<16x128xf32>
    %167 = tpu.matmul %166, %11, %cst_49 {dimension_numbers = #tpu.dot_dimension_numbers<[1], [0], [0], [1], [0, 0, 1, 1], [], []>} : vector<16x32xbf16>, vector<32x128xbf16>, vector<16x128xf32> -> vector<16x128xf32>
    %168 = arith.addf %165, %167 : vector<16x128xf32>
    %169 = vector.extract_strided_slice %168 {offsets = [0, 0], sizes = [16, 32], strides = [1, 1]} : vector<16x128xf32> to vector<16x32xf32>
    %170 = arith.negf %169 : vector<16x32xf32>
    %171 = math.exp %170 : vector<16x32xf32>
    %cst_50 = arith.constant 1.000000e+00 : f32
    %172 = vector.broadcast %cst_50 : f32 to vector<16x32xf32>
    %173 = arith.addf %172, %171 : vector<16x32xf32>
    %174 = arith.divf %172, %173 : vector<16x32xf32>
    %175 = vector.extract_strided_slice %168 {offsets = [0, 32], sizes = [16, 32], strides = [1, 1]} : vector<16x128xf32> to vector<16x32xf32>
    %176 = arith.negf %175 : vector<16x32xf32>
    %177 = math.exp %176 : vector<16x32xf32>
    %cst_51 = arith.constant 1.000000e+00 : f32
    %178 = vector.broadcast %cst_51 : f32 to vector<16x32xf32>
    %179 = arith.addf %178, %177 : vector<16x32xf32>
    %180 = arith.divf %178, %179 : vector<16x32xf32>
    %181 = vector.extract_strided_slice %168 {offsets = [0, 64], sizes = [16, 32], strides = [1, 1]} : vector<16x128xf32> to vector<16x32xf32>
    %182 = math.tanh %181 : vector<16x32xf32>
    %183 = vector.extract_strided_slice %168 {offsets = [0, 96], sizes = [16, 32], strides = [1, 1]} : vector<16x128xf32> to vector<16x32xf32>
    %184 = arith.negf %183 : vector<16x32xf32>
    %185 = math.exp %184 : vector<16x32xf32>
    %cst_52 = arith.constant 1.000000e+00 : f32
    %186 = vector.broadcast %cst_52 : f32 to vector<16x32xf32>
    %187 = arith.addf %186, %185 : vector<16x32xf32>
    %188 = arith.divf %186, %187 : vector<16x32xf32>
    %189 = arith.mulf %180, %154 : vector<16x32xf32>
    %190 = arith.mulf %174, %182 : vector<16x32xf32>
    %191 = arith.addf %189, %190 : vector<16x32xf32>
    %192 = math.tanh %191 : vector<16x32xf32>
    %193 = arith.mulf %188, %192 : vector<16x32xf32>
    %194 = arith.truncf %193 : vector<16x32xf32> to vector<16x32xbf16>
    %c0_53 = arith.constant 0 : index
    %195 = arith.index_cast %163 : i32 to index
    %c0_54 = arith.constant 0 : index
    %196 = vector.load %arg6[%c0_53, %195, %c0_54] : memref<1x128x32xbf16, #tpu.memory_space<vmem>>, vector<1x16x32xbf16>
    %197 = vector.shape_cast %196 : vector<1x16x32xbf16> to vector<16x32xbf16>
    %198 = vector.shape_cast %194 : vector<16x32xbf16> to vector<1x16x32xbf16>
    tpu.vector_store %arg6[%c0_53, %195, %c0_54], %198 {strides = array<i32>} : memref<1x128x32xbf16, #tpu.memory_space<vmem>>, vector<1x16x32xbf16>,
    %c5_i32 = arith.constant 5 : i32
    %c16_i32_55 = arith.constant 16 : i32
    %199 = arith.muli %c5_i32, %c16_i32_55 : i32
    %200 = tpu.assume_multiple %199, 16 : i32
    %201 = arith.index_cast %200 : i32 to index
    %c0_56 = arith.constant 0 : index
    %202 = vector.load %arg9[%201, %c0_56] : memref<128x128xf32, #tpu.memory_space<vmem>>, vector<16x128xf32>
    %203 = arith.truncf %193 : vector<16x32xf32> to vector<16x32xbf16>
    %cst_57 = arith.constant dense<0.000000e+00> : vector<16x128xf32>
    %204 = tpu.matmul %203, %11, %cst_57 {dimension_numbers = #tpu.dot_dimension_numbers<[1], [0], [0], [1], [0, 0, 1, 1], [], []>} : vector<16x32xbf16>, vector<32x128xbf16>, vector<16x128xf32> -> vector<16x128xf32>
    %205 = arith.addf %202, %204 : vector<16x128xf32>
    %206 = vector.extract_strided_slice %205 {offsets = [0, 0], sizes = [16, 32], strides = [1, 1]} : vector<16x128xf32> to vector<16x32xf32>
    %207 = arith.negf %206 : vector<16x32xf32>
    %208 = math.exp %207 : vector<16x32xf32>
    %cst_58 = arith.constant 1.000000e+00 : f32
    %209 = vector.broadcast %cst_58 : f32 to vector<16x32xf32>
    %210 = arith.addf %209, %208 : vector<16x32xf32>
    %211 = arith.divf %209, %210 : vector<16x32xf32>
    %212 = vector.extract_strided_slice %205 {offsets = [0, 32], sizes = [16, 32], strides = [1, 1]} : vector<16x128xf32> to vector<16x32xf32>
    %213 = arith.negf %212 : vector<16x32xf32>
    %214 = math.exp %213 : vector<16x32xf32>
    %cst_59 = arith.constant 1.000000e+00 : f32
    %215 = vector.broadcast %cst_59 : f32 to vector<16x32xf32>
    %216 = arith.addf %215, %214 : vector<16x32xf32>
    %217 = arith.divf %215, %216 : vector<16x32xf32>
    %218 = vector.extract_strided_slice %205 {offsets = [0, 64], sizes = [16, 32], strides = [1, 1]} : vector<16x128xf32> to vector<16x32xf32>
    %219 = math.tanh %218 : vector<16x32xf32>
    %220 = vector.extract_strided_slice %205 {offsets = [0, 96], sizes = [16, 32], strides = [1, 1]} : vector<16x128xf32> to vector<16x32xf32>
    %221 = arith.negf %220 : vector<16x32xf32>
    %222 = math.exp %221 : vector<16x32xf32>
    %cst_60 = arith.constant 1.000000e+00 : f32
    %223 = vector.broadcast %cst_60 : f32 to vector<16x32xf32>
    %224 = arith.addf %223, %222 : vector<16x32xf32>
    %225 = arith.divf %223, %224 : vector<16x32xf32>
    %226 = arith.mulf %217, %191 : vector<16x32xf32>
    %227 = arith.mulf %211, %219 : vector<16x32xf32>
    %228 = arith.addf %226, %227 : vector<16x32xf32>
    %229 = math.tanh %228 : vector<16x32xf32>
    %230 = arith.mulf %225, %229 : vector<16x32xf32>
    %231 = arith.truncf %230 : vector<16x32xf32> to vector<16x32xbf16>
    %c0_61 = arith.constant 0 : index
    %232 = arith.index_cast %200 : i32 to index
    %c0_62 = arith.constant 0 : index
    %233 = vector.load %arg6[%c0_61, %232, %c0_62] : memref<1x128x32xbf16, #tpu.memory_space<vmem>>, vector<1x16x32xbf16>
    %234 = vector.shape_cast %233 : vector<1x16x32xbf16> to vector<16x32xbf16>
    %235 = vector.shape_cast %231 : vector<16x32xbf16> to vector<1x16x32xbf16>
    tpu.vector_store %arg6[%c0_61, %232, %c0_62], %235 {strides = array<i32>} : memref<1x128x32xbf16, #tpu.memory_space<vmem>>, vector<1x16x32xbf16>,
    %c6_i32 = arith.constant 6 : i32
    %c16_i32_63 = arith.constant 16 : i32
    %236 = arith.muli %c6_i32, %c16_i32_63 : i32
    %237 = tpu.assume_multiple %236, 16 : i32
    %238 = arith.index_cast %237 : i32 to index
    %c0_64 = arith.constant 0 : index
    %239 = vector.load %arg9[%238, %c0_64] : memref<128x128xf32, #tpu.memory_space<vmem>>, vector<16x128xf32>
    %240 = arith.truncf %230 : vector<16x32xf32> to vector<16x32xbf16>
    %cst_65 = arith.constant dense<0.000000e+00> : vector<16x128xf32>
    %241 = tpu.matmul %240, %11, %cst_65 {dimension_numbers = #tpu.dot_dimension_numbers<[1], [0], [0], [1], [0, 0, 1, 1], [], []>} : vector<16x32xbf16>, vector<32x128xbf16>, vector<16x128xf32> -> vector<16x128xf32>
    %242 = arith.addf %239, %241 : vector<16x128xf32>
    %243 = vector.extract_strided_slice %242 {offsets = [0, 0], sizes = [16, 32], strides = [1, 1]} : vector<16x128xf32> to vector<16x32xf32>
    %244 = arith.negf %243 : vector<16x32xf32>
    %245 = math.exp %244 : vector<16x32xf32>
    %cst_66 = arith.constant 1.000000e+00 : f32
    %246 = vector.broadcast %cst_66 : f32 to vector<16x32xf32>
    %247 = arith.addf %246, %245 : vector<16x32xf32>
    %248 = arith.divf %246, %247 : vector<16x32xf32>
    %249 = vector.extract_strided_slice %242 {offsets = [0, 32], sizes = [16, 32], strides = [1, 1]} : vector<16x128xf32> to vector<16x32xf32>
    %250 = arith.negf %249 : vector<16x32xf32>
    %251 = math.exp %250 : vector<16x32xf32>
    %cst_67 = arith.constant 1.000000e+00 : f32
    %252 = vector.broadcast %cst_67 : f32 to vector<16x32xf32>
    %253 = arith.addf %252, %251 : vector<16x32xf32>
    %254 = arith.divf %252, %253 : vector<16x32xf32>
    %255 = vector.extract_strided_slice %242 {offsets = [0, 64], sizes = [16, 32], strides = [1, 1]} : vector<16x128xf32> to vector<16x32xf32>
    %256 = math.tanh %255 : vector<16x32xf32>
    %257 = vector.extract_strided_slice %242 {offsets = [0, 96], sizes = [16, 32], strides = [1, 1]} : vector<16x128xf32> to vector<16x32xf32>
    %258 = arith.negf %257 : vector<16x32xf32>
    %259 = math.exp %258 : vector<16x32xf32>
    %cst_68 = arith.constant 1.000000e+00 : f32
    %260 = vector.broadcast %cst_68 : f32 to vector<16x32xf32>
    %261 = arith.addf %260, %259 : vector<16x32xf32>
    %262 = arith.divf %260, %261 : vector<16x32xf32>
    %263 = arith.mulf %254, %228 : vector<16x32xf32>
    %264 = arith.mulf %248, %256 : vector<16x32xf32>
    %265 = arith.addf %263, %264 : vector<16x32xf32>
    %266 = math.tanh %265 : vector<16x32xf32>
    %267 = arith.mulf %262, %266 : vector<16x32xf32>
    %268 = arith.truncf %267 : vector<16x32xf32> to vector<16x32xbf16>
    %c0_69 = arith.constant 0 : index
    %269 = arith.index_cast %237 : i32 to index
    %c0_70 = arith.constant 0 : index
    %270 = vector.load %arg6[%c0_69, %269, %c0_70] : memref<1x128x32xbf16, #tpu.memory_space<vmem>>, vector<1x16x32xbf16>
    %271 = vector.shape_cast %270 : vector<1x16x32xbf16> to vector<16x32xbf16>
    %272 = vector.shape_cast %268 : vector<16x32xbf16> to vector<1x16x32xbf16>
    tpu.vector_store %arg6[%c0_69, %269, %c0_70], %272 {strides = array<i32>} : memref<1x128x32xbf16, #tpu.memory_space<vmem>>, vector<1x16x32xbf16>,
    %c7_i32 = arith.constant 7 : i32
    %c16_i32_71 = arith.constant 16 : i32
    %273 = arith.muli %c7_i32, %c16_i32_71 : i32
    %274 = tpu.assume_multiple %273, 16 : i32
    %275 = arith.index_cast %274 : i32 to index
    %c0_72 = arith.constant 0 : index
    %276 = vector.load %arg9[%275, %c0_72] : memref<128x128xf32, #tpu.memory_space<vmem>>, vector<16x128xf32>
    %277 = arith.truncf %267 : vector<16x32xf32> to vector<16x32xbf16>
    %cst_73 = arith.constant dense<0.000000e+00> : vector<16x128xf32>
    %278 = tpu.matmul %277, %11, %cst_73 {dimension_numbers = #tpu.dot_dimension_numbers<[1], [0], [0], [1], [0, 0, 1, 1], [], []>} : vector<16x32xbf16>, vector<32x128xbf16>, vector<16x128xf32> -> vector<16x128xf32>
    %279 = arith.addf %276, %278 : vector<16x128xf32>
    %280 = vector.extract_strided_slice %279 {offsets = [0, 0], sizes = [16, 32], strides = [1, 1]} : vector<16x128xf32> to vector<16x32xf32>
    %281 = arith.negf %280 : vector<16x32xf32>
    %282 = math.exp %281 : vector<16x32xf32>
    %cst_74 = arith.constant 1.000000e+00 : f32
    %283 = vector.broadcast %cst_74 : f32 to vector<16x32xf32>
    %284 = arith.addf %283, %282 : vector<16x32xf32>
    %285 = arith.divf %283, %284 : vector<16x32xf32>
    %286 = vector.extract_strided_slice %279 {offsets = [0, 32], sizes = [16, 32], strides = [1, 1]} : vector<16x128xf32> to vector<16x32xf32>
    %287 = arith.negf %286 : vector<16x32xf32>
    %288 = math.exp %287 : vector<16x32xf32>
    %cst_75 = arith.constant 1.000000e+00 : f32
    %289 = vector.broadcast %cst_75 : f32 to vector<16x32xf32>
    %290 = arith.addf %289, %288 : vector<16x32xf32>
    %291 = arith.divf %289, %290 : vector<16x32xf32>
    %292 = vector.extract_strided_slice %279 {offsets = [0, 64], sizes = [16, 32], strides = [1, 1]} : vector<16x128xf32> to vector<16x32xf32>
    %293 = math.tanh %292 : vector<16x32xf32>
    %294 = vector.extract_strided_slice %279 {offsets = [0, 96], sizes = [16, 32], strides = [1, 1]} : vector<16x128xf32> to vector<16x32xf32>
    %295 = arith.negf %294 : vector<16x32xf32>
    %296 = math.exp %295 : vector<16x32xf32>
    %cst_76 = arith.constant 1.000000e+00 : f32
    %297 = vector.broadcast %cst_76 : f32 to vector<16x32xf32>
    %298 = arith.addf %297, %296 : vector<16x32xf32>
    %299 = arith.divf %297, %298 : vector<16x32xf32>
    %300 = arith.mulf %291, %265 : vector<16x32xf32>
    %301 = arith.mulf %285, %293 : vector<16x32xf32>
    %302 = arith.addf %300, %301 : vector<16x32xf32>
    %303 = math.tanh %302 : vector<16x32xf32>
    %304 = arith.mulf %299, %303 : vector<16x32xf32>
    %305 = arith.truncf %304 : vector<16x32xf32> to vector<16x32xbf16>
    %c0_77 = arith.constant 0 : index
    %306 = arith.index_cast %274 : i32 to index
    %c0_78 = arith.constant 0 : index
    %307 = vector.load %arg6[%c0_77, %306, %c0_78] : memref<1x128x32xbf16, #tpu.memory_space<vmem>>, vector<1x16x32xbf16>
    %308 = vector.shape_cast %307 : vector<1x16x32xbf16> to vector<16x32xbf16>
    %309 = vector.shape_cast %305 : vector<16x32xbf16> to vector<1x16x32xbf16>
    tpu.vector_store %arg6[%c0_77, %306, %c0_78], %309 {strides = array<i32>} : memref<1x128x32xbf16, #tpu.memory_space<vmem>>, vector<1x16x32xbf16>,
    %c8_i32 = arith.constant 8 : i32
    %c0_79 = arith.constant 0 : index
    %c0_80 = arith.constant 0 : index
    %310 = vector.load %arg7[%c0_79, %c0_80] : memref<16x32xf32, #tpu.memory_space<vmem>>, vector<16x32xf32>
    tpu.vector_store %arg7[%c0_79, %c0_80], %304 {strides = array<i32>} : memref<16x32xf32, #tpu.memory_space<vmem>>, vector<16x32xf32>,
    %c0_81 = arith.constant 0 : index
    %c0_82 = arith.constant 0 : index
    %311 = vector.load %arg8[%c0_81, %c0_82] : memref<16x32xf32, #tpu.memory_space<vmem>>, vector<16x32xf32>
    tpu.vector_store %arg8[%c0_81, %c0_82], %302 {strides = array<i32>} : memref<16x32xf32, #tpu.memory_space<vmem>>, vector<16x32xf32>,
    return
  }
  func.func @transform_0(%arg0: i32, %arg1: i32) -> (i32, i32, i32) {
    %c0_i32 = arith.constant 0 : i32
    %c0_i32_0 = arith.constant 0 : i32
    return %arg0, %arg1, %c0_i32 : i32, i32, i32
  }
  func.func @transform_1(%arg0: i32, %arg1: i32) -> (i32, i32) {
    %c0_i32 = arith.constant 0 : i32
    %c0_i32_0 = arith.constant 0 : i32
    %c0_i32_1 = arith.constant 0 : i32
    return %c0_i32, %c0_i32_0 : i32, i32
  }
  func.func @transform_2(%arg0: i32, %arg1: i32) -> (i32, i32) {
    %c0_i32 = arith.constant 0 : i32
    %c0_i32_0 = arith.constant 0 : i32
    %c0_i32_1 = arith.constant 0 : i32
    return %c0_i32, %c0_i32_0 : i32, i32
  }
  func.func @transform_3(%arg0: i32, %arg1: i32) -> (i32, i32) {
    %c0_i32 = arith.constant 0 : i32
    %c0_i32_0 = arith.constant 0 : i32
    %c0_i32_1 = arith.constant 0 : i32
    return %c0_i32, %c0_i32_0 : i32, i32
  }
  func.func @transform_4(%arg0: i32, %arg1: i32) -> (i32, i32, i32) {
    %c0_i32 = arith.constant 0 : i32
    %c0_i32_0 = arith.constant 0 : i32
    return %arg0, %arg1, %c0_i32 : i32, i32, i32
  }
}

module attributes {stable_mosaic.version = 11 : i64} {
  func.func @_lstm_last_kernel(%arg0: i32, %arg1: i32, %arg2: memref<1x128x32xbf16, #tpu.memory_space<vmem>>, %arg3: memref<32x128xbf16, #tpu.memory_space<vmem>>, %arg4: memref<32x128xbf16, #tpu.memory_space<vmem>>, %arg5: memref<1x128xf32, #tpu.memory_space<vmem>>, %arg6: memref<32x8xbf16, #tpu.memory_space<vmem>>, %arg7: memref<1x8xf32, #tpu.memory_space<vmem>>, %arg8: memref<1x16x8xf32, #tpu.memory_space<vmem>>, %arg9: memref<16x32xf32, #tpu.memory_space<vmem>>, %arg10: memref<16x32xf32, #tpu.memory_space<vmem>>, %arg11: memref<128x128xf32, #tpu.memory_space<vmem>>) attributes {dimension_semantics = [#tpu.dimension_semantics<parallel>, #tpu.dimension_semantics<arbitrary>], iteration_bounds = array<i64: 1, 1>, scalar_prefetch = 0 : i64, scratch_operands = 3 : i64, tpu.core_type = #tpu.core_type<tc>, window_params = [{transform_indices = @transform_0, window_bounds = array<i64: 1, 128, 32>}, {pipeline_mode = #tpu.pipeline_mode<synchronous>, transform_indices = @transform_1, window_bounds = array<i64: 32, 128>}, {pipeline_mode = #tpu.pipeline_mode<synchronous>, transform_indices = @transform_2, window_bounds = array<i64: 32, 128>}, {pipeline_mode = #tpu.pipeline_mode<synchronous>, transform_indices = @transform_3, window_bounds = array<i64: 1, 128>}, {pipeline_mode = #tpu.pipeline_mode<synchronous>, transform_indices = @transform_4, window_bounds = array<i64: 32, 8>}, {pipeline_mode = #tpu.pipeline_mode<synchronous>, transform_indices = @transform_5, window_bounds = array<i64: 1, 8>}, {transform_indices = @transform_6, window_bounds = array<i64: 1, 16, 8>}]} {
    %c0_i32 = arith.constant 0 : i32
    %0 = arith.cmpi eq, %arg1, %c0_i32 : i32
    %1 = arith.extui %0 : i1 to i32
    %c0_i32_0 = arith.constant 0 : i32
    %2 = arith.cmpi ne, %1, %c0_i32_0 : i32
    scf.if %2 {
      %cst_69 = arith.constant 0.000000e+00 : f32
      %275 = vector.broadcast %cst_69 : f32 to vector<16x32xf32>
      %c0_70 = arith.constant 0 : index
      %c0_71 = arith.constant 0 : index
      %276 = vector.load %arg9[%c0_70, %c0_71] : memref<16x32xf32, #tpu.memory_space<vmem>>, vector<16x32xf32>
      tpu.vector_store %arg9[%c0_70, %c0_71], %275 {strides = array<i32>} : memref<16x32xf32, #tpu.memory_space<vmem>>, vector<16x32xf32>,
      %cst_72 = arith.constant 0.000000e+00 : f32
      %277 = vector.broadcast %cst_72 : f32 to vector<16x32xf32>
      %c0_73 = arith.constant 0 : index
      %c0_74 = arith.constant 0 : index
      %278 = vector.load %arg10[%c0_73, %c0_74] : memref<16x32xf32, #tpu.memory_space<vmem>>, vector<16x32xf32>
      tpu.vector_store %arg10[%c0_73, %c0_74], %277 {strides = array<i32>} : memref<16x32xf32, #tpu.memory_space<vmem>>, vector<16x32xf32>,
    } else {
    }
    %c0 = arith.constant 0 : index
    %c0_1 = arith.constant 0 : index
    %c0_2 = arith.constant 0 : index
    %3 = vector.load %arg2[%c0, %c0_1, %c0_2] : memref<1x128x32xbf16, #tpu.memory_space<vmem>>, vector<1x128x32xbf16>
    %4 = vector.shape_cast %3 : vector<1x128x32xbf16> to vector<128x32xbf16>
    %c0_3 = arith.constant 0 : index
    %c0_4 = arith.constant 0 : index
    %5 = vector.load %arg3[%c0_3, %c0_4] : memref<32x128xbf16, #tpu.memory_space<vmem>>, vector<32x128xbf16>
    %cst = arith.constant dense<0.000000e+00> : vector<128x128xf32>
    %6 = tpu.matmul %4, %5, %cst {dimension_numbers = #tpu.dot_dimension_numbers<[1], [0], [0], [1], [0, 0, 1, 1], [], []>} : vector<128x32xbf16>, vector<32x128xbf16>, vector<128x128xf32> -> vector<128x128xf32>
    %c0_5 = arith.constant 0 : index
    %c0_6 = arith.constant 0 : index
    %7 = vector.load %arg5[%c0_5, %c0_6] : memref<1x128xf32, #tpu.memory_space<vmem>>, vector<1x128xf32>
    %8 = vector.broadcast %7 : vector<1x128xf32> to vector<128x128xf32>
    %9 = arith.addf %6, %8 : vector<128x128xf32>
    %c0_7 = arith.constant 0 : index
    %c0_8 = arith.constant 0 : index
    %10 = vector.load %arg11[%c0_7, %c0_8] : memref<128x128xf32, #tpu.memory_space<vmem>>, vector<128x128xf32>
    tpu.vector_store %arg11[%c0_7, %c0_8], %9 {strides = array<i32>} : memref<128x128xf32, #tpu.memory_space<vmem>>, vector<128x128xf32>,
    %c0_9 = arith.constant 0 : index
    %c0_10 = arith.constant 0 : index
    %11 = vector.load %arg4[%c0_9, %c0_10] : memref<32x128xbf16, #tpu.memory_space<vmem>>, vector<32x128xbf16>
    %c0_11 = arith.constant 0 : index
    %c0_12 = arith.constant 0 : index
    %12 = vector.load %arg9[%c0_11, %c0_12] : memref<16x32xf32, #tpu.memory_space<vmem>>, vector<16x32xf32>
    %c0_13 = arith.constant 0 : index
    %c0_14 = arith.constant 0 : index
    %13 = vector.load %arg10[%c0_13, %c0_14] : memref<16x32xf32, #tpu.memory_space<vmem>>, vector<16x32xf32>
    %c0_i32_15 = arith.constant 0 : i32
    %c16_i32 = arith.constant 16 : i32
    %14 = arith.muli %c0_i32_15, %c16_i32 : i32
    %15 = tpu.assume_multiple %14, 16 : i32
    %16 = arith.index_cast %15 : i32 to index
    %c0_16 = arith.constant 0 : index
    %17 = vector.load %arg11[%16, %c0_16] : memref<128x128xf32, #tpu.memory_space<vmem>>, vector<16x128xf32>
    %18 = arith.truncf %12 : vector<16x32xf32> to vector<16x32xbf16>
    %cst_17 = arith.constant dense<0.000000e+00> : vector<16x128xf32>
    %19 = tpu.matmul %18, %11, %cst_17 {dimension_numbers = #tpu.dot_dimension_numbers<[1], [0], [0], [1], [0, 0, 1, 1], [], []>} : vector<16x32xbf16>, vector<32x128xbf16>, vector<16x128xf32> -> vector<16x128xf32>
    %20 = arith.addf %17, %19 : vector<16x128xf32>
    %21 = vector.extract_strided_slice %20 {offsets = [0, 0], sizes = [16, 32], strides = [1, 1]} : vector<16x128xf32> to vector<16x32xf32>
    %22 = arith.negf %21 : vector<16x32xf32>
    %23 = math.exp %22 : vector<16x32xf32>
    %cst_18 = arith.constant 1.000000e+00 : f32
    %24 = vector.broadcast %cst_18 : f32 to vector<16x32xf32>
    %25 = arith.addf %24, %23 : vector<16x32xf32>
    %26 = arith.divf %24, %25 : vector<16x32xf32>
    %27 = vector.extract_strided_slice %20 {offsets = [0, 32], sizes = [16, 32], strides = [1, 1]} : vector<16x128xf32> to vector<16x32xf32>
    %28 = arith.negf %27 : vector<16x32xf32>
    %29 = math.exp %28 : vector<16x32xf32>
    %cst_19 = arith.constant 1.000000e+00 : f32
    %30 = vector.broadcast %cst_19 : f32 to vector<16x32xf32>
    %31 = arith.addf %30, %29 : vector<16x32xf32>
    %32 = arith.divf %30, %31 : vector<16x32xf32>
    %33 = vector.extract_strided_slice %20 {offsets = [0, 64], sizes = [16, 32], strides = [1, 1]} : vector<16x128xf32> to vector<16x32xf32>
    %34 = math.tanh %33 : vector<16x32xf32>
    %35 = vector.extract_strided_slice %20 {offsets = [0, 96], sizes = [16, 32], strides = [1, 1]} : vector<16x128xf32> to vector<16x32xf32>
    %36 = arith.negf %35 : vector<16x32xf32>
    %37 = math.exp %36 : vector<16x32xf32>
    %cst_20 = arith.constant 1.000000e+00 : f32
    %38 = vector.broadcast %cst_20 : f32 to vector<16x32xf32>
    %39 = arith.addf %38, %37 : vector<16x32xf32>
    %40 = arith.divf %38, %39 : vector<16x32xf32>
    %41 = arith.mulf %32, %13 : vector<16x32xf32>
    %42 = arith.mulf %26, %34 : vector<16x32xf32>
    %43 = arith.addf %41, %42 : vector<16x32xf32>
    %44 = math.tanh %43 : vector<16x32xf32>
    %45 = arith.mulf %40, %44 : vector<16x32xf32>
    %c1_i32 = arith.constant 1 : i32
    %c16_i32_21 = arith.constant 16 : i32
    %46 = arith.muli %c1_i32, %c16_i32_21 : i32
    %47 = tpu.assume_multiple %46, 16 : i32
    %48 = arith.index_cast %47 : i32 to index
    %c0_22 = arith.constant 0 : index
    %49 = vector.load %arg11[%48, %c0_22] : memref<128x128xf32, #tpu.memory_space<vmem>>, vector<16x128xf32>
    %50 = arith.truncf %45 : vector<16x32xf32> to vector<16x32xbf16>
    %cst_23 = arith.constant dense<0.000000e+00> : vector<16x128xf32>
    %51 = tpu.matmul %50, %11, %cst_23 {dimension_numbers = #tpu.dot_dimension_numbers<[1], [0], [0], [1], [0, 0, 1, 1], [], []>} : vector<16x32xbf16>, vector<32x128xbf16>, vector<16x128xf32> -> vector<16x128xf32>
    %52 = arith.addf %49, %51 : vector<16x128xf32>
    %53 = vector.extract_strided_slice %52 {offsets = [0, 0], sizes = [16, 32], strides = [1, 1]} : vector<16x128xf32> to vector<16x32xf32>
    %54 = arith.negf %53 : vector<16x32xf32>
    %55 = math.exp %54 : vector<16x32xf32>
    %cst_24 = arith.constant 1.000000e+00 : f32
    %56 = vector.broadcast %cst_24 : f32 to vector<16x32xf32>
    %57 = arith.addf %56, %55 : vector<16x32xf32>
    %58 = arith.divf %56, %57 : vector<16x32xf32>
    %59 = vector.extract_strided_slice %52 {offsets = [0, 32], sizes = [16, 32], strides = [1, 1]} : vector<16x128xf32> to vector<16x32xf32>
    %60 = arith.negf %59 : vector<16x32xf32>
    %61 = math.exp %60 : vector<16x32xf32>
    %cst_25 = arith.constant 1.000000e+00 : f32
    %62 = vector.broadcast %cst_25 : f32 to vector<16x32xf32>
    %63 = arith.addf %62, %61 : vector<16x32xf32>
    %64 = arith.divf %62, %63 : vector<16x32xf32>
    %65 = vector.extract_strided_slice %52 {offsets = [0, 64], sizes = [16, 32], strides = [1, 1]} : vector<16x128xf32> to vector<16x32xf32>
    %66 = math.tanh %65 : vector<16x32xf32>
    %67 = vector.extract_strided_slice %52 {offsets = [0, 96], sizes = [16, 32], strides = [1, 1]} : vector<16x128xf32> to vector<16x32xf32>
    %68 = arith.negf %67 : vector<16x32xf32>
    %69 = math.exp %68 : vector<16x32xf32>
    %cst_26 = arith.constant 1.000000e+00 : f32
    %70 = vector.broadcast %cst_26 : f32 to vector<16x32xf32>
    %71 = arith.addf %70, %69 : vector<16x32xf32>
    %72 = arith.divf %70, %71 : vector<16x32xf32>
    %73 = arith.mulf %64, %43 : vector<16x32xf32>
    %74 = arith.mulf %58, %66 : vector<16x32xf32>
    %75 = arith.addf %73, %74 : vector<16x32xf32>
    %76 = math.tanh %75 : vector<16x32xf32>
    %77 = arith.mulf %72, %76 : vector<16x32xf32>
    %c2_i32 = arith.constant 2 : i32
    %c16_i32_27 = arith.constant 16 : i32
    %78 = arith.muli %c2_i32, %c16_i32_27 : i32
    %79 = tpu.assume_multiple %78, 16 : i32
    %80 = arith.index_cast %79 : i32 to index
    %c0_28 = arith.constant 0 : index
    %81 = vector.load %arg11[%80, %c0_28] : memref<128x128xf32, #tpu.memory_space<vmem>>, vector<16x128xf32>
    %82 = arith.truncf %77 : vector<16x32xf32> to vector<16x32xbf16>
    %cst_29 = arith.constant dense<0.000000e+00> : vector<16x128xf32>
    %83 = tpu.matmul %82, %11, %cst_29 {dimension_numbers = #tpu.dot_dimension_numbers<[1], [0], [0], [1], [0, 0, 1, 1], [], []>} : vector<16x32xbf16>, vector<32x128xbf16>, vector<16x128xf32> -> vector<16x128xf32>
    %84 = arith.addf %81, %83 : vector<16x128xf32>
    %85 = vector.extract_strided_slice %84 {offsets = [0, 0], sizes = [16, 32], strides = [1, 1]} : vector<16x128xf32> to vector<16x32xf32>
    %86 = arith.negf %85 : vector<16x32xf32>
    %87 = math.exp %86 : vector<16x32xf32>
    %cst_30 = arith.constant 1.000000e+00 : f32
    %88 = vector.broadcast %cst_30 : f32 to vector<16x32xf32>
    %89 = arith.addf %88, %87 : vector<16x32xf32>
    %90 = arith.divf %88, %89 : vector<16x32xf32>
    %91 = vector.extract_strided_slice %84 {offsets = [0, 32], sizes = [16, 32], strides = [1, 1]} : vector<16x128xf32> to vector<16x32xf32>
    %92 = arith.negf %91 : vector<16x32xf32>
    %93 = math.exp %92 : vector<16x32xf32>
    %cst_31 = arith.constant 1.000000e+00 : f32
    %94 = vector.broadcast %cst_31 : f32 to vector<16x32xf32>
    %95 = arith.addf %94, %93 : vector<16x32xf32>
    %96 = arith.divf %94, %95 : vector<16x32xf32>
    %97 = vector.extract_strided_slice %84 {offsets = [0, 64], sizes = [16, 32], strides = [1, 1]} : vector<16x128xf32> to vector<16x32xf32>
    %98 = math.tanh %97 : vector<16x32xf32>
    %99 = vector.extract_strided_slice %84 {offsets = [0, 96], sizes = [16, 32], strides = [1, 1]} : vector<16x128xf32> to vector<16x32xf32>
    %100 = arith.negf %99 : vector<16x32xf32>
    %101 = math.exp %100 : vector<16x32xf32>
    %cst_32 = arith.constant 1.000000e+00 : f32
    %102 = vector.broadcast %cst_32 : f32 to vector<16x32xf32>
    %103 = arith.addf %102, %101 : vector<16x32xf32>
    %104 = arith.divf %102, %103 : vector<16x32xf32>
    %105 = arith.mulf %96, %75 : vector<16x32xf32>
    %106 = arith.mulf %90, %98 : vector<16x32xf32>
    %107 = arith.addf %105, %106 : vector<16x32xf32>
    %108 = math.tanh %107 : vector<16x32xf32>
    %109 = arith.mulf %104, %108 : vector<16x32xf32>
    %c3_i32 = arith.constant 3 : i32
    %c16_i32_33 = arith.constant 16 : i32
    %110 = arith.muli %c3_i32, %c16_i32_33 : i32
    %111 = tpu.assume_multiple %110, 16 : i32
    %112 = arith.index_cast %111 : i32 to index
    %c0_34 = arith.constant 0 : index
    %113 = vector.load %arg11[%112, %c0_34] : memref<128x128xf32, #tpu.memory_space<vmem>>, vector<16x128xf32>
    %114 = arith.truncf %109 : vector<16x32xf32> to vector<16x32xbf16>
    %cst_35 = arith.constant dense<0.000000e+00> : vector<16x128xf32>
    %115 = tpu.matmul %114, %11, %cst_35 {dimension_numbers = #tpu.dot_dimension_numbers<[1], [0], [0], [1], [0, 0, 1, 1], [], []>} : vector<16x32xbf16>, vector<32x128xbf16>, vector<16x128xf32> -> vector<16x128xf32>
    %116 = arith.addf %113, %115 : vector<16x128xf32>
    %117 = vector.extract_strided_slice %116 {offsets = [0, 0], sizes = [16, 32], strides = [1, 1]} : vector<16x128xf32> to vector<16x32xf32>
    %118 = arith.negf %117 : vector<16x32xf32>
    %119 = math.exp %118 : vector<16x32xf32>
    %cst_36 = arith.constant 1.000000e+00 : f32
    %120 = vector.broadcast %cst_36 : f32 to vector<16x32xf32>
    %121 = arith.addf %120, %119 : vector<16x32xf32>
    %122 = arith.divf %120, %121 : vector<16x32xf32>
    %123 = vector.extract_strided_slice %116 {offsets = [0, 32], sizes = [16, 32], strides = [1, 1]} : vector<16x128xf32> to vector<16x32xf32>
    %124 = arith.negf %123 : vector<16x32xf32>
    %125 = math.exp %124 : vector<16x32xf32>
    %cst_37 = arith.constant 1.000000e+00 : f32
    %126 = vector.broadcast %cst_37 : f32 to vector<16x32xf32>
    %127 = arith.addf %126, %125 : vector<16x32xf32>
    %128 = arith.divf %126, %127 : vector<16x32xf32>
    %129 = vector.extract_strided_slice %116 {offsets = [0, 64], sizes = [16, 32], strides = [1, 1]} : vector<16x128xf32> to vector<16x32xf32>
    %130 = math.tanh %129 : vector<16x32xf32>
    %131 = vector.extract_strided_slice %116 {offsets = [0, 96], sizes = [16, 32], strides = [1, 1]} : vector<16x128xf32> to vector<16x32xf32>
    %132 = arith.negf %131 : vector<16x32xf32>
    %133 = math.exp %132 : vector<16x32xf32>
    %cst_38 = arith.constant 1.000000e+00 : f32
    %134 = vector.broadcast %cst_38 : f32 to vector<16x32xf32>
    %135 = arith.addf %134, %133 : vector<16x32xf32>
    %136 = arith.divf %134, %135 : vector<16x32xf32>
    %137 = arith.mulf %128, %107 : vector<16x32xf32>
    %138 = arith.mulf %122, %130 : vector<16x32xf32>
    %139 = arith.addf %137, %138 : vector<16x32xf32>
    %140 = math.tanh %139 : vector<16x32xf32>
    %141 = arith.mulf %136, %140 : vector<16x32xf32>
    %c4_i32 = arith.constant 4 : i32
    %c16_i32_39 = arith.constant 16 : i32
    %142 = arith.muli %c4_i32, %c16_i32_39 : i32
    %143 = tpu.assume_multiple %142, 16 : i32
    %144 = arith.index_cast %143 : i32 to index
    %c0_40 = arith.constant 0 : index
    %145 = vector.load %arg11[%144, %c0_40] : memref<128x128xf32, #tpu.memory_space<vmem>>, vector<16x128xf32>
    %146 = arith.truncf %141 : vector<16x32xf32> to vector<16x32xbf16>
    %cst_41 = arith.constant dense<0.000000e+00> : vector<16x128xf32>
    %147 = tpu.matmul %146, %11, %cst_41 {dimension_numbers = #tpu.dot_dimension_numbers<[1], [0], [0], [1], [0, 0, 1, 1], [], []>} : vector<16x32xbf16>, vector<32x128xbf16>, vector<16x128xf32> -> vector<16x128xf32>
    %148 = arith.addf %145, %147 : vector<16x128xf32>
    %149 = vector.extract_strided_slice %148 {offsets = [0, 0], sizes = [16, 32], strides = [1, 1]} : vector<16x128xf32> to vector<16x32xf32>
    %150 = arith.negf %149 : vector<16x32xf32>
    %151 = math.exp %150 : vector<16x32xf32>
    %cst_42 = arith.constant 1.000000e+00 : f32
    %152 = vector.broadcast %cst_42 : f32 to vector<16x32xf32>
    %153 = arith.addf %152, %151 : vector<16x32xf32>
    %154 = arith.divf %152, %153 : vector<16x32xf32>
    %155 = vector.extract_strided_slice %148 {offsets = [0, 32], sizes = [16, 32], strides = [1, 1]} : vector<16x128xf32> to vector<16x32xf32>
    %156 = arith.negf %155 : vector<16x32xf32>
    %157 = math.exp %156 : vector<16x32xf32>
    %cst_43 = arith.constant 1.000000e+00 : f32
    %158 = vector.broadcast %cst_43 : f32 to vector<16x32xf32>
    %159 = arith.addf %158, %157 : vector<16x32xf32>
    %160 = arith.divf %158, %159 : vector<16x32xf32>
    %161 = vector.extract_strided_slice %148 {offsets = [0, 64], sizes = [16, 32], strides = [1, 1]} : vector<16x128xf32> to vector<16x32xf32>
    %162 = math.tanh %161 : vector<16x32xf32>
    %163 = vector.extract_strided_slice %148 {offsets = [0, 96], sizes = [16, 32], strides = [1, 1]} : vector<16x128xf32> to vector<16x32xf32>
    %164 = arith.negf %163 : vector<16x32xf32>
    %165 = math.exp %164 : vector<16x32xf32>
    %cst_44 = arith.constant 1.000000e+00 : f32
    %166 = vector.broadcast %cst_44 : f32 to vector<16x32xf32>
    %167 = arith.addf %166, %165 : vector<16x32xf32>
    %168 = arith.divf %166, %167 : vector<16x32xf32>
    %169 = arith.mulf %160, %139 : vector<16x32xf32>
    %170 = arith.mulf %154, %162 : vector<16x32xf32>
    %171 = arith.addf %169, %170 : vector<16x32xf32>
    %172 = math.tanh %171 : vector<16x32xf32>
    %173 = arith.mulf %168, %172 : vector<16x32xf32>
    %c5_i32 = arith.constant 5 : i32
    %c16_i32_45 = arith.constant 16 : i32
    %174 = arith.muli %c5_i32, %c16_i32_45 : i32
    %175 = tpu.assume_multiple %174, 16 : i32
    %176 = arith.index_cast %175 : i32 to index
    %c0_46 = arith.constant 0 : index
    %177 = vector.load %arg11[%176, %c0_46] : memref<128x128xf32, #tpu.memory_space<vmem>>, vector<16x128xf32>
    %178 = arith.truncf %173 : vector<16x32xf32> to vector<16x32xbf16>
    %cst_47 = arith.constant dense<0.000000e+00> : vector<16x128xf32>
    %179 = tpu.matmul %178, %11, %cst_47 {dimension_numbers = #tpu.dot_dimension_numbers<[1], [0], [0], [1], [0, 0, 1, 1], [], []>} : vector<16x32xbf16>, vector<32x128xbf16>, vector<16x128xf32> -> vector<16x128xf32>
    %180 = arith.addf %177, %179 : vector<16x128xf32>
    %181 = vector.extract_strided_slice %180 {offsets = [0, 0], sizes = [16, 32], strides = [1, 1]} : vector<16x128xf32> to vector<16x32xf32>
    %182 = arith.negf %181 : vector<16x32xf32>
    %183 = math.exp %182 : vector<16x32xf32>
    %cst_48 = arith.constant 1.000000e+00 : f32
    %184 = vector.broadcast %cst_48 : f32 to vector<16x32xf32>
    %185 = arith.addf %184, %183 : vector<16x32xf32>
    %186 = arith.divf %184, %185 : vector<16x32xf32>
    %187 = vector.extract_strided_slice %180 {offsets = [0, 32], sizes = [16, 32], strides = [1, 1]} : vector<16x128xf32> to vector<16x32xf32>
    %188 = arith.negf %187 : vector<16x32xf32>
    %189 = math.exp %188 : vector<16x32xf32>
    %cst_49 = arith.constant 1.000000e+00 : f32
    %190 = vector.broadcast %cst_49 : f32 to vector<16x32xf32>
    %191 = arith.addf %190, %189 : vector<16x32xf32>
    %192 = arith.divf %190, %191 : vector<16x32xf32>
    %193 = vector.extract_strided_slice %180 {offsets = [0, 64], sizes = [16, 32], strides = [1, 1]} : vector<16x128xf32> to vector<16x32xf32>
    %194 = math.tanh %193 : vector<16x32xf32>
    %195 = vector.extract_strided_slice %180 {offsets = [0, 96], sizes = [16, 32], strides = [1, 1]} : vector<16x128xf32> to vector<16x32xf32>
    %196 = arith.negf %195 : vector<16x32xf32>
    %197 = math.exp %196 : vector<16x32xf32>
    %cst_50 = arith.constant 1.000000e+00 : f32
    %198 = vector.broadcast %cst_50 : f32 to vector<16x32xf32>
    %199 = arith.addf %198, %197 : vector<16x32xf32>
    %200 = arith.divf %198, %199 : vector<16x32xf32>
    %201 = arith.mulf %192, %171 : vector<16x32xf32>
    %202 = arith.mulf %186, %194 : vector<16x32xf32>
    %203 = arith.addf %201, %202 : vector<16x32xf32>
    %204 = math.tanh %203 : vector<16x32xf32>
    %205 = arith.mulf %200, %204 : vector<16x32xf32>
    %c6_i32 = arith.constant 6 : i32
    %c16_i32_51 = arith.constant 16 : i32
    %206 = arith.muli %c6_i32, %c16_i32_51 : i32
    %207 = tpu.assume_multiple %206, 16 : i32
    %208 = arith.index_cast %207 : i32 to index
    %c0_52 = arith.constant 0 : index
    %209 = vector.load %arg11[%208, %c0_52] : memref<128x128xf32, #tpu.memory_space<vmem>>, vector<16x128xf32>
    %210 = arith.truncf %205 : vector<16x32xf32> to vector<16x32xbf16>
    %cst_53 = arith.constant dense<0.000000e+00> : vector<16x128xf32>
    %211 = tpu.matmul %210, %11, %cst_53 {dimension_numbers = #tpu.dot_dimension_numbers<[1], [0], [0], [1], [0, 0, 1, 1], [], []>} : vector<16x32xbf16>, vector<32x128xbf16>, vector<16x128xf32> -> vector<16x128xf32>
    %212 = arith.addf %209, %211 : vector<16x128xf32>
    %213 = vector.extract_strided_slice %212 {offsets = [0, 0], sizes = [16, 32], strides = [1, 1]} : vector<16x128xf32> to vector<16x32xf32>
    %214 = arith.negf %213 : vector<16x32xf32>
    %215 = math.exp %214 : vector<16x32xf32>
    %cst_54 = arith.constant 1.000000e+00 : f32
    %216 = vector.broadcast %cst_54 : f32 to vector<16x32xf32>
    %217 = arith.addf %216, %215 : vector<16x32xf32>
    %218 = arith.divf %216, %217 : vector<16x32xf32>
    %219 = vector.extract_strided_slice %212 {offsets = [0, 32], sizes = [16, 32], strides = [1, 1]} : vector<16x128xf32> to vector<16x32xf32>
    %220 = arith.negf %219 : vector<16x32xf32>
    %221 = math.exp %220 : vector<16x32xf32>
    %cst_55 = arith.constant 1.000000e+00 : f32
    %222 = vector.broadcast %cst_55 : f32 to vector<16x32xf32>
    %223 = arith.addf %222, %221 : vector<16x32xf32>
    %224 = arith.divf %222, %223 : vector<16x32xf32>
    %225 = vector.extract_strided_slice %212 {offsets = [0, 64], sizes = [16, 32], strides = [1, 1]} : vector<16x128xf32> to vector<16x32xf32>
    %226 = math.tanh %225 : vector<16x32xf32>
    %227 = vector.extract_strided_slice %212 {offsets = [0, 96], sizes = [16, 32], strides = [1, 1]} : vector<16x128xf32> to vector<16x32xf32>
    %228 = arith.negf %227 : vector<16x32xf32>
    %229 = math.exp %228 : vector<16x32xf32>
    %cst_56 = arith.constant 1.000000e+00 : f32
    %230 = vector.broadcast %cst_56 : f32 to vector<16x32xf32>
    %231 = arith.addf %230, %229 : vector<16x32xf32>
    %232 = arith.divf %230, %231 : vector<16x32xf32>
    %233 = arith.mulf %224, %203 : vector<16x32xf32>
    %234 = arith.mulf %218, %226 : vector<16x32xf32>
    %235 = arith.addf %233, %234 : vector<16x32xf32>
    %236 = math.tanh %235 : vector<16x32xf32>
    %237 = arith.mulf %232, %236 : vector<16x32xf32>
    %c7_i32 = arith.constant 7 : i32
    %c16_i32_57 = arith.constant 16 : i32
    %238 = arith.muli %c7_i32, %c16_i32_57 : i32
    %239 = tpu.assume_multiple %238, 16 : i32
    %240 = arith.index_cast %239 : i32 to index
    %c0_58 = arith.constant 0 : index
    %241 = vector.load %arg11[%240, %c0_58] : memref<128x128xf32, #tpu.memory_space<vmem>>, vector<16x128xf32>
    %242 = arith.truncf %237 : vector<16x32xf32> to vector<16x32xbf16>
    %cst_59 = arith.constant dense<0.000000e+00> : vector<16x128xf32>
    %243 = tpu.matmul %242, %11, %cst_59 {dimension_numbers = #tpu.dot_dimension_numbers<[1], [0], [0], [1], [0, 0, 1, 1], [], []>} : vector<16x32xbf16>, vector<32x128xbf16>, vector<16x128xf32> -> vector<16x128xf32>
    %244 = arith.addf %241, %243 : vector<16x128xf32>
    %245 = vector.extract_strided_slice %244 {offsets = [0, 0], sizes = [16, 32], strides = [1, 1]} : vector<16x128xf32> to vector<16x32xf32>
    %246 = arith.negf %245 : vector<16x32xf32>
    %247 = math.exp %246 : vector<16x32xf32>
    %cst_60 = arith.constant 1.000000e+00 : f32
    %248 = vector.broadcast %cst_60 : f32 to vector<16x32xf32>
    %249 = arith.addf %248, %247 : vector<16x32xf32>
    %250 = arith.divf %248, %249 : vector<16x32xf32>
    %251 = vector.extract_strided_slice %244 {offsets = [0, 32], sizes = [16, 32], strides = [1, 1]} : vector<16x128xf32> to vector<16x32xf32>
    %252 = arith.negf %251 : vector<16x32xf32>
    %253 = math.exp %252 : vector<16x32xf32>
    %cst_61 = arith.constant 1.000000e+00 : f32
    %254 = vector.broadcast %cst_61 : f32 to vector<16x32xf32>
    %255 = arith.addf %254, %253 : vector<16x32xf32>
    %256 = arith.divf %254, %255 : vector<16x32xf32>
    %257 = vector.extract_strided_slice %244 {offsets = [0, 64], sizes = [16, 32], strides = [1, 1]} : vector<16x128xf32> to vector<16x32xf32>
    %258 = math.tanh %257 : vector<16x32xf32>
    %259 = vector.extract_strided_slice %244 {offsets = [0, 96], sizes = [16, 32], strides = [1, 1]} : vector<16x128xf32> to vector<16x32xf32>
    %260 = arith.negf %259 : vector<16x32xf32>
    %261 = math.exp %260 : vector<16x32xf32>
    %cst_62 = arith.constant 1.000000e+00 : f32
    %262 = vector.broadcast %cst_62 : f32 to vector<16x32xf32>
    %263 = arith.addf %262, %261 : vector<16x32xf32>
    %264 = arith.divf %262, %263 : vector<16x32xf32>
    %265 = arith.mulf %256, %235 : vector<16x32xf32>
    %266 = arith.mulf %250, %258 : vector<16x32xf32>
    %267 = arith.addf %265, %266 : vector<16x32xf32>
    %268 = math.tanh %267 : vector<16x32xf32>
    %269 = arith.mulf %264, %268 : vector<16x32xf32>
    %c8_i32 = arith.constant 8 : i32
    %c0_63 = arith.constant 0 : index
    %c0_64 = arith.constant 0 : index
    %270 = vector.load %arg9[%c0_63, %c0_64] : memref<16x32xf32, #tpu.memory_space<vmem>>, vector<16x32xf32>
    tpu.vector_store %arg9[%c0_63, %c0_64], %269 {strides = array<i32>} : memref<16x32xf32, #tpu.memory_space<vmem>>, vector<16x32xf32>,
    %c0_65 = arith.constant 0 : index
    %c0_66 = arith.constant 0 : index
    %271 = vector.load %arg10[%c0_65, %c0_66] : memref<16x32xf32, #tpu.memory_space<vmem>>, vector<16x32xf32>
    tpu.vector_store %arg10[%c0_65, %c0_66], %267 {strides = array<i32>} : memref<16x32xf32, #tpu.memory_space<vmem>>, vector<16x32xf32>,
    %c0_i32_67 = arith.constant 0 : i32
    %272 = arith.cmpi eq, %arg1, %c0_i32_67 : i32
    %273 = arith.extui %272 : i1 to i32
    %c0_i32_68 = arith.constant 0 : i32
    %274 = arith.cmpi ne, %273, %c0_i32_68 : i32
    scf.if %274 {
      %275 = arith.truncf %269 : vector<16x32xf32> to vector<16x32xbf16>
      %c0_69 = arith.constant 0 : index
      %c0_70 = arith.constant 0 : index
      %276 = vector.load %arg6[%c0_69, %c0_70] : memref<32x8xbf16, #tpu.memory_space<vmem>>, vector<32x8xbf16>
      %cst_71 = arith.constant dense<0.000000e+00> : vector<16x8xf32>
      %277 = tpu.matmul %275, %276, %cst_71 {dimension_numbers = #tpu.dot_dimension_numbers<[1], [0], [0], [1], [0, 0, 1, 1], [], []>} : vector<16x32xbf16>, vector<32x8xbf16>, vector<16x8xf32> -> vector<16x8xf32>
      %c0_72 = arith.constant 0 : index
      %c0_73 = arith.constant 0 : index
      %278 = vector.load %arg7[%c0_72, %c0_73] : memref<1x8xf32, #tpu.memory_space<vmem>>, vector<1x8xf32>
      %279 = vector.broadcast %278 : vector<1x8xf32> to vector<16x8xf32>
      %280 = arith.addf %277, %279 : vector<16x8xf32>
      %c0_74 = arith.constant 0 : index
      %c0_75 = arith.constant 0 : index
      %c0_76 = arith.constant 0 : index
      %281 = vector.load %arg8[%c0_74, %c0_75, %c0_76] : memref<1x16x8xf32, #tpu.memory_space<vmem>>, vector<1x16x8xf32>
      %282 = vector.shape_cast %281 : vector<1x16x8xf32> to vector<16x8xf32>
      %283 = vector.shape_cast %280 : vector<16x8xf32> to vector<1x16x8xf32>
      tpu.vector_store %arg8[%c0_74, %c0_75, %c0_76], %283 {strides = array<i32>} : memref<1x16x8xf32, #tpu.memory_space<vmem>>, vector<1x16x8xf32>,
    } else {
    }
    return
  }
  func.func @transform_0(%arg0: i32, %arg1: i32) -> (i32, i32, i32) {
    %c0_i32 = arith.constant 0 : i32
    %c0_i32_0 = arith.constant 0 : i32
    return %arg0, %arg1, %c0_i32 : i32, i32, i32
  }
  func.func @transform_1(%arg0: i32, %arg1: i32) -> (i32, i32) {
    %c0_i32 = arith.constant 0 : i32
    %c0_i32_0 = arith.constant 0 : i32
    %c0_i32_1 = arith.constant 0 : i32
    return %c0_i32, %c0_i32_0 : i32, i32
  }
  func.func @transform_2(%arg0: i32, %arg1: i32) -> (i32, i32) {
    %c0_i32 = arith.constant 0 : i32
    %c0_i32_0 = arith.constant 0 : i32
    %c0_i32_1 = arith.constant 0 : i32
    return %c0_i32, %c0_i32_0 : i32, i32
  }
  func.func @transform_3(%arg0: i32, %arg1: i32) -> (i32, i32) {
    %c0_i32 = arith.constant 0 : i32
    %c0_i32_0 = arith.constant 0 : i32
    %c0_i32_1 = arith.constant 0 : i32
    return %c0_i32, %c0_i32_0 : i32, i32
  }
  func.func @transform_4(%arg0: i32, %arg1: i32) -> (i32, i32) {
    %c0_i32 = arith.constant 0 : i32
    %c0_i32_0 = arith.constant 0 : i32
    %c0_i32_1 = arith.constant 0 : i32
    return %c0_i32, %c0_i32_0 : i32, i32
  }
  func.func @transform_5(%arg0: i32, %arg1: i32) -> (i32, i32) {
    %c0_i32 = arith.constant 0 : i32
    %c0_i32_0 = arith.constant 0 : i32
    %c0_i32_1 = arith.constant 0 : i32
    return %c0_i32, %c0_i32_0 : i32, i32
  }
  func.func @transform_6(%arg0: i32, %arg1: i32) -> (i32, i32, i32) {
    %c0_i32 = arith.constant 0 : i32
    %c0_i32_0 = arith.constant 0 : i32
    %c0_i32_1 = arith.constant 0 : i32
    return %arg0, %c0_i32, %c0_i32_0 : i32, i32, i32
  }
}

</mosaic_0001>

<llo_original>
// kernel: lstm_model_forward.2
$region0: #{lstm_model_forward.2}
  #allocation0 [shape = 'u32[]', space=smem, size = 0x4, offset = 0x4, fixed_abs, tag = 'smem constant byte address 0x4 - core index']
  #allocation1 [shape = 'u32[144,128]{1,0:T(1,128)}', space=vmem, size = 0x12000, scoped, tag = 'internal scratch']
  #allocation2 [shape = 'f32[16,32]{1,0:T(8,128)}', space=vmem, size = 0x2000, scoped, tag = 'scratch operand']
  #allocation3 [shape = 'f32[16,32]{1,0:T(8,128)}', space=vmem, size = 0x2000, scoped, tag = 'scratch operand']
  #allocation4 [shape = 'f32[128,128]{1,0:T(8,128)}', space=vmem, size = 0x10000, scoped, tag = 'scratch operand']
  %s0 = inlined_call_operand.vmem [shape: bf16[1,128,16], index: 0, kind: input, shape index: {}]
  %s1 = inlined_call_operand.vmem [shape: bf16[16,128], index: 1, kind: input, shape index: {}]
  %s2 = inlined_call_operand.vmem [shape: bf16[32,128], index: 2, kind: input, shape index: {}]
  %s3 = inlined_call_operand.vmem [shape: f32[1,128], index: 3, kind: input, shape index: {}]
  %s4 = inlined_call_operand.vmem [shape: bf16[1,128,32], index: 4, kind: output, shape index: {}]
  %s5 = sld [smem:[#allocation0]]
  $region30: #{lstm_model_forward.2} parent=0
    _
  %s7 = ssub.s32 1, %s5
  %s8 = scalar_select 0, %s7, %s5
  // Predicated region
  $region2: #{lstm_model_forward.2} parent=0 // pred_check
    _
  $region3: #{lstm_model_forward.2} parent=0 // pred_check_branch
    %10 = sbr.rel (0) target = $region5
  $region4: #{lstm_model_forward.2} parent=0 // pred_region
    _
  $region5: #{lstm_model_forward.2} parent=0 // pred_fallthru
    _
  // Predicated region
  $region6: #{lstm_model_forward.2} parent=0 // pred_check
    _
  $region7: #{lstm_model_forward.2} parent=0 // pred_check_branch
    %12 = sbr.rel (0) target = $region9
  $region8: #{lstm_model_forward.2} parent=0 // pred_region
    _
  $region9: #{lstm_model_forward.2} parent=0 // pred_fallthru
    _
  // Predicated region
  $region10: #{lstm_model_forward.2} parent=0 // pred_check
    _
  $region11: #{lstm_model_forward.2} parent=0 // pred_check_branch
    %14 = sbr.rel (0) target = $region13
  $region12: #{lstm_model_forward.2} parent=0 // pred_region
    _
  $region13: #{lstm_model_forward.2} parent=0 // pred_fallthru
    _
  // Predicated region
  $region14: #{lstm_model_forward.2} parent=0 // pred_check
    _
  $region15: #{lstm_model_forward.2} parent=0 // pred_check_branch
    %16 = sbr.rel (0) target = $region17
  $region16: #{lstm_model_forward.2} parent=0 // pred_region
    _
  $region17: #{lstm_model_forward.2} parent=0 // pred_fallthru
    _
  %p18 = scmp.eq.s32.totalorder 0, 0
  // Predicated region
  $region18: #{lstm_model_forward.2} parent=0 // pred_check
    %p19 = pneg %p18
  $region19: #{lstm_model_forward.2} parent=0 // pred_check_branch
    %21 = sbr.rel (%p19) target = $region21
  $region20: #{lstm_model_forward.2} parent=0 // pred_region
    %vm22 = vcmask 261120
    %23 = vst.msk [vmem:[#allocation2] sm:$0xff] %vm22, 0.0
    %24 = vst.msk [vmem:[#allocation2 + $0x8] sm:$0xff] %vm22, 0.0
    %25 = vst.msk [vmem:[#allocation3] sm:$0xff] %vm22, 0.0
    %26 = vst.msk [vmem:[#allocation3 + $0x8] sm:$0xff] %vm22, 0.0
  $region21: #{lstm_model_forward.2} parent=0 // pred_fallthru
    _
  %v27 = vld [vmem:[%s0] sm:$0xf]
  %v28 = vld [vmem:[%s0 + $0x4] sm:$0xf]
  %v29 = vld [vmem:[%s0 + $0x8] sm:$0xf]
  %v30 = vld [vmem:[%s0 + $0xc] sm:$0xf]
  %v31 = vld [vmem:[%s0 + $0x10] sm:$0xf]
  %v32 = vld [vmem:[%s0 + $0x14] sm:$0xf]
  %v33 = vld [vmem:[%s0 + $0x18] sm:$0xf]
  %v34 = vld [vmem:[%s0 + $0x1c] sm:$0xf]
  %v35 = vld [vmem:[%s0 + $0x20] sm:$0xf]
  %v36 = vld [vmem:[%s0 + $0x24] sm:$0xf]
  %v37 = vld [vmem:[%s0 + $0x28] sm:$0xf]
  %v38 = vld [vmem:[%s0 + $0x2c] sm:$0xf]
  %v39 = vld [vmem:[%s0 + $0x30] sm:$0xf]
  %v40 = vld [vmem:[%s0 + $0x34] sm:$0xf]
  %v41 = vld [vmem:[%s0 + $0x38] sm:$0xf]
  %v42 = vld [vmem:[%s0 + $0x3c] sm:$0xf]
  %v43 = vld [vmem:[%s1] sm:$0xf]
  %v44 = vld [vmem:[%s1 + $0x4] sm:$0xf]
  %v45 = vld [vmem:[%s3] sm:$0x1]
  %v47 = vlaneseq
  %v48 = vshrl.u32 %v47, 7
  %v49 = vsub.s32 0, %v48
  %v50 = vrot.slane %v45, %v49
  %v68 = vunpack.c.l.b16 %v27
  %v69 = vunpack.c.l.b16 %v28
  %v70 = vunpack.c.l.b16 %v29
  %v71 = vunpack.c.l.b16 %v30
  %v72 = vunpack.c.l.b16 %v31
  %v73 = vunpack.c.l.b16 %v32
  %v74 = vunpack.c.l.b16 %v33
  %v75 = vunpack.c.l.b16 %v34
  %v76 = vunpack.c.l.b16 %v35
  %v77 = vunpack.c.l.b16 %v36
  %v78 = vunpack.c.l.b16 %v37
  %v79 = vunpack.c.l.b16 %v38
  %v80 = vunpack.c.l.b16 %v39
  %v81 = vunpack.c.l.b16 %v40
  %v82 = vunpack.c.l.b16 %v41
  %v83 = vunpack.c.l.b16 %v42
  %v84 = vpack.c.b16 %v69, %v68
  %v85 = vpack.c.b16 %v71, %v70
  %v86 = vpack.c.b16 %v73, %v72
  %v87 = vpack.c.b16 %v75, %v74
  %v88 = vpack.c.b16 %v77, %v76
  %v89 = vpack.c.b16 %v79, %v78
  %v90 = vpack.c.b16 %v81, %v80
  %v91 = vpack.c.b16 %v83, %v82
  %v94 = vunpack.c.l.b16 %v43
  %v95 = vunpack.c.l.b16 %v44
  %v96 = vpack.c.b16 %v95, %v94
  %vm98 = vcmask 130048
  %v100 = vsel %vm98, %v84, 0
  %v103 = vsel %vm98, %v85, 0
  %v106 = vsel %vm98, %v86, 0
  %v109 = vsel %vm98, %v87, 0
  %v112 = vsel %vm98, %v88, 0
  %v115 = vsel %vm98, %v89, 0
  %v118 = vsel %vm98, %v90, 0
  %v121 = vsel %vm98, %v91, 0
  %123 = vmatprep.subr.bf16.mxu0 0
  %124 = vmatpush1.bf16.msra.mxu0 0
  %125 = vmatprep.subr.bf16.mxu0 0
  %126 = vmatpush1.bf16.msra.mxu0 0
  %127 = vmatprep.subr.bf16.mxu0 0
  %128 = vmatpush1.bf16.msra.mxu0 0
  %129 = vmatprep.subr.bf16.mxu0 0
  %130 = vmatpush1.bf16.msra.mxu0 0
  %131 = vmatprep.subr.bf16.mxu0 0
  %132 = vmatpush1.bf16.msra.mxu0 0
  %133 = vmatprep.subr.bf16.mxu0 0
  %134 = vmatpush1.bf16.msra.mxu0 0
  %135 = vmatprep.subr.bf16.mxu0 0
  %136 = vmatpush1.bf16.msra.mxu0 0
  %137 = vmatprep.subr.bf16.mxu0 0
  %138 = vmatpush1.bf16.msra.mxu0 %v96
  %139 = vmatprep.subr.bf16.mxu0 0
  %140 = vmatpush2.bf16.msra.mxu0 0
  %141 = vmatprep.subr.bf16.mxu0 0
  %142 = vmatpush2.bf16.msra.mxu0 0
  %143 = vmatprep.subr.bf16.mxu0 0
  %144 = vmatpush2.bf16.msra.mxu0 0
  %145 = vmatprep.subr.bf16.mxu0 0
  %146 = vmatpush2.bf16.msra.mxu0 0
  %147 = vmatprep.subr.bf16.mxu0 0
  %148 = vmatpush2.bf16.msra.mxu0 0
  %149 = vmatprep.subr.bf16.mxu0 0
  %150 = vmatpush2.bf16.msra.mxu0 0
  %151 = vmatprep.subr.bf16.mxu0 0
  %152 = vmatpush2.bf16.msra.mxu0 0
  %153 = vmatprep.subr.bf16.mxu0 0
  %154 = vmatpush2.bf16.msra.mxu0 0
  %155 = vmatprep.mubr.bf16.mxu0 0
  %156 = vmatmul.mubr.bf16.gmra.mxu0 %v100
  %v157 = vpop.f32.mrf.mxu0
  %v158 = vadd.f32 %v50, %v157
  %v159 = vpop.f32.mrf.mxu0
  %v160 = vpop.f32.mrf.mxu0
  %v161 = vadd.f32 %v50, %v160
  %v162 = vpop.f32.mrf.mxu0
  %163 = vmatprep.mubr.bf16.mxu0 0
  %164 = vmatmul.mubr.bf16.gmra.mxu0 %v103
  %v165 = vpop.f32.mrf.mxu0
  %v166 = vadd.f32 %v50, %v165
  %v167 = vpop.f32.mrf.mxu0
  %v168 = vpop.f32.mrf.mxu0
  %v169 = vadd.f32 %v50, %v168
  %v170 = vpop.f32.mrf.mxu0
  %171 = vmatprep.mubr.bf16.mxu0 0
  %172 = vmatmul.mubr.bf16.gmra.mxu0 %v106
  %v173 = vpop.f32.mrf.mxu0
  %v174 = vadd.f32 %v50, %v173
  %v175 = vpop.f32.mrf.mxu0
  %v176 = vpop.f32.mrf.mxu0
  %v177 = vadd.f32 %v50, %v176
  %v178 = vpop.f32.mrf.mxu0
  %179 = vmatprep.mubr.bf16.mxu0 0
  %180 = vmatmul.mubr.bf16.gmra.mxu0 %v109
  %v181 = vpop.f32.mrf.mxu0
  %v182 = vadd.f32 %v50, %v181
  %v183 = vpop.f32.mrf.mxu0
  %v184 = vpop.f32.mrf.mxu0
  %v185 = vadd.f32 %v50, %v184
  %v186 = vpop.f32.mrf.mxu0
  %187 = vmatprep.mubr.bf16.mxu0 0
  %188 = vmatmul.mubr.bf16.gmra.mxu0 %v112
  %v189 = vpop.f32.mrf.mxu0
  %v190 = vadd.f32 %v50, %v189
  %v191 = vpop.f32.mrf.mxu0
  %v192 = vpop.f32.mrf.mxu0
  %v193 = vadd.f32 %v50, %v192
  %v194 = vpop.f32.mrf.mxu0
  %195 = vmatprep.mubr.bf16.mxu0 0
  %196 = vmatmul.mubr.bf16.gmra.mxu0 %v115
  %v197 = vpop.f32.mrf.mxu0
  %v198 = vadd.f32 %v50, %v197
  %v199 = vpop.f32.mrf.mxu0
  %v200 = vpop.f32.mrf.mxu0
  %v201 = vadd.f32 %v50, %v200
  %v202 = vpop.f32.mrf.mxu0
  %203 = vmatprep.mubr.bf16.mxu0 0
  %204 = vmatmul.mubr.bf16.gmra.mxu0 %v118
  %v205 = vpop.f32.mrf.mxu0
  %v206 = vadd.f32 %v50, %v205
  %v207 = vpop.f32.mrf.mxu0
  %v208 = vpop.f32.mrf.mxu0
  %v209 = vadd.f32 %v50, %v208
  %v210 = vpop.f32.mrf.mxu0
  %211 = vmatprep.mubr.bf16.mxu0 0
  %212 = vmatmul.mubr.bf16.gmra.mxu0 %v121
  %v213 = vpop.f32.mrf.mxu0
  %v214 = vadd.f32 %v50, %v213
  %v215 = vpop.f32.mrf.mxu0
  %v216 = vpop.f32.mrf.mxu0
  %v217 = vadd.f32 %v50, %v216
  %v218 = vpop.f32.mrf.mxu0
  %219 = vdwg.mxu0
  %220 = vst [vmem:[#allocation4] sm:$0xff] %v158
  %221 = vst [vmem:[#allocation4 + $0x8] sm:$0xff] %v161
  %222 = vst [vmem:[#allocation4 + $0x10] sm:$0xff] %v166
  %223 = vst [vmem:[#allocation4 + $0x18] sm:$0xff] %v169
  %224 = vst [vmem:[#allocation4 + $0x20] sm:$0xff] %v174
  %225 = vst [vmem:[#allocation4 + $0x28] sm:$0xff] %v177
  %226 = vst [vmem:[#allocation4 + $0x30] sm:$0xff] %v182
  %227 = vst [vmem:[#allocation4 + $0x38] sm:$0xff] %v185
  %228 = vst [vmem:[#allocation4 + $0x40] sm:$0xff] %v190
  %229 = vst [vmem:[#allocation4 + $0x48] sm:$0xff] %v193
  %230 = vst [vmem:[#allocation4 + $0x50] sm:$0xff] %v198
  %231 = vst [vmem:[#allocation4 + $0x58] sm:$0xff] %v201
  %232 = vst [vmem:[#allocation4 + $0x60] sm:$0xff] %v206
  %233 = vst [vmem:[#allocation4 + $0x68] sm:$0xff] %v209
  %234 = vst [vmem:[#allocation4 + $0x70] sm:$0xff] %v214
  %235 = vst [vmem:[#allocation4 + $0x78] sm:$0xff] %v217
  %v236 = vld [vmem:[%s2] sm:$0xf]
  %v237 = vld [vmem:[%s2 + $0x4] sm:$0xf]
  %v238 = vld [vmem:[%s2 + $0x8] sm:$0xf]
  %v239 = vld [vmem:[%s2 + $0xc] sm:$0xf]
  %v240 = vld [vmem:[#allocation2] sm:$0xff]
  %v241 = vld [vmem:[#allocation2 + $0x8] sm:$0xff]
  %v242 = vld [vmem:[#allocation3] sm:$0xff]
  %v243 = vld [vmem:[#allocation3 + $0x8] sm:$0xff]
  %v244 = vld [vmem:[#allocation4] sm:$0xff]
  %v245 = vld [vmem:[#allocation4 + $0x8] sm:$0xff]
  %v246 = vpack.c.bf16 %v241, %v240
  %v251 = vunpack.c.l.b16 %v236
  %v252 = vunpack.c.l.b16 %v237
  %v253 = vunpack.c.l.b16 %v238
  %v254 = vunpack.c.l.b16 %v239
  %v255 = vpack.c.b16 %v252, %v251
  %v256 = vpack.c.b16 %v254, %v253
  %vm259 = vcmask 261120
  %v261 = vsel %vm259, %v246, 0
  %263 = vmatprep.subr.bf16.mxu0 0
  %264 = vmatpush1.bf16.msra.mxu0 0
  %265 = vmatprep.subr.bf16.mxu0 0
  %266 = vmatpush1.bf16.msra.mxu0 0
  %267 = vmatprep.subr.bf16.mxu0 0
  %268 = vmatpush1.bf16.msra.mxu0 0
  %269 = vmatprep.subr.bf16.mxu0 0
  %270 = vmatpush1.bf16.msra.mxu0 0
  %271 = vmatprep.subr.bf16.mxu0 0
  %272 = vmatpush1.bf16.msra.mxu0 0
  %273 = vmatprep.subr.bf16.mxu0 0
  %274 = vmatpush1.bf16.msra.mxu0 0
  %275 = vmatprep.subr.bf16.mxu0 0
  %276 = vmatpush1.bf16.msra.mxu0 %v256
  %277 = vmatprep.subr.bf16.mxu0 0
  %278 = vmatpush1.bf16.msra.mxu0 %v255
  %279 = vmatprep.subr.bf16.mxu0 0
  %280 = vmatpush2.bf16.msra.mxu0 0
  %281 = vmatprep.subr.bf16.mxu0 0
  %282 = vmatpush2.bf16.msra.mxu0 0
  %283 = vmatprep.subr.bf16.mxu0 0
  %284 = vmatpush2.bf16.msra.mxu0 0
  %285 = vmatprep.subr.bf16.mxu0 0
  %286 = vmatpush2.bf16.msra.mxu0 0
  %287 = vmatprep.subr.bf16.mxu0 0
  %288 = vmatpush2.bf16.msra.mxu0 0
  %289 = vmatprep.subr.bf16.mxu0 0
  %290 = vmatpush2.bf16.msra.mxu0 0
  %291 = vmatprep.subr.bf16.mxu0 0
  %292 = vmatpush2.bf16.msra.mxu0 0
  %293 = vmatprep.subr.bf16.mxu0 0
  %294 = vmatpush2.bf16.msra.mxu0 0
  %295 = vmatprep.mubr.bf16.mxu0 0
  %296 = vmatmul.mubr.bf16.gmra.mxu0 %v261
  %v297 = vpop.f32.mrf.mxu0
  %v298 = vadd.f32 0.0, %v297
  %v299 = vpop.f32.mrf.mxu0
  %v300 = vpop.f32.mrf.mxu0
  %v301 = vadd.f32 0.0, %v300
  %v302 = vpop.f32.mrf.mxu0
  %303 = vdwg.mxu0
  %v304 = vadd.f32 %v244, %v298
  %v305 = vadd.f32 %v245, %v301
  %v306 = vxor.u32 %v304, 2147483648
  %v307 = vxor.u32 %v305, 2147483648
  %v308 = vmul.f32 %v306, 1.442695
  %v309 = vpow.pop %v308
  %v310 = vmul.f32 %v307, 1.442695
  %v311 = vpow.pop %v310
  %v312 = vadd.f32 %v309, 1.0
  %v313 = vadd.f32 %v311, 1.0
  %v314 = vrcp.pop %v312
  %v315 = vmul.f32 1.0, %v314
  %v316 = vrcp.pop %v313
  %v317 = vmul.f32 1.0, %v316
  %v318 = vtanh.pop %v304
  %v319 = vtanh.pop %v305
  %322 = vrot.lane.b32.xlu0 %v242, 32
  %v323 = vpop.permute.xlu0 %322
  %324 = vrot.lane.b32.xlu0 %v243, 32
  %v325 = vpop.permute.xlu0 %324
  %v328 = vmul.f32 %v315, %v323
  %v329 = vmul.f32 %v317, %v325
  %332 = vrot.lane.b32.xlu0 %v318, 64
  %v333 = vpop.permute.xlu0 %332
  %334 = vrot.lane.b32.xlu0 %v319, 64
  %v335 = vpop.permute.xlu0 %334
  %v338 = vmul.f32 %v315, %v333
  %v339 = vmul.f32 %v317, %v335
  %342 = vrot.lane.b32.xlu0 %v338, 32
  %v343 = vpop.permute.xlu0 %342
  %344 = vrot.lane.b32.xlu0 %v339, 32
  %v345 = vpop.permute.xlu0 %344
  %v348 = vadd.f32 %v328, %v343
  %v349 = vadd.f32 %v329, %v345
  %v350 = vtanh.pop %v348
  %v351 = vtanh.pop %v349
  %354 = vrot.lane.b32.xlu0 %v350, 64
  %v355 = vpop.permute.xlu0 %354
  %356 = vrot.lane.b32.xlu0 %v351, 64
  %v357 = vpop.permute.xlu0 %356
  %v360 = vmul.f32 %v315, %v355
  %v361 = vmul.f32 %v317, %v357
  %v362 = vpack.c.bf16 %v361, %v360
  %v364 = vunpack.c.l.b16 %v362
  %v365 = vunpack.c.h.b16 %v362
  %v366 = vpack.c.b16 %v364, %v364
  %v367 = vpack.c.b16 %v365, %v365
  %368 = vrot.lane.b32.xlu0 %v366, 32
  %v369 = vpop.permute.xlu0 %368
  %370 = vrot.lane.b32.xlu0 %v367, 32
  %v371 = vpop.permute.xlu0 %370
  %vm374 = vcmask 257024
  %375 = vst.msk [vmem:[%s4] sm:$0xf] %vm374, %v369
  %376 = vst.msk [vmem:[%s4 + $0x4] sm:$0xf] %vm374, %v371
  %s377 = scalar_lea.vmem [#allocation4], 16
  %v378 = vld [vmem:[%s377] sm:$0xff]
  %v379 = vld [vmem:[%s377 + $0x8] sm:$0xff]
  %380 = vrot.lane.b32.xlu0 %v362, 32
  %v381 = vpop.permute.xlu0 %380
  %v383 = vsel %vm259, %v381, 0
  %385 = vmatprep.subr.bf16.mxu0 0
  %386 = vmatpush1.bf16.msra.mxu0 0
  %387 = vmatprep.subr.bf16.mxu0 0
  %388 = vmatpush1.bf16.msra.mxu0 0
  %389 = vmatprep.subr.bf16.mxu0 0
  %390 = vmatpush1.bf16.msra.mxu0 0
  %391 = vmatprep.subr.bf16.mxu0 0
  %392 = vmatpush1.bf16.msra.mxu0 0
  %393 = vmatprep.subr.bf16.mxu0 0
  %394 = vmatpush1.bf16.msra.mxu0 0
  %395 = vmatprep.subr.bf16.mxu0 0
  %396 = vmatpush1.bf16.msra.mxu0 0
  %397 = vmatprep.subr.bf16.mxu0 0
  %398 = vmatpush1.bf16.msra.mxu0 %v256
  %399 = vmatprep.subr.bf16.mxu0 0
  %400 = vmatpush1.bf16.msra.mxu0 %v255
  %401 = vmatprep.subr.bf16.mxu0 0
  %402 = vmatpush2.bf16.msra.mxu0 0
  %403 = vmatprep.subr.bf16.mxu0 0
  %404 = vmatpush2.bf16.msra.mxu0 0
  %405 = vmatprep.subr.bf16.mxu0 0
  %406 = vmatpush2.bf16.msra.mxu0 0
  %407 = vmatprep.subr.bf16.mxu0 0
  %408 = vmatpush2.bf16.msra.mxu0 0
  %409 = vmatprep.subr.bf16.mxu0 0
  %410 = vmatpush2.bf16.msra.mxu0 0
  %411 = vmatprep.subr.bf16.mxu0 0
  %412 = vmatpush2.bf16.msra.mxu0 0
  %413 = vmatprep.subr.bf16.mxu0 0
  %414 = vmatpush2.bf16.msra.mxu0 0
  %415 = vmatprep.subr.bf16.mxu0 0
  %416 = vmatpush2.bf16.msra.mxu0 0
  %417 = vmatprep.mubr.bf16.mxu0 0
  %418 = vmatmul.mubr.bf16.gmra.mxu0 %v383
  %v419 = vpop.f32.mrf.mxu0
  %v420 = vadd.f32 0.0, %v419
  %v421 = vpop.f32.mrf.mxu0
  %v422 = vpop.f32.mrf.mxu0
  %v423 = vadd.f32 0.0, %v422
  %v424 = vpop.f32.mrf.mxu0
  %425 = vdwg.mxu0
  %v426 = vadd.f32 %v378, %v420
  %v427 = vadd.f32 %v379, %v423
  %v428 = vxor.u32 %v426, 2147483648
  %v429 = vxor.u32 %v427, 2147483648
  %v430 = vmul.f32 %v428, 1.442695
  %v431 = vpow.pop %v430
  %v432 = vmul.f32 %v429, 1.442695
  %v433 = vpow.pop %v432
  %v434 = vadd.f32 %v431, 1.0
  %v435 = vadd.f32 %v433, 1.0
  %v436 = vrcp.pop %v434
  %v437 = vmul.f32 1.0, %v436
  %v438 = vrcp.pop %v435
  %v439 = vmul.f32 1.0, %v438
  %v440 = vtanh.pop %v426
  %v441 = vtanh.pop %v427
  %v442 = vmul.f32 %v437, %v348
  %v443 = vmul.f32 %v439, %v349
  %446 = vrot.lane.b32.xlu0 %v440, 64
  %v447 = vpop.permute.xlu0 %446
  %448 = vrot.lane.b32.xlu0 %v441, 64
  %v449 = vpop.permute.xlu0 %448
  %v452 = vmul.f32 %v437, %v447
  %v453 = vmul.f32 %v439, %v449
  %456 = vrot.lane.b32.xlu0 %v452, 32
  %v457 = vpop.permute.xlu0 %456
  %458 = vrot.lane.b32.xlu0 %v453, 32
  %v459 = vpop.permute.xlu0 %458
  %v462 = vadd.f32 %v442, %v457
  %v463 = vadd.f32 %v443, %v459
  %v464 = vtanh.pop %v462
  %v465 = vtanh.pop %v463
  %468 = vrot.lane.b32.xlu0 %v464, 64
  %v469 = vpop.permute.xlu0 %468
  %470 = vrot.lane.b32.xlu0 %v465, 64
  %v471 = vpop.permute.xlu0 %470
  %v474 = vmul.f32 %v437, %v469
  %v475 = vmul.f32 %v439, %v471
  %v476 = vpack.c.bf16 %v475, %v474
  %v478 = vunpack.c.l.b16 %v476
  %v479 = vunpack.c.h.b16 %v476
  %v480 = vpack.c.b16 %v478, %v478
  %v481 = vpack.c.b16 %v479, %v479
  %482 = vrot.lane.b32.xlu0 %v480, 32
  %v483 = vpop.permute.xlu0 %482
  %484 = vrot.lane.b32.xlu0 %v481, 32
  %v485 = vpop.permute.xlu0 %484
  %s488 = scalar_lea.vmem %s4, 8
  %489 = vst.msk [vmem:[%s488] sm:$0xf] %vm374, %v483
  %490 = vst.msk [vmem:[%s488 + $0x4] sm:$0xf] %vm374, %v485
  %s491 = scalar_lea.vmem [#allocation4], 32
  %v492 = vld [vmem:[%s491] sm:$0xff]
  %v493 = vld [vmem:[%s491 + $0x8] sm:$0xff]
  %494 = vrot.lane.b32.xlu0 %v476, 32
  %v495 = vpop.permute.xlu0 %494
  %v497 = vsel %vm259, %v495, 0
  %499 = vmatprep.subr.bf16.mxu0 0
  %500 = vmatpush1.bf16.msra.mxu0 0
  %501 = vmatprep.subr.bf16.mxu0 0
  %502 = vmatpush1.bf16.msra.mxu0 0
  %503 = vmatprep.subr.bf16.mxu0 0
  %504 = vmatpush1.bf16.msra.mxu0 0
  %505 = vmatprep.subr.bf16.mxu0 0
  %506 = vmatpush1.bf16.msra.mxu0 0
  %507 = vmatprep.subr.bf16.mxu0 0
  %508 = vmatpush1.bf16.msra.mxu0 0
  %509 = vmatprep.subr.bf16.mxu0 0
  %510 = vmatpush1.bf16.msra.mxu0 0
  %511 = vmatprep.subr.bf16.mxu0 0
  %512 = vmatpush1.bf16.msra.mxu0 %v256
  %513 = vmatprep.subr.bf16.mxu0 0
  %514 = vmatpush1.bf16.msra.mxu0 %v255
  %515 = vmatprep.subr.bf16.mxu0 0
  %516 = vmatpush2.bf16.msra.mxu0 0
  %517 = vmatprep.subr.bf16.mxu0 0
  %518 = vmatpush2.bf16.msra.mxu0 0
  %519 = vmatprep.subr.bf16.mxu0 0
  %520 = vmatpush2.bf16.msra.mxu0 0
  %521 = vmatprep.subr.bf16.mxu0 0
  %522 = vmatpush2.bf16.msra.mxu0 0
  %523 = vmatprep.subr.bf16.mxu0 0
  %524 = vmatpush2.bf16.msra.mxu0 0
  %525 = vmatprep.subr.bf16.mxu0 0
  %526 = vmatpush2.bf16.msra.mxu0 0
  %527 = vmatprep.subr.bf16.mxu0 0
  %528 = vmatpush2.bf16.msra.mxu0 0
  %529 = vmatprep.subr.bf16.mxu0 0
  %530 = vmatpush2.bf16.msra.mxu0 0
  %531 = vmatprep.mubr.bf16.mxu0 0
  %532 = vmatmul.mubr.bf16.gmra.mxu0 %v497
  %v533 = vpop.f32.mrf.mxu0
  %v534 = vadd.f32 0.0, %v533
  %v535 = vpop.f32.mrf.mxu0
  %v536 = vpop.f32.mrf.mxu0
  %v537 = vadd.f32 0.0, %v536
  %v538 = vpop.f32.mrf.mxu0
  %539 = vdwg.mxu0
  %v540 = vadd.f32 %v492, %v534
  %v541 = vadd.f32 %v493, %v537
  %v542 = vxor.u32 %v540, 2147483648
  %v543 = vxor.u32 %v541, 2147483648
  %v544 = vmul.f32 %v542, 1.442695
  %v545 = vpow.pop %v544
  %v546 = vmul.f32 %v543, 1.442695
  %v547 = vpow.pop %v546
  %v548 = vadd.f32 %v545, 1.0
  %v549 = vadd.f32 %v547, 1.0
  %v550 = vrcp.pop %v548
  %v551 = vmul.f32 1.0, %v550
  %v552 = vrcp.pop %v549
  %v553 = vmul.f32 1.0, %v552
  %v554 = vtanh.pop %v540
  %v555 = vtanh.pop %v541
  %v556 = vmul.f32 %v551, %v462
  %v557 = vmul.f32 %v553, %v463
  %560 = vrot.lane.b32.xlu0 %v554, 64
  %v561 = vpop.permute.xlu0 %560
  %562 = vrot.lane.b32.xlu0 %v555, 64
  %v563 = vpop.permute.xlu0 %562
  %v566 = vmul.f32 %v551, %v561
  %v567 = vmul.f32 %v553, %v563
  %570 = vrot.lane.b32.xlu0 %v566, 32
  %v571 = vpop.permute.xlu0 %570
  %572 = vrot.lane.b32.xlu0 %v567, 32
  %v573 = vpop.permute.xlu0 %572
  %v576 = vadd.f32 %v556, %v571
  %v577 = vadd.f32 %v557, %v573
  %v578 = vtanh.pop %v576
  %v579 = vtanh.pop %v577
  %582 = vrot.lane.b32.xlu0 %v578, 64
  %v583 = vpop.permute.xlu0 %582
  %584 = vrot.lane.b32.xlu0 %v579, 64
  %v585 = vpop.permute.xlu0 %584
  %v588 = vmul.f32 %v551, %v583
  %v589 = vmul.f32 %v553, %v585
  %v590 = vpack.c.bf16 %v589, %v588
  %v592 = vunpack.c.l.b16 %v590
  %v593 = vunpack.c.h.b16 %v590
  %v594 = vpack.c.b16 %v592, %v592
  %v595 = vpack.c.b16 %v593, %v593
  %596 = vrot.lane.b32.xlu0 %v594, 32
  %v597 = vpop.permute.xlu0 %596
  %598 = vrot.lane.b32.xlu0 %v595, 32
  %v599 = vpop.permute.xlu0 %598
  %s602 = scalar_lea.vmem %s4, 16
  %603 = vst.msk [vmem:[%s602] sm:$0xf] %vm374, %v597
  %604 = vst.msk [vmem:[%s602 + $0x4] sm:$0xf] %vm374, %v599
  %s605 = scalar_lea.vmem [#allocation4], 48
  %v606 = vld [vmem:[%s605] sm:$0xff]
  %v607 = vld [vmem:[%s605 + $0x8] sm:$0xff]
  %608 = vrot.lane.b32.xlu0 %v590, 32
  %v609 = vpop.permute.xlu0 %608
  %v611 = vsel %vm259, %v609, 0
  %613 = vmatprep.subr.bf16.mxu0 0
  %614 = vmatpush1.bf16.msra.mxu0 0
  %615 = vmatprep.subr.bf16.mxu0 0
  %616 = vmatpush1.bf16.msra.mxu0 0
  %617 = vmatprep.subr.bf16.mxu0 0
  %618 = vmatpush1.bf16.msra.mxu0 0
  %619 = vmatprep.subr.bf16.mxu0 0
  %620 = vmatpush1.bf16.msra.mxu0 0
  %621 = vmatprep.subr.bf16.mxu0 0
  %622 = vmatpush1.bf16.msra.mxu0 0
  %623 = vmatprep.subr.bf16.mxu0 0
  %624 = vmatpush1.bf16.msra.mxu0 0
  %625 = vmatprep.subr.bf16.mxu0 0
  %626 = vmatpush1.bf16.msra.mxu0 %v256
  %627 = vmatprep.subr.bf16.mxu0 0
  %628 = vmatpush1.bf16.msra.mxu0 %v255
  %629 = vmatprep.subr.bf16.mxu0 0
  %630 = vmatpush2.bf16.msra.mxu0 0
  %631 = vmatprep.subr.bf16.mxu0 0
  %632 = vmatpush2.bf16.msra.mxu0 0
  %633 = vmatprep.subr.bf16.mxu0 0
  %634 = vmatpush2.bf16.msra.mxu0 0
  %635 = vmatprep.subr.bf16.mxu0 0
  %636 = vmatpush2.bf16.msra.mxu0 0
  %637 = vmatprep.subr.bf16.mxu0 0
  %638 = vmatpush2.bf16.msra.mxu0 0
  %639 = vmatprep.subr.bf16.mxu0 0
  %640 = vmatpush2.bf16.msra.mxu0 0
  %641 = vmatprep.subr.bf16.mxu0 0
  %642 = vmatpush2.bf16.msra.mxu0 0
  %643 = vmatprep.subr.bf16.mxu0 0
  %644 = vmatpush2.bf16.msra.mxu0 0
  %645 = vmatprep.mubr.bf16.mxu0 0
  %646 = vmatmul.mubr.bf16.gmra.mxu0 %v611
  %v647 = vpop.f32.mrf.mxu0
  %v648 = vadd.f32 0.0, %v647
  %v649 = vpop.f32.mrf.mxu0
  %v650 = vpop.f32.mrf.mxu0
  %v651 = vadd.f32 0.0, %v650
  %v652 = vpop.f32.mrf.mxu0
  %653 = vdwg.mxu0
  %v654 = vadd.f32 %v606, %v648
  %v655 = vadd.f32 %v607, %v651
  %v656 = vxor.u32 %v654, 2147483648
  %v657 = vxor.u32 %v655, 2147483648
  %v658 = vmul.f32 %v656, 1.442695
  %v659 = vpow.pop %v658
  %v660 = vmul.f32 %v657, 1.442695
  %v661 = vpow.pop %v660
  %v662 = vadd.f32 %v659, 1.0
  %v663 = vadd.f32 %v661, 1.0
  %v664 = vrcp.pop %v662
  %v665 = vmul.f32 1.0, %v664
  %v666 = vrcp.pop %v663
  %v667 = vmul.f32 1.0, %v666
  %v668 = vtanh.pop %v654
  %v669 = vtanh.pop %v655
  %v670 = vmul.f32 %v665, %v576
  %v671 = vmul.f32 %v667, %v577
  %674 = vrot.lane.b32.xlu0 %v668, 64
  %v675 = vpop.permute.xlu0 %674
  %676 = vrot.lane.b32.xlu0 %v669, 64
  %v677 = vpop.permute.xlu0 %676
  %v680 = vmul.f32 %v665, %v675
  %v681 = vmul.f32 %v667, %v677
  %684 = vrot.lane.b32.xlu0 %v680, 32
  %v685 = vpop.permute.xlu0 %684
  %686 = vrot.lane.b32.xlu0 %v681, 32
  %v687 = vpop.permute.xlu0 %686
  %v690 = vadd.f32 %v670, %v685
  %v691 = vadd.f32 %v671, %v687
  %v692 = vtanh.pop %v690
  %v693 = vtanh.pop %v691
  %696 = vrot.lane.b32.xlu0 %v692, 64
  %v697 = vpop.permute.xlu0 %696
  %698 = vrot.lane.b32.xlu0 %v693, 64
  %v699 = vpop.permute.xlu0 %698
  %v702 = vmul.f32 %v665, %v697
  %v703 = vmul.f32 %v667, %v699
  %v704 = vpack.c.bf16 %v703, %v702
  %v706 = vunpack.c.l.b16 %v704
  %v707 = vunpack.c.h.b16 %v704
  %v708 = vpack.c.b16 %v706, %v706
  %v709 = vpack.c.b16 %v707, %v707
  %710 = vrot.lane.b32.xlu0 %v708, 32
  %v711 = vpop.permute.xlu0 %710
  %712 = vrot.lane.b32.xlu0 %v709, 32
  %v713 = vpop.permute.xlu0 %712
  %s716 = scalar_lea.vmem %s4, 24
  %717 = vst.msk [vmem:[%s716] sm:$0xf] %vm374, %v711
  %718 = vst.msk [vmem:[%s716 + $0x4] sm:$0xf] %vm374, %v713
  %s719 = scalar_lea.vmem [#allocation4], 64
  %v720 = vld [vmem:[%s719] sm:$0xff]
  %v721 = vld [vmem:[%s719 + $0x8] sm:$0xff]
  %722 = vrot.lane.b32.xlu0 %v704, 32
  %v723 = vpop.permute.xlu0 %722
  %v725 = vsel %vm259, %v723, 0
  %727 = vmatprep.subr.bf16.mxu0 0
  %728 = vmatpush1.bf16.msra.mxu0 0
  %729 = vmatprep.subr.bf16.mxu0 0
  %730 = vmatpush1.bf16.msra.mxu0 0
  %731 = vmatprep.subr.bf16.mxu0 0
  %732 = vmatpush1.bf16.msra.mxu0 0
  %733 = vmatprep.subr.bf16.mxu0 0
  %734 = vmatpush1.bf16.msra.mxu0 0
  %735 = vmatprep.subr.bf16.mxu0 0
  %736 = vmatpush1.bf16.msra.mxu0 0
  %737 = vmatprep.subr.bf16.mxu0 0
  %738 = vmatpush1.bf16.msra.mxu0 0
  %739 = vmatprep.subr.bf16.mxu0 0
  %740 = vmatpush1.bf16.msra.mxu0 %v256
  %741 = vmatprep.subr.bf16.mxu0 0
  %742 = vmatpush1.bf16.msra.mxu0 %v255
  %743 = vmatprep.subr.bf16.mxu0 0
  %744 = vmatpush2.bf16.msra.mxu0 0
  %745 = vmatprep.subr.bf16.mxu0 0
  %746 = vmatpush2.bf16.msra.mxu0 0
  %747 = vmatprep.subr.bf16.mxu0 0
  %748 = vmatpush2.bf16.msra.mxu0 0
  %749 = vmatprep.subr.bf16.mxu0 0
  %750 = vmatpush2.bf16.msra.mxu0 0
  %751 = vmatprep.subr.bf16.mxu0 0
  %752 = vmatpush2.bf16.msra.mxu0 0
  %753 = vmatprep.subr.bf16.mxu0 0
  %754 = vmatpush2.bf16.msra.mxu0 0
  %755 = vmatprep.subr.bf16.mxu0 0
  %756 = vmatpush2.bf16.msra.mxu0 0
  %757 = vmatprep.subr.bf16.mxu0 0
  %758 = vmatpush2.bf16.msra.mxu0 0
  %759 = vmatprep.mubr.bf16.mxu0 0
  %760 = vmatmul.mubr.bf16.gmra.mxu0 %v725
  %v761 = vpop.f32.mrf.mxu0
  %v762 = vadd.f32 0.0, %v761
  %v763 = vpop.f32.mrf.mxu0
  %v764 = vpop.f32.mrf.mxu0
  %v765 = vadd.f32 0.0, %v764
  %v766 = vpop.f32.mrf.mxu0
  %767 = vdwg.mxu0
  %v768 = vadd.f32 %v720, %v762
  %v769 = vadd.f32 %v721, %v765
  %v770 = vxor.u32 %v768, 2147483648
  %v771 = vxor.u32 %v769, 2147483648
  %v772 = vmul.f32 %v770, 1.442695
  %v773 = vpow.pop %v772
  %v774 = vmul.f32 %v771, 1.442695
  %v775 = vpow.pop %v774
  %v776 = vadd.f32 %v773, 1.0
  %v777 = vadd.f32 %v775, 1.0
  %v778 = vrcp.pop %v776
  %v779 = vmul.f32 1.0, %v778
  %v780 = vrcp.pop %v777
  %v781 = vmul.f32 1.0, %v780
  %v782 = vtanh.pop %v768
  %v783 = vtanh.pop %v769
  %v784 = vmul.f32 %v779, %v690
  %v785 = vmul.f32 %v781, %v691
  %788 = vrot.lane.b32.xlu0 %v782, 64
  %v789 = vpop.permute.xlu0 %788
  %790 = vrot.lane.b32.xlu0 %v783, 64
  %v791 = vpop.permute.xlu0 %790
  %v794 = vmul.f32 %v779, %v789
  %v795 = vmul.f32 %v781, %v791
  %798 = vrot.lane.b32.xlu0 %v794, 32
  %v799 = vpop.permute.xlu0 %798
  %800 = vrot.lane.b32.xlu0 %v795, 32
  %v801 = vpop.permute.xlu0 %800
  %v804 = vadd.f32 %v784, %v799
  %v805 = vadd.f32 %v785, %v801
  %v806 = vtanh.pop %v804
  %v807 = vtanh.pop %v805
  %810 = vrot.lane.b32.xlu0 %v806, 64
  %v811 = vpop.permute.xlu0 %810
  %812 = vrot.lane.b32.xlu0 %v807, 64
  %v813 = vpop.permute.xlu0 %812
  %v816 = vmul.f32 %v779, %v811
  %v817 = vmul.f32 %v781, %v813
  %v818 = vpack.c.bf16 %v817, %v816
  %v820 = vunpack.c.l.b16 %v818
  %v821 = vunpack.c.h.b16 %v818
  %v822 = vpack.c.b16 %v820, %v820
  %v823 = vpack.c.b16 %v821, %v821
  %824 = vrot.lane.b32.xlu0 %v822, 32
  %v825 = vpop.permute.xlu0 %824
  %826 = vrot.lane.b32.xlu0 %v823, 32
  %v827 = vpop.permute.xlu0 %826
  %s830 = scalar_lea.vmem %s4, 32
  %831 = vst.msk [vmem:[%s830] sm:$0xf] %vm374, %v825
  %832 = vst.msk [vmem:[%s830 + $0x4] sm:$0xf] %vm374, %v827
  %s833 = scalar_lea.vmem [#allocation4], 80
  %v834 = vld [vmem:[%s833] sm:$0xff]
  %v835 = vld [vmem:[%s833 + $0x8] sm:$0xff]
  %836 = vrot.lane.b32.xlu0 %v818, 32
  %v837 = vpop.permute.xlu0 %836
  %v839 = vsel %vm259, %v837, 0
  %841 = vmatprep.subr.bf16.mxu0 0
  %842 = vmatpush1.bf16.msra.mxu0 0
  %843 = vmatprep.subr.bf16.mxu0 0
  %844 = vmatpush1.bf16.msra.mxu0 0
  %845 = vmatprep.subr.bf16.mxu0 0
  %846 = vmatpush1.bf16.msra.mxu0 0
  %847 = vmatprep.subr.bf16.mxu0 0
  %848 = vmatpush1.bf16.msra.mxu0 0
  %849 = vmatprep.subr.bf16.mxu0 0
  %850 = vmatpush1.bf16.msra.mxu0 0
  %851 = vmatprep.subr.bf16.mxu0 0
  %852 = vmatpush1.bf16.msra.mxu0 0
  %853 = vmatprep.subr.bf16.mxu0 0
  %854 = vmatpush1.bf16.msra.mxu0 %v256
  %855 = vmatprep.subr.bf16.mxu0 0
  %856 = vmatpush1.bf16.msra.mxu0 %v255
  %857 = vmatprep.subr.bf16.mxu0 0
  %858 = vmatpush2.bf16.msra.mxu0 0
  %859 = vmatprep.subr.bf16.mxu0 0
  %860 = vmatpush2.bf16.msra.mxu0 0
  %861 = vmatprep.subr.bf16.mxu0 0
  %862 = vmatpush2.bf16.msra.mxu0 0
  %863 = vmatprep.subr.bf16.mxu0 0
  %864 = vmatpush2.bf16.msra.mxu0 0
  %865 = vmatprep.subr.bf16.mxu0 0
  %866 = vmatpush2.bf16.msra.mxu0 0
  %867 = vmatprep.subr.bf16.mxu0 0
  %868 = vmatpush2.bf16.msra.mxu0 0
  %869 = vmatprep.subr.bf16.mxu0 0
  %870 = vmatpush2.bf16.msra.mxu0 0
  %871 = vmatprep.subr.bf16.mxu0 0
  %872 = vmatpush2.bf16.msra.mxu0 0
  %873 = vmatprep.mubr.bf16.mxu0 0
  %874 = vmatmul.mubr.bf16.gmra.mxu0 %v839
  %v875 = vpop.f32.mrf.mxu0
  %v876 = vadd.f32 0.0, %v875
  %v877 = vpop.f32.mrf.mxu0
  %v878 = vpop.f32.mrf.mxu0
  %v879 = vadd.f32 0.0, %v878
  %v880 = vpop.f32.mrf.mxu0
  %881 = vdwg.mxu0
  %v882 = vadd.f32 %v834, %v876
  %v883 = vadd.f32 %v835, %v879
  %v884 = vxor.u32 %v882, 2147483648
  %v885 = vxor.u32 %v883, 2147483648
  %v886 = vmul.f32 %v884, 1.442695
  %v887 = vpow.pop %v886
  %v888 = vmul.f32 %v885, 1.442695
  %v889 = vpow.pop %v888
  %v890 = vadd.f32 %v887, 1.0
  %v891 = vadd.f32 %v889, 1.0
  %v892 = vrcp.pop %v890
  %v893 = vmul.f32 1.0, %v892
  %v894 = vrcp.pop %v891
  %v895 = vmul.f32 1.0, %v894
  %v896 = vtanh.pop %v882
  %v897 = vtanh.pop %v883
  %v898 = vmul.f32 %v893, %v804
  %v899 = vmul.f32 %v895, %v805
  %902 = vrot.lane.b32.xlu0 %v896, 64
  %v903 = vpop.permute.xlu0 %902
  %904 = vrot.lane.b32.xlu0 %v897, 64
  %v905 = vpop.permute.xlu0 %904
  %v908 = vmul.f32 %v893, %v903
  %v909 = vmul.f32 %v895, %v905
  %912 = vrot.lane.b32.xlu0 %v908, 32
  %v913 = vpop.permute.xlu0 %912
  %914 = vrot.lane.b32.xlu0 %v909, 32
  %v915 = vpop.permute.xlu0 %914
  %v918 = vadd.f32 %v898, %v913
  %v919 = vadd.f32 %v899, %v915
  %v920 = vtanh.pop %v918
  %v921 = vtanh.pop %v919
  %924 = vrot.lane.b32.xlu0 %v920, 64
  %v925 = vpop.permute.xlu0 %924
  %926 = vrot.lane.b32.xlu0 %v921, 64
  %v927 = vpop.permute.xlu0 %926
  %v930 = vmul.f32 %v893, %v925
  %v931 = vmul.f32 %v895, %v927
  %v932 = vpack.c.bf16 %v931, %v930
  %v934 = vunpack.c.l.b16 %v932
  %v935 = vunpack.c.h.b16 %v932
  %v936 = vpack.c.b16 %v934, %v934
  %v937 = vpack.c.b16 %v935, %v935
  %938 = vrot.lane.b32.xlu0 %v936, 32
  %v939 = vpop.permute.xlu0 %938
  %940 = vrot.lane.b32.xlu0 %v937, 32
  %v941 = vpop.permute.xlu0 %940
  %s944 = scalar_lea.vmem %s4, 40
  %945 = vst.msk [vmem:[%s944] sm:$0xf] %vm374, %v939
  %946 = vst.msk [vmem:[%s944 + $0x4] sm:$0xf] %vm374, %v941
  %s947 = scalar_lea.vmem [#allocation4], 96
  %v948 = vld [vmem:[%s947] sm:$0xff]
  %v949 = vld [vmem:[%s947 + $0x8] sm:$0xff]
  %950 = vrot.lane.b32.xlu0 %v932, 32
  %v951 = vpop.permute.xlu0 %950
  %v953 = vsel %vm259, %v951, 0
  %955 = vmatprep.subr.bf16.mxu0 0
  %956 = vmatpush1.bf16.msra.mxu0 0
  %957 = vmatprep.subr.bf16.mxu0 0
  %958 = vmatpush1.bf16.msra.mxu0 0
  %959 = vmatprep.subr.bf16.mxu0 0
  %960 = vmatpush1.bf16.msra.mxu0 0
  %961 = vmatprep.subr.bf16.mxu0 0
  %962 = vmatpush1.bf16.msra.mxu0 0
  %963 = vmatprep.subr.bf16.mxu0 0
  %964 = vmatpush1.bf16.msra.mxu0 0
  %965 = vmatprep.subr.bf16.mxu0 0
  %966 = vmatpush1.bf16.msra.mxu0 0
  %967 = vmatprep.subr.bf16.mxu0 0
  %968 = vmatpush1.bf16.msra.mxu0 %v256
  %969 = vmatprep.subr.bf16.mxu0 0
  %970 = vmatpush1.bf16.msra.mxu0 %v255
  %971 = vmatprep.subr.bf16.mxu0 0
  %972 = vmatpush2.bf16.msra.mxu0 0
  %973 = vmatprep.subr.bf16.mxu0 0
  %974 = vmatpush2.bf16.msra.mxu0 0
  %975 = vmatprep.subr.bf16.mxu0 0
  %976 = vmatpush2.bf16.msra.mxu0 0
  %977 = vmatprep.subr.bf16.mxu0 0
  %978 = vmatpush2.bf16.msra.mxu0 0
  %979 = vmatprep.subr.bf16.mxu0 0
  %980 = vmatpush2.bf16.msra.mxu0 0
  %981 = vmatprep.subr.bf16.mxu0 0
  %982 = vmatpush2.bf16.msra.mxu0 0
  %983 = vmatprep.subr.bf16.mxu0 0
  %984 = vmatpush2.bf16.msra.mxu0 0
  %985 = vmatprep.subr.bf16.mxu0 0
  %986 = vmatpush2.bf16.msra.mxu0 0
  %987 = vmatprep.mubr.bf16.mxu0 0
  %988 = vmatmul.mubr.bf16.gmra.mxu0 %v953
  %v989 = vpop.f32.mrf.mxu0
  %v990 = vadd.f32 0.0, %v989
  %v991 = vpop.f32.mrf.mxu0
  %v992 = vpop.f32.mrf.mxu0
  %v993 = vadd.f32 0.0, %v992
  %v994 = vpop.f32.mrf.mxu0
  %995 = vdwg.mxu0
  %v996 = vadd.f32 %v948, %v990
  %v997 = vadd.f32 %v949, %v993
  %v998 = vxor.u32 %v996, 2147483648
  %v999 = vxor.u32 %v997, 2147483648
  %v1000 = vmul.f32 %v998, 1.442695
  %v1001 = vpow.pop %v1000
  %v1002 = vmul.f32 %v999, 1.442695
  %v1003 = vpow.pop %v1002
  %v1004 = vadd.f32 %v1001, 1.0
  %v1005 = vadd.f32 %v1003, 1.0
  %v1006 = vrcp.pop %v1004
  %v1007 = vmul.f32 1.0, %v1006
  %v1008 = vrcp.pop %v1005
  %v1009 = vmul.f32 1.0, %v1008
  %v1010 = vtanh.pop %v996
  %v1011 = vtanh.pop %v997
  %v1012 = vmul.f32 %v1007, %v918
  %v1013 = vmul.f32 %v1009, %v919
  %1016 = vrot.lane.b32.xlu0 %v1010, 64
  %v1017 = vpop.permute.xlu0 %1016
  %1018 = vrot.lane.b32.xlu0 %v1011, 64
  %v1019 = vpop.permute.xlu0 %1018
  %v1022 = vmul.f32 %v1007, %v1017
  %v1023 = vmul.f32 %v1009, %v1019
  %1026 = vrot.lane.b32.xlu0 %v1022, 32
  %v1027 = vpop.permute.xlu0 %1026
  %1028 = vrot.lane.b32.xlu0 %v1023, 32
  %v1029 = vpop.permute.xlu0 %1028
  %v1032 = vadd.f32 %v1012, %v1027
  %v1033 = vadd.f32 %v1013, %v1029
  %v1034 = vtanh.pop %v1032
  %v1035 = vtanh.pop %v1033
  %1038 = vrot.lane.b32.xlu0 %v1034, 64
  %v1039 = vpop.permute.xlu0 %1038
  %1040 = vrot.lane.b32.xlu0 %v1035, 64
  %v1041 = vpop.permute.xlu0 %1040
  %v1044 = vmul.f32 %v1007, %v1039
  %v1045 = vmul.f32 %v1009, %v1041
  %v1046 = vpack.c.bf16 %v1045, %v1044
  %v1048 = vunpack.c.l.b16 %v1046
  %v1049 = vunpack.c.h.b16 %v1046
  %v1050 = vpack.c.b16 %v1048, %v1048
  %v1051 = vpack.c.b16 %v1049, %v1049
  %1052 = vrot.lane.b32.xlu0 %v1050, 32
  %v1053 = vpop.permute.xlu0 %1052
  %1054 = vrot.lane.b32.xlu0 %v1051, 32
  %v1055 = vpop.permute.xlu0 %1054
  %s1058 = scalar_lea.vmem %s4, 48
  %1059 = vst.msk [vmem:[%s1058] sm:$0xf] %vm374, %v1053
  %1060 = vst.msk [vmem:[%s1058 + $0x4] sm:$0xf] %vm374, %v1055
  %s1061 = scalar_lea.vmem [#allocation4], 112
  %v1062 = vld [vmem:[%s1061] sm:$0xff]
  %v1063 = vld [vmem:[%s1061 + $0x8] sm:$0xff]
  %1064 = vrot.lane.b32.xlu0 %v1046, 32
  %v1065 = vpop.permute.xlu0 %1064
  %v1067 = vsel %vm259, %v1065, 0
  %1069 = vmatprep.subr.bf16.mxu0 0
  %1070 = vmatpush1.bf16.msra.mxu0 0
  %1071 = vmatprep.subr.bf16.mxu0 0
  %1072 = vmatpush1.bf16.msra.mxu0 0
  %1073 = vmatprep.subr.bf16.mxu0 0
  %1074 = vmatpush1.bf16.msra.mxu0 0
  %1075 = vmatprep.subr.bf16.mxu0 0
  %1076 = vmatpush1.bf16.msra.mxu0 0
  %1077 = vmatprep.subr.bf16.mxu0 0
  %1078 = vmatpush1.bf16.msra.mxu0 0
  %1079 = vmatprep.subr.bf16.mxu0 0
  %1080 = vmatpush1.bf16.msra.mxu0 0
  %1081 = vmatprep.subr.bf16.mxu0 0
  %1082 = vmatpush1.bf16.msra.mxu0 %v256
  %1083 = vmatprep.subr.bf16.mxu0 0
  %1084 = vmatpush1.bf16.msra.mxu0 %v255
  %1085 = vmatprep.subr.bf16.mxu0 0
  %1086 = vmatpush2.bf16.msra.mxu0 0
  %1087 = vmatprep.subr.bf16.mxu0 0
  %1088 = vmatpush2.bf16.msra.mxu0 0
  %1089 = vmatprep.subr.bf16.mxu0 0
  %1090 = vmatpush2.bf16.msra.mxu0 0
  %1091 = vmatprep.subr.bf16.mxu0 0
  %1092 = vmatpush2.bf16.msra.mxu0 0
  %1093 = vmatprep.subr.bf16.mxu0 0
  %1094 = vmatpush2.bf16.msra.mxu0 0
  %1095 = vmatprep.subr.bf16.mxu0 0
  %1096 = vmatpush2.bf16.msra.mxu0 0
  %1097 = vmatprep.subr.bf16.mxu0 0
  %1098 = vmatpush2.bf16.msra.mxu0 0
  %1099 = vmatprep.subr.bf16.mxu0 0
  %1100 = vmatpush2.bf16.msra.mxu0 0
  %1101 = vmatprep.mubr.bf16.mxu0 0
  %1102 = vmatmul.mubr.bf16.gmra.mxu0 %v1067
  %v1103 = vpop.f32.mrf.mxu0
  %v1104 = vadd.f32 0.0, %v1103
  %v1105 = vpop.f32.mrf.mxu0
  %v1106 = vpop.f32.mrf.mxu0
  %v1107 = vadd.f32 0.0, %v1106
  %v1108 = vpop.f32.mrf.mxu0
  %1109 = vdwg.mxu0
  %v1110 = vadd.f32 %v1062, %v1104
  %v1111 = vadd.f32 %v1063, %v1107
  %v1112 = vxor.u32 %v1110, 2147483648
  %v1113 = vxor.u32 %v1111, 2147483648
  %v1114 = vmul.f32 %v1112, 1.442695
  %v1115 = vpow.pop %v1114
  %v1116 = vmul.f32 %v1113, 1.442695
  %v1117 = vpow.pop %v1116
  %v1118 = vadd.f32 %v1115, 1.0
  %v1119 = vadd.f32 %v1117, 1.0
  %v1120 = vrcp.pop %v1118
  %v1121 = vmul.f32 1.0, %v1120
  %v1122 = vrcp.pop %v1119
  %v1123 = vmul.f32 1.0, %v1122
  %v1124 = vtanh.pop %v1110
  %v1125 = vtanh.pop %v1111
  %v1126 = vmul.f32 %v1121, %v1032
  %v1127 = vmul.f32 %v1123, %v1033
  %1130 = vrot.lane.b32.xlu0 %v1124, 64
  %v1131 = vpop.permute.xlu0 %1130
  %1132 = vrot.lane.b32.xlu0 %v1125, 64
  %v1133 = vpop.permute.xlu0 %1132
  %v1136 = vmul.f32 %v1121, %v1131
  %v1137 = vmul.f32 %v1123, %v1133
  %1140 = vrot.lane.b32.xlu0 %v1136, 32
  %v1141 = vpop.permute.xlu0 %1140
  %1142 = vrot.lane.b32.xlu0 %v1137, 32
  %v1143 = vpop.permute.xlu0 %1142
  %v1146 = vadd.f32 %v1126, %v1141
  %v1147 = vadd.f32 %v1127, %v1143
  %v1148 = vtanh.pop %v1146
  %v1149 = vtanh.pop %v1147
  %1152 = vrot.lane.b32.xlu0 %v1148, 64
  %v1153 = vpop.permute.xlu0 %1152
  %1154 = vrot.lane.b32.xlu0 %v1149, 64
  %v1155 = vpop.permute.xlu0 %1154
  %v1158 = vmul.f32 %v1121, %v1153
  %v1159 = vmul.f32 %v1123, %v1155
  %v1160 = vpack.c.bf16 %v1159, %v1158
  %v1162 = vunpack.c.l.b16 %v1160
  %v1163 = vunpack.c.h.b16 %v1160
  %v1164 = vpack.c.b16 %v1162, %v1162
  %v1165 = vpack.c.b16 %v1163, %v1163
  %1166 = vrot.lane.b32.xlu0 %v1164, 32
  %v1167 = vpop.permute.xlu0 %1166
  %1168 = vrot.lane.b32.xlu0 %v1165, 32
  %v1169 = vpop.permute.xlu0 %1168
  %s1172 = scalar_lea.vmem %s4, 56
  %1173 = vst.msk [vmem:[%s1172] sm:$0xf] %vm374, %v1167
  %1174 = vst.msk [vmem:[%s1172 + $0x4] sm:$0xf] %vm374, %v1169
  %1177 = vrot.lane.b32.xlu0 %v1158, 32
  %v1178 = vpop.permute.xlu0 %1177
  %1179 = vrot.lane.b32.xlu0 %v1159, 32
  %v1180 = vpop.permute.xlu0 %1179
  %1183 = vst.msk [vmem:[#allocation2] sm:$0xff] %vm259, %v1178
  %1184 = vst.msk [vmem:[#allocation2 + $0x8] sm:$0xff] %vm259, %v1180
  %1187 = vrot.lane.b32.xlu0 %v1146, 96
  %v1188 = vpop.permute.xlu0 %1187
  %1189 = vrot.lane.b32.xlu0 %v1147, 96
  %v1190 = vpop.permute.xlu0 %1189
  %1193 = vst.msk [vmem:[#allocation3] sm:$0xff] %vm259, %v1188
  %1194 = vst.msk [vmem:[#allocation3 + $0x8] sm:$0xff] %vm259, %v1190
  // Predicated region
  $region22: #{lstm_model_forward.2} parent=0 // pred_check
    _
  $region23: #{lstm_model_forward.2} parent=0 // pred_check_branch
    %1196 = sbr.rel (0) target = $region25
  $region24: #{lstm_model_forward.2} parent=0 // pred_region
    _
  $region25: #{lstm_model_forward.2} parent=0 // pred_fallthru
    _
  // Predicated region
  $region26: #{lstm_model_forward.2} parent=0 // pred_check
    _
  $region27: #{lstm_model_forward.2} parent=0 // pred_check_branch
    %1198 = sbr.rel (0) target = $region29
  $region28: #{lstm_model_forward.2} parent=0 // pred_region
    _
  $region29: #{lstm_model_forward.2} parent=0 // pred_fallthru
    _

// kernel: lstm_model_forward.3
$region0: #{lstm_model_forward.3}
  #allocation0 [shape = 'u32[]', space=smem, size = 0x4, offset = 0x4, fixed_abs, tag = 'smem constant byte address 0x4 - core index']
  #allocation1 [shape = 'u32[144,128]{1,0:T(1,128)}', space=vmem, size = 0x12000, scoped, tag = 'internal scratch']
  #allocation2 [shape = 'f32[16,32]{1,0:T(8,128)}', space=vmem, size = 0x2000, scoped, tag = 'scratch operand']
  #allocation3 [shape = 'f32[16,32]{1,0:T(8,128)}', space=vmem, size = 0x2000, scoped, tag = 'scratch operand']
  #allocation4 [shape = 'f32[128,128]{1,0:T(8,128)}', space=vmem, size = 0x10000, scoped, tag = 'scratch operand']
  %s0 = inlined_call_operand.vmem [shape: bf16[1,128,32], index: 0, kind: input, shape index: {}]
  %s1 = inlined_call_operand.vmem [shape: bf16[32,128], index: 1, kind: input, shape index: {}]
  %s2 = inlined_call_operand.vmem [shape: bf16[32,128], index: 2, kind: input, shape index: {}]
  %s3 = inlined_call_operand.vmem [shape: f32[1,128], index: 3, kind: input, shape index: {}]
  %s4 = inlined_call_operand.vmem [shape: bf16[32,8], index: 4, kind: input, shape index: {}]
  %s5 = inlined_call_operand.vmem [shape: f32[1,8], index: 5, kind: input, shape index: {}]
  %s6 = inlined_call_operand.vmem [shape: f32[1,16,8], index: 6, kind: output, shape index: {}]
  %s7 = sld [smem:[#allocation0]]
  $region42: #{lstm_model_forward.3} parent=0
    _
  %s9 = ssub.s32 1, %s7
  %s10 = scalar_select 0, %s9, %s7
  // Predicated region
  $region2: #{lstm_model_forward.3} parent=0 // pred_check
    _
  $region3: #{lstm_model_forward.3} parent=0 // pred_check_branch
    %12 = sbr.rel (0) target = $region5
  $region4: #{lstm_model_forward.3} parent=0 // pred_region
    _
  $region5: #{lstm_model_forward.3} parent=0 // pred_fallthru
    _
  // Predicated region
  $region6: #{lstm_model_forward.3} parent=0 // pred_check
    _
  $region7: #{lstm_model_forward.3} parent=0 // pred_check_branch
    %14 = sbr.rel (0) target = $region9
  $region8: #{lstm_model_forward.3} parent=0 // pred_region
    _
  $region9: #{lstm_model_forward.3} parent=0 // pred_fallthru
    _
  // Predicated region
  $region10: #{lstm_model_forward.3} parent=0 // pred_check
    _
  $region11: #{lstm_model_forward.3} parent=0 // pred_check_branch
    %16 = sbr.rel (0) target = $region13
  $region12: #{lstm_model_forward.3} parent=0 // pred_region
    _
  $region13: #{lstm_model_forward.3} parent=0 // pred_fallthru
    _
  // Predicated region
  $region14: #{lstm_model_forward.3} parent=0 // pred_check
    _
  $region15: #{lstm_model_forward.3} parent=0 // pred_check_branch
    %18 = sbr.rel (0) target = $region17
  $region16: #{lstm_model_forward.3} parent=0 // pred_region
    _
  $region17: #{lstm_model_forward.3} parent=0 // pred_fallthru
    _
  // Predicated region
  $region18: #{lstm_model_forward.3} parent=0 // pred_check
    _
  $region19: #{lstm_model_forward.3} parent=0 // pred_check_branch
    %20 = sbr.rel (0) target = $region21
  $region20: #{lstm_model_forward.3} parent=0 // pred_region
    _
  $region21: #{lstm_model_forward.3} parent=0 // pred_fallthru
    _
  // Predicated region
  $region22: #{lstm_model_forward.3} parent=0 // pred_check
    _
  $region23: #{lstm_model_forward.3} parent=0 // pred_check_branch
    %22 = sbr.rel (0) target = $region25
  $region24: #{lstm_model_forward.3} parent=0 // pred_region
    _
  $region25: #{lstm_model_forward.3} parent=0 // pred_fallthru
    _
  %p24 = scmp.eq.s32.totalorder 0, 0
  // Predicated region
  $region26: #{lstm_model_forward.3} parent=0 // pred_check
    %p25 = pneg %p24
  $region27: #{lstm_model_forward.3} parent=0 // pred_check_branch
    %27 = sbr.rel (%p25) target = $region29
  $region28: #{lstm_model_forward.3} parent=0 // pred_region
    %vm28 = vcmask 261120
    %29 = vst.msk [vmem:[#allocation2] sm:$0xff] %vm28, 0.0
    %30 = vst.msk [vmem:[#allocation2 + $0x8] sm:$0xff] %vm28, 0.0
    %31 = vst.msk [vmem:[#allocation3] sm:$0xff] %vm28, 0.0
    %32 = vst.msk [vmem:[#allocation3 + $0x8] sm:$0xff] %vm28, 0.0
  $region29: #{lstm_model_forward.3} parent=0 // pred_fallthru
    _
  %v33 = vld [vmem:[%s0] sm:$0xf]
  %v34 = vld [vmem:[%s0 + $0x4] sm:$0xf]
  %v35 = vld [vmem:[%s0 + $0x8] sm:$0xf]
  %v36 = vld [vmem:[%s0 + $0xc] sm:$0xf]
  %v37 = vld [vmem:[%s0 + $0x10] sm:$0xf]
  %v38 = vld [vmem:[%s0 + $0x14] sm:$0xf]
  %v39 = vld [vmem:[%s0 + $0x18] sm:$0xf]
  %v40 = vld [vmem:[%s0 + $0x1c] sm:$0xf]
  %v41 = vld [vmem:[%s0 + $0x20] sm:$0xf]
  %v42 = vld [vmem:[%s0 + $0x24] sm:$0xf]
  %v43 = vld [vmem:[%s0 + $0x28] sm:$0xf]
  %v44 = vld [vmem:[%s0 + $0x2c] sm:$0xf]
  %v45 = vld [vmem:[%s0 + $0x30] sm:$0xf]
  %v46 = vld [vmem:[%s0 + $0x34] sm:$0xf]
  %v47 = vld [vmem:[%s0 + $0x38] sm:$0xf]
  %v48 = vld [vmem:[%s0 + $0x3c] sm:$0xf]
  %v49 = vld [vmem:[%s1] sm:$0xf]
  %v50 = vld [vmem:[%s1 + $0x4] sm:$0xf]
  %v51 = vld [vmem:[%s1 + $0x8] sm:$0xf]
  %v52 = vld [vmem:[%s1 + $0xc] sm:$0xf]
  %v53 = vld [vmem:[%s3] sm:$0x1]
  %v55 = vlaneseq
  %v56 = vshrl.u32 %v55, 7
  %v57 = vsub.s32 0, %v56
  %v58 = vrot.slane %v53, %v57
  %v76 = vunpack.c.l.b16 %v33
  %v77 = vunpack.c.l.b16 %v34
  %v78 = vunpack.c.l.b16 %v35
  %v79 = vunpack.c.l.b16 %v36
  %v80 = vunpack.c.l.b16 %v37
  %v81 = vunpack.c.l.b16 %v38
  %v82 = vunpack.c.l.b16 %v39
  %v83 = vunpack.c.l.b16 %v40
  %v84 = vunpack.c.l.b16 %v41
  %v85 = vunpack.c.l.b16 %v42
  %v86 = vunpack.c.l.b16 %v43
  %v87 = vunpack.c.l.b16 %v44
  %v88 = vunpack.c.l.b16 %v45
  %v89 = vunpack.c.l.b16 %v46
  %v90 = vunpack.c.l.b16 %v47
  %v91 = vunpack.c.l.b16 %v48
  %v92 = vpack.c.b16 %v77, %v76
  %v93 = vpack.c.b16 %v79, %v78
  %v94 = vpack.c.b16 %v81, %v80
  %v95 = vpack.c.b16 %v83, %v82
  %v96 = vpack.c.b16 %v85, %v84
  %v97 = vpack.c.b16 %v87, %v86
  %v98 = vpack.c.b16 %v89, %v88
  %v99 = vpack.c.b16 %v91, %v90
  %v104 = vunpack.c.l.b16 %v49
  %v105 = vunpack.c.l.b16 %v50
  %v106 = vunpack.c.l.b16 %v51
  %v107 = vunpack.c.l.b16 %v52
  %v108 = vpack.c.b16 %v105, %v104
  %v109 = vpack.c.b16 %v107, %v106
  %vm112 = vcmask 261120
  %v114 = vsel %vm112, %v92, 0
  %v117 = vsel %vm112, %v93, 0
  %v120 = vsel %vm112, %v94, 0
  %v123 = vsel %vm112, %v95, 0
  %v126 = vsel %vm112, %v96, 0
  %v129 = vsel %vm112, %v97, 0
  %v132 = vsel %vm112, %v98, 0
  %v135 = vsel %vm112, %v99, 0
  %137 = vmatprep.subr.bf16.mxu0 0
  %138 = vmatpush1.bf16.msra.mxu0 0
  %139 = vmatprep.subr.bf16.mxu0 0
  %140 = vmatpush1.bf16.msra.mxu0 0
  %141 = vmatprep.subr.bf16.mxu0 0
  %142 = vmatpush1.bf16.msra.mxu0 0
  %143 = vmatprep.subr.bf16.mxu0 0
  %144 = vmatpush1.bf16.msra.mxu0 0
  %145 = vmatprep.subr.bf16.mxu0 0
  %146 = vmatpush1.bf16.msra.mxu0 0
  %147 = vmatprep.subr.bf16.mxu0 0
  %148 = vmatpush1.bf16.msra.mxu0 0
  %149 = vmatprep.subr.bf16.mxu0 0
  %150 = vmatpush1.bf16.msra.mxu0 %v109
  %151 = vmatprep.subr.bf16.mxu0 0
  %152 = vmatpush1.bf16.msra.mxu0 %v108
  %153 = vmatprep.subr.bf16.mxu0 0
  %154 = vmatpush2.bf16.msra.mxu0 0
  %155 = vmatprep.subr.bf16.mxu0 0
  %156 = vmatpush2.bf16.msra.mxu0 0
  %157 = vmatprep.subr.bf16.mxu0 0
  %158 = vmatpush2.bf16.msra.mxu0 0
  %159 = vmatprep.subr.bf16.mxu0 0
  %160 = vmatpush2.bf16.msra.mxu0 0
  %161 = vmatprep.subr.bf16.mxu0 0
  %162 = vmatpush2.bf16.msra.mxu0 0
  %163 = vmatprep.subr.bf16.mxu0 0
  %164 = vmatpush2.bf16.msra.mxu0 0
  %165 = vmatprep.subr.bf16.mxu0 0
  %166 = vmatpush2.bf16.msra.mxu0 0
  %167 = vmatprep.subr.bf16.mxu0 0
  %168 = vmatpush2.bf16.msra.mxu0 0
  %169 = vmatprep.mubr.bf16.mxu0 0
  %170 = vmatmul.mubr.bf16.gmra.mxu0 %v114
  %v171 = vpop.f32.mrf.mxu0
  %v172 = vadd.f32 %v58, %v171
  %v173 = vpop.f32.mrf.mxu0
  %v174 = vpop.f32.mrf.mxu0
  %v175 = vadd.f32 %v58, %v174
  %v176 = vpop.f32.mrf.mxu0
  %177 = vmatprep.mubr.bf16.mxu0 0
  %178 = vmatmul.mubr.bf16.gmra.mxu0 %v117
  %v179 = vpop.f32.mrf.mxu0
  %v180 = vadd.f32 %v58, %v179
  %v181 = vpop.f32.mrf.mxu0
  %v182 = vpop.f32.mrf.mxu0
  %v183 = vadd.f32 %v58, %v182
  %v184 = vpop.f32.mrf.mxu0
  %185 = vmatprep.mubr.bf16.mxu0 0
  %186 = vmatmul.mubr.bf16.gmra.mxu0 %v120
  %v187 = vpop.f32.mrf.mxu0
  %v188 = vadd.f32 %v58, %v187
  %v189 = vpop.f32.mrf.mxu0
  %v190 = vpop.f32.mrf.mxu0
  %v191 = vadd.f32 %v58, %v190
  %v192 = vpop.f32.mrf.mxu0
  %193 = vmatprep.mubr.bf16.mxu0 0
  %194 = vmatmul.mubr.bf16.gmra.mxu0 %v123
  %v195 = vpop.f32.mrf.mxu0
  %v196 = vadd.f32 %v58, %v195
  %v197 = vpop.f32.mrf.mxu0
  %v198 = vpop.f32.mrf.mxu0
  %v199 = vadd.f32 %v58, %v198
  %v200 = vpop.f32.mrf.mxu0
  %201 = vmatprep.mubr.bf16.mxu0 0
  %202 = vmatmul.mubr.bf16.gmra.mxu0 %v126
  %v203 = vpop.f32.mrf.mxu0
  %v204 = vadd.f32 %v58, %v203
  %v205 = vpop.f32.mrf.mxu0
  %v206 = vpop.f32.mrf.mxu0
  %v207 = vadd.f32 %v58, %v206
  %v208 = vpop.f32.mrf.mxu0
  %209 = vmatprep.mubr.bf16.mxu0 0
  %210 = vmatmul.mubr.bf16.gmra.mxu0 %v129
  %v211 = vpop.f32.mrf.mxu0
  %v212 = vadd.f32 %v58, %v211
  %v213 = vpop.f32.mrf.mxu0
  %v214 = vpop.f32.mrf.mxu0
  %v215 = vadd.f32 %v58, %v214
  %v216 = vpop.f32.mrf.mxu0
  %217 = vmatprep.mubr.bf16.mxu0 0
  %218 = vmatmul.mubr.bf16.gmra.mxu0 %v132
  %v219 = vpop.f32.mrf.mxu0
  %v220 = vadd.f32 %v58, %v219
  %v221 = vpop.f32.mrf.mxu0
  %v222 = vpop.f32.mrf.mxu0
  %v223 = vadd.f32 %v58, %v222
  %v224 = vpop.f32.mrf.mxu0
  %225 = vmatprep.mubr.bf16.mxu0 0
  %226 = vmatmul.mubr.bf16.gmra.mxu0 %v135
  %v227 = vpop.f32.mrf.mxu0
  %v228 = vadd.f32 %v58, %v227
  %v229 = vpop.f32.mrf.mxu0
  %v230 = vpop.f32.mrf.mxu0
  %v231 = vadd.f32 %v58, %v230
  %v232 = vpop.f32.mrf.mxu0
  %233 = vdwg.mxu0
  %234 = vst [vmem:[#allocation4] sm:$0xff] %v172
  %235 = vst [vmem:[#allocation4 + $0x8] sm:$0xff] %v175
  %236 = vst [vmem:[#allocation4 + $0x10] sm:$0xff] %v180
  %237 = vst [vmem:[#allocation4 + $0x18] sm:$0xff] %v183
  %238 = vst [vmem:[#allocation4 + $0x20] sm:$0xff] %v188
  %239 = vst [vmem:[#allocation4 + $0x28] sm:$0xff] %v191
  %240 = vst [vmem:[#allocation4 + $0x30] sm:$0xff] %v196
  %241 = vst [vmem:[#allocation4 + $0x38] sm:$0xff] %v199
  %242 = vst [vmem:[#allocation4 + $0x40] sm:$0xff] %v204
  %243 = vst [vmem:[#allocation4 + $0x48] sm:$0xff] %v207
  %244 = vst [vmem:[#allocation4 + $0x50] sm:$0xff] %v212
  %245 = vst [vmem:[#allocation4 + $0x58] sm:$0xff] %v215
  %246 = vst [vmem:[#allocation4 + $0x60] sm:$0xff] %v220
  %247 = vst [vmem:[#allocation4 + $0x68] sm:$0xff] %v223
  %248 = vst [vmem:[#allocation4 + $0x70] sm:$0xff] %v228
  %249 = vst [vmem:[#allocation4 + $0x78] sm:$0xff] %v231
  %v250 = vld [vmem:[%s2] sm:$0xf]
  %v251 = vld [vmem:[%s2 + $0x4] sm:$0xf]
  %v252 = vld [vmem:[%s2 + $0x8] sm:$0xf]
  %v253 = vld [vmem:[%s2 + $0xc] sm:$0xf]
  %v254 = vld [vmem:[#allocation2] sm:$0xff]
  %v255 = vld [vmem:[#allocation2 + $0x8] sm:$0xff]
  %v256 = vld [vmem:[#allocation3] sm:$0xff]
  %v257 = vld [vmem:[#allocation3 + $0x8] sm:$0xff]
  %v258 = vld [vmem:[#allocation4] sm:$0xff]
  %v259 = vld [vmem:[#allocation4 + $0x8] sm:$0xff]
  %v260 = vpack.c.bf16 %v255, %v254
  %v265 = vunpack.c.l.b16 %v250
  %v266 = vunpack.c.l.b16 %v251
  %v267 = vunpack.c.l.b16 %v252
  %v268 = vunpack.c.l.b16 %v253
  %v269 = vpack.c.b16 %v266, %v265
  %v270 = vpack.c.b16 %v268, %v267
  %v274 = vsel %vm112, %v260, 0
  %276 = vmatprep.subr.bf16.mxu0 0
  %277 = vmatpush1.bf16.msra.mxu0 0
  %278 = vmatprep.subr.bf16.mxu0 0
  %279 = vmatpush1.bf16.msra.mxu0 0
  %280 = vmatprep.subr.bf16.mxu0 0
  %281 = vmatpush1.bf16.msra.mxu0 0
  %282 = vmatprep.subr.bf16.mxu0 0
  %283 = vmatpush1.bf16.msra.mxu0 0
  %284 = vmatprep.subr.bf16.mxu0 0
  %285 = vmatpush1.bf16.msra.mxu0 0
  %286 = vmatprep.subr.bf16.mxu0 0
  %287 = vmatpush1.bf16.msra.mxu0 0
  %288 = vmatprep.subr.bf16.mxu0 0
  %289 = vmatpush1.bf16.msra.mxu0 %v270
  %290 = vmatprep.subr.bf16.mxu0 0
  %291 = vmatpush1.bf16.msra.mxu0 %v269
  %292 = vmatprep.subr.bf16.mxu0 0
  %293 = vmatpush2.bf16.msra.mxu0 0
  %294 = vmatprep.subr.bf16.mxu0 0
  %295 = vmatpush2.bf16.msra.mxu0 0
  %296 = vmatprep.subr.bf16.mxu0 0
  %297 = vmatpush2.bf16.msra.mxu0 0
  %298 = vmatprep.subr.bf16.mxu0 0
  %299 = vmatpush2.bf16.msra.mxu0 0
  %300 = vmatprep.subr.bf16.mxu0 0
  %301 = vmatpush2.bf16.msra.mxu0 0
  %302 = vmatprep.subr.bf16.mxu0 0
  %303 = vmatpush2.bf16.msra.mxu0 0
  %304 = vmatprep.subr.bf16.mxu0 0
  %305 = vmatpush2.bf16.msra.mxu0 0
  %306 = vmatprep.subr.bf16.mxu0 0
  %307 = vmatpush2.bf16.msra.mxu0 0
  %308 = vmatprep.mubr.bf16.mxu0 0
  %309 = vmatmul.mubr.bf16.gmra.mxu0 %v274
  %v310 = vpop.f32.mrf.mxu0
  %v311 = vadd.f32 0.0, %v310
  %v312 = vpop.f32.mrf.mxu0
  %v313 = vpop.f32.mrf.mxu0
  %v314 = vadd.f32 0.0, %v313
  %v315 = vpop.f32.mrf.mxu0
  %316 = vdwg.mxu0
  %v317 = vadd.f32 %v258, %v311
  %v318 = vadd.f32 %v259, %v314
  %v319 = vxor.u32 %v317, 2147483648
  %v320 = vxor.u32 %v318, 2147483648
  %v321 = vmul.f32 %v319, 1.442695
  %v322 = vpow.pop %v321
  %v323 = vmul.f32 %v320, 1.442695
  %v324 = vpow.pop %v323
  %v325 = vadd.f32 %v322, 1.0
  %v326 = vadd.f32 %v324, 1.0
  %v327 = vrcp.pop %v325
  %v328 = vmul.f32 1.0, %v327
  %v329 = vrcp.pop %v326
  %v330 = vmul.f32 1.0, %v329
  %v331 = vtanh.pop %v317
  %v332 = vtanh.pop %v318
  %335 = vrot.lane.b32.xlu0 %v256, 32
  %v336 = vpop.permute.xlu0 %335
  %337 = vrot.lane.b32.xlu0 %v257, 32
  %v338 = vpop.permute.xlu0 %337
  %v341 = vmul.f32 %v328, %v336
  %v342 = vmul.f32 %v330, %v338
  %345 = vrot.lane.b32.xlu0 %v331, 64
  %v346 = vpop.permute.xlu0 %345
  %347 = vrot.lane.b32.xlu0 %v332, 64
  %v348 = vpop.permute.xlu0 %347
  %v351 = vmul.f32 %v328, %v346
  %v352 = vmul.f32 %v330, %v348
  %355 = vrot.lane.b32.xlu0 %v351, 32
  %v356 = vpop.permute.xlu0 %355
  %357 = vrot.lane.b32.xlu0 %v352, 32
  %v358 = vpop.permute.xlu0 %357
  %v361 = vadd.f32 %v341, %v356
  %v362 = vadd.f32 %v342, %v358
  %v363 = vtanh.pop %v361
  %v364 = vtanh.pop %v362
  %367 = vrot.lane.b32.xlu0 %v363, 64
  %v368 = vpop.permute.xlu0 %367
  %369 = vrot.lane.b32.xlu0 %v364, 64
  %v370 = vpop.permute.xlu0 %369
  %v373 = vmul.f32 %v328, %v368
  %v374 = vmul.f32 %v330, %v370
  %s375 = scalar_lea.vmem [#allocation4], 16
  %v376 = vld [vmem:[%s375] sm:$0xff]
  %v377 = vld [vmem:[%s375 + $0x8] sm:$0xff]
  %v378 = vpack.c.bf16 %v374, %v373
  %380 = vrot.lane.b32.xlu0 %v378, 32
  %v381 = vpop.permute.xlu0 %380
  %v383 = vsel %vm112, %v381, 0
  %385 = vmatprep.subr.bf16.mxu0 0
  %386 = vmatpush1.bf16.msra.mxu0 0
  %387 = vmatprep.subr.bf16.mxu0 0
  %388 = vmatpush1.bf16.msra.mxu0 0
  %389 = vmatprep.subr.bf16.mxu0 0
  %390 = vmatpush1.bf16.msra.mxu0 0
  %391 = vmatprep.subr.bf16.mxu0 0
  %392 = vmatpush1.bf16.msra.mxu0 0
  %393 = vmatprep.subr.bf16.mxu0 0
  %394 = vmatpush1.bf16.msra.mxu0 0
  %395 = vmatprep.subr.bf16.mxu0 0
  %396 = vmatpush1.bf16.msra.mxu0 0
  %397 = vmatprep.subr.bf16.mxu0 0
  %398 = vmatpush1.bf16.msra.mxu0 %v270
  %399 = vmatprep.subr.bf16.mxu0 0
  %400 = vmatpush1.bf16.msra.mxu0 %v269
  %401 = vmatprep.subr.bf16.mxu0 0
  %402 = vmatpush2.bf16.msra.mxu0 0
  %403 = vmatprep.subr.bf16.mxu0 0
  %404 = vmatpush2.bf16.msra.mxu0 0
  %405 = vmatprep.subr.bf16.mxu0 0
  %406 = vmatpush2.bf16.msra.mxu0 0
  %407 = vmatprep.subr.bf16.mxu0 0
  %408 = vmatpush2.bf16.msra.mxu0 0
  %409 = vmatprep.subr.bf16.mxu0 0
  %410 = vmatpush2.bf16.msra.mxu0 0
  %411 = vmatprep.subr.bf16.mxu0 0
  %412 = vmatpush2.bf16.msra.mxu0 0
  %413 = vmatprep.subr.bf16.mxu0 0
  %414 = vmatpush2.bf16.msra.mxu0 0
  %415 = vmatprep.subr.bf16.mxu0 0
  %416 = vmatpush2.bf16.msra.mxu0 0
  %417 = vmatprep.mubr.bf16.mxu0 0
  %418 = vmatmul.mubr.bf16.gmra.mxu0 %v383
  %v419 = vpop.f32.mrf.mxu0
  %v420 = vadd.f32 0.0, %v419
  %v421 = vpop.f32.mrf.mxu0
  %v422 = vpop.f32.mrf.mxu0
  %v423 = vadd.f32 0.0, %v422
  %v424 = vpop.f32.mrf.mxu0
  %425 = vdwg.mxu0
  %v426 = vadd.f32 %v376, %v420
  %v427 = vadd.f32 %v377, %v423
  %v428 = vxor.u32 %v426, 2147483648
  %v429 = vxor.u32 %v427, 2147483648
  %v430 = vmul.f32 %v428, 1.442695
  %v431 = vpow.pop %v430
  %v432 = vmul.f32 %v429, 1.442695
  %v433 = vpow.pop %v432
  %v434 = vadd.f32 %v431, 1.0
  %v435 = vadd.f32 %v433, 1.0
  %v436 = vrcp.pop %v434
  %v437 = vmul.f32 1.0, %v436
  %v438 = vrcp.pop %v435
  %v439 = vmul.f32 1.0, %v438
  %v440 = vtanh.pop %v426
  %v441 = vtanh.pop %v427
  %v442 = vmul.f32 %v437, %v361
  %v443 = vmul.f32 %v439, %v362
  %446 = vrot.lane.b32.xlu0 %v440, 64
  %v447 = vpop.permute.xlu0 %446
  %448 = vrot.lane.b32.xlu0 %v441, 64
  %v449 = vpop.permute.xlu0 %448
  %v452 = vmul.f32 %v437, %v447
  %v453 = vmul.f32 %v439, %v449
  %456 = vrot.lane.b32.xlu0 %v452, 32
  %v457 = vpop.permute.xlu0 %456
  %458 = vrot.lane.b32.xlu0 %v453, 32
  %v459 = vpop.permute.xlu0 %458
  %v462 = vadd.f32 %v442, %v457
  %v463 = vadd.f32 %v443, %v459
  %v464 = vtanh.pop %v462
  %v465 = vtanh.pop %v463
  %468 = vrot.lane.b32.xlu0 %v464, 64
  %v469 = vpop.permute.xlu0 %468
  %470 = vrot.lane.b32.xlu0 %v465, 64
  %v471 = vpop.permute.xlu0 %470
  %v474 = vmul.f32 %v437, %v469
  %v475 = vmul.f32 %v439, %v471
  %s476 = scalar_lea.vmem [#allocation4], 32
  %v477 = vld [vmem:[%s476] sm:$0xff]
  %v478 = vld [vmem:[%s476 + $0x8] sm:$0xff]
  %v479 = vpack.c.bf16 %v475, %v474
  %481 = vrot.lane.b32.xlu0 %v479, 32
  %v482 = vpop.permute.xlu0 %481
  %v484 = vsel %vm112, %v482, 0
  %486 = vmatprep.subr.bf16.mxu0 0
  %487 = vmatpush1.bf16.msra.mxu0 0
  %488 = vmatprep.subr.bf16.mxu0 0
  %489 = vmatpush1.bf16.msra.mxu0 0
  %490 = vmatprep.subr.bf16.mxu0 0
  %491 = vmatpush1.bf16.msra.mxu0 0
  %492 = vmatprep.subr.bf16.mxu0 0
  %493 = vmatpush1.bf16.msra.mxu0 0
  %494 = vmatprep.subr.bf16.mxu0 0
  %495 = vmatpush1.bf16.msra.mxu0 0
  %496 = vmatprep.subr.bf16.mxu0 0
  %497 = vmatpush1.bf16.msra.mxu0 0
  %498 = vmatprep.subr.bf16.mxu0 0
  %499 = vmatpush1.bf16.msra.mxu0 %v270
  %500 = vmatprep.subr.bf16.mxu0 0
  %501 = vmatpush1.bf16.msra.mxu0 %v269
  %502 = vmatprep.subr.bf16.mxu0 0
  %503 = vmatpush2.bf16.msra.mxu0 0
  %504 = vmatprep.subr.bf16.mxu0 0
  %505 = vmatpush2.bf16.msra.mxu0 0
  %506 = vmatprep.subr.bf16.mxu0 0
  %507 = vmatpush2.bf16.msra.mxu0 0
  %508 = vmatprep.subr.bf16.mxu0 0
  %509 = vmatpush2.bf16.msra.mxu0 0
  %510 = vmatprep.subr.bf16.mxu0 0
  %511 = vmatpush2.bf16.msra.mxu0 0
  %512 = vmatprep.subr.bf16.mxu0 0
  %513 = vmatpush2.bf16.msra.mxu0 0
  %514 = vmatprep.subr.bf16.mxu0 0
  %515 = vmatpush2.bf16.msra.mxu0 0
  %516 = vmatprep.subr.bf16.mxu0 0
  %517 = vmatpush2.bf16.msra.mxu0 0
  %518 = vmatprep.mubr.bf16.mxu0 0
  %519 = vmatmul.mubr.bf16.gmra.mxu0 %v484
  %v520 = vpop.f32.mrf.mxu0
  %v521 = vadd.f32 0.0, %v520
  %v522 = vpop.f32.mrf.mxu0
  %v523 = vpop.f32.mrf.mxu0
  %v524 = vadd.f32 0.0, %v523
  %v525 = vpop.f32.mrf.mxu0
  %526 = vdwg.mxu0
  %v527 = vadd.f32 %v477, %v521
  %v528 = vadd.f32 %v478, %v524
  %v529 = vxor.u32 %v527, 2147483648
  %v530 = vxor.u32 %v528, 2147483648
  %v531 = vmul.f32 %v529, 1.442695
  %v532 = vpow.pop %v531
  %v533 = vmul.f32 %v530, 1.442695
  %v534 = vpow.pop %v533
  %v535 = vadd.f32 %v532, 1.0
  %v536 = vadd.f32 %v534, 1.0
  %v537 = vrcp.pop %v535
  %v538 = vmul.f32 1.0, %v537
  %v539 = vrcp.pop %v536
  %v540 = vmul.f32 1.0, %v539
  %v541 = vtanh.pop %v527
  %v542 = vtanh.pop %v528
  %v543 = vmul.f32 %v538, %v462
  %v544 = vmul.f32 %v540, %v463
  %547 = vrot.lane.b32.xlu0 %v541, 64
  %v548 = vpop.permute.xlu0 %547
  %549 = vrot.lane.b32.xlu0 %v542, 64
  %v550 = vpop.permute.xlu0 %549
  %v553 = vmul.f32 %v538, %v548
  %v554 = vmul.f32 %v540, %v550
  %557 = vrot.lane.b32.xlu0 %v553, 32
  %v558 = vpop.permute.xlu0 %557
  %559 = vrot.lane.b32.xlu0 %v554, 32
  %v560 = vpop.permute.xlu0 %559
  %v563 = vadd.f32 %v543, %v558
  %v564 = vadd.f32 %v544, %v560
  %v565 = vtanh.pop %v563
  %v566 = vtanh.pop %v564
  %569 = vrot.lane.b32.xlu0 %v565, 64
  %v570 = vpop.permute.xlu0 %569
  %571 = vrot.lane.b32.xlu0 %v566, 64
  %v572 = vpop.permute.xlu0 %571
  %v575 = vmul.f32 %v538, %v570
  %v576 = vmul.f32 %v540, %v572
  %s577 = scalar_lea.vmem [#allocation4], 48
  %v578 = vld [vmem:[%s577] sm:$0xff]
  %v579 = vld [vmem:[%s577 + $0x8] sm:$0xff]
  %v580 = vpack.c.bf16 %v576, %v575
  %582 = vrot.lane.b32.xlu0 %v580, 32
  %v583 = vpop.permute.xlu0 %582
  %v585 = vsel %vm112, %v583, 0
  %587 = vmatprep.subr.bf16.mxu0 0
  %588 = vmatpush1.bf16.msra.mxu0 0
  %589 = vmatprep.subr.bf16.mxu0 0
  %590 = vmatpush1.bf16.msra.mxu0 0
  %591 = vmatprep.subr.bf16.mxu0 0
  %592 = vmatpush1.bf16.msra.mxu0 0
  %593 = vmatprep.subr.bf16.mxu0 0
  %594 = vmatpush1.bf16.msra.mxu0 0
  %595 = vmatprep.subr.bf16.mxu0 0
  %596 = vmatpush1.bf16.msra.mxu0 0
  %597 = vmatprep.subr.bf16.mxu0 0
  %598 = vmatpush1.bf16.msra.mxu0 0
  %599 = vmatprep.subr.bf16.mxu0 0
  %600 = vmatpush1.bf16.msra.mxu0 %v270
  %601 = vmatprep.subr.bf16.mxu0 0
  %602 = vmatpush1.bf16.msra.mxu0 %v269
  %603 = vmatprep.subr.bf16.mxu0 0
  %604 = vmatpush2.bf16.msra.mxu0 0
  %605 = vmatprep.subr.bf16.mxu0 0
  %606 = vmatpush2.bf16.msra.mxu0 0
  %607 = vmatprep.subr.bf16.mxu0 0
  %608 = vmatpush2.bf16.msra.mxu0 0
  %609 = vmatprep.subr.bf16.mxu0 0
  %610 = vmatpush2.bf16.msra.mxu0 0
  %611 = vmatprep.subr.bf16.mxu0 0
  %612 = vmatpush2.bf16.msra.mxu0 0
  %613 = vmatprep.subr.bf16.mxu0 0
  %614 = vmatpush2.bf16.msra.mxu0 0
  %615 = vmatprep.subr.bf16.mxu0 0
  %616 = vmatpush2.bf16.msra.mxu0 0
  %617 = vmatprep.subr.bf16.mxu0 0
  %618 = vmatpush2.bf16.msra.mxu0 0
  %619 = vmatprep.mubr.bf16.mxu0 0
  %620 = vmatmul.mubr.bf16.gmra.mxu0 %v585
  %v621 = vpop.f32.mrf.mxu0
  %v622 = vadd.f32 0.0, %v621
  %v623 = vpop.f32.mrf.mxu0
  %v624 = vpop.f32.mrf.mxu0
  %v625 = vadd.f32 0.0, %v624
  %v626 = vpop.f32.mrf.mxu0
  %627 = vdwg.mxu0
  %v628 = vadd.f32 %v578, %v622
  %v629 = vadd.f32 %v579, %v625
  %v630 = vxor.u32 %v628, 2147483648
  %v631 = vxor.u32 %v629, 2147483648
  %v632 = vmul.f32 %v630, 1.442695
  %v633 = vpow.pop %v632
  %v634 = vmul.f32 %v631, 1.442695
  %v635 = vpow.pop %v634
  %v636 = vadd.f32 %v633, 1.0
  %v637 = vadd.f32 %v635, 1.0
  %v638 = vrcp.pop %v636
  %v639 = vmul.f32 1.0, %v638
  %v640 = vrcp.pop %v637
  %v641 = vmul.f32 1.0, %v640
  %v642 = vtanh.pop %v628
  %v643 = vtanh.pop %v629
  %v644 = vmul.f32 %v639, %v563
  %v645 = vmul.f32 %v641, %v564
  %648 = vrot.lane.b32.xlu0 %v642, 64
  %v649 = vpop.permute.xlu0 %648
  %650 = vrot.lane.b32.xlu0 %v643, 64
  %v651 = vpop.permute.xlu0 %650
  %v654 = vmul.f32 %v639, %v649
  %v655 = vmul.f32 %v641, %v651
  %658 = vrot.lane.b32.xlu0 %v654, 32
  %v659 = vpop.permute.xlu0 %658
  %660 = vrot.lane.b32.xlu0 %v655, 32
  %v661 = vpop.permute.xlu0 %660
  %v664 = vadd.f32 %v644, %v659
  %v665 = vadd.f32 %v645, %v661
  %v666 = vtanh.pop %v664
  %v667 = vtanh.pop %v665
  %670 = vrot.lane.b32.xlu0 %v666, 64
  %v671 = vpop.permute.xlu0 %670
  %672 = vrot.lane.b32.xlu0 %v667, 64
  %v673 = vpop.permute.xlu0 %672
  %v676 = vmul.f32 %v639, %v671
  %v677 = vmul.f32 %v641, %v673
  %s678 = scalar_lea.vmem [#allocation4], 64
  %v679 = vld [vmem:[%s678] sm:$0xff]
  %v680 = vld [vmem:[%s678 + $0x8] sm:$0xff]
  %v681 = vpack.c.bf16 %v677, %v676
  %683 = vrot.lane.b32.xlu0 %v681, 32
  %v684 = vpop.permute.xlu0 %683
  %v686 = vsel %vm112, %v684, 0
  %688 = vmatprep.subr.bf16.mxu0 0
  %689 = vmatpush1.bf16.msra.mxu0 0
  %690 = vmatprep.subr.bf16.mxu0 0
  %691 = vmatpush1.bf16.msra.mxu0 0
  %692 = vmatprep.subr.bf16.mxu0 0
  %693 = vmatpush1.bf16.msra.mxu0 0
  %694 = vmatprep.subr.bf16.mxu0 0
  %695 = vmatpush1.bf16.msra.mxu0 0
  %696 = vmatprep.subr.bf16.mxu0 0
  %697 = vmatpush1.bf16.msra.mxu0 0
  %698 = vmatprep.subr.bf16.mxu0 0
  %699 = vmatpush1.bf16.msra.mxu0 0
  %700 = vmatprep.subr.bf16.mxu0 0
  %701 = vmatpush1.bf16.msra.mxu0 %v270
  %702 = vmatprep.subr.bf16.mxu0 0
  %703 = vmatpush1.bf16.msra.mxu0 %v269
  %704 = vmatprep.subr.bf16.mxu0 0
  %705 = vmatpush2.bf16.msra.mxu0 0
  %706 = vmatprep.subr.bf16.mxu0 0
  %707 = vmatpush2.bf16.msra.mxu0 0
  %708 = vmatprep.subr.bf16.mxu0 0
  %709 = vmatpush2.bf16.msra.mxu0 0
  %710 = vmatprep.subr.bf16.mxu0 0
  %711 = vmatpush2.bf16.msra.mxu0 0
  %712 = vmatprep.subr.bf16.mxu0 0
  %713 = vmatpush2.bf16.msra.mxu0 0
  %714 = vmatprep.subr.bf16.mxu0 0
  %715 = vmatpush2.bf16.msra.mxu0 0
  %716 = vmatprep.subr.bf16.mxu0 0
  %717 = vmatpush2.bf16.msra.mxu0 0
  %718 = vmatprep.subr.bf16.mxu0 0
  %719 = vmatpush2.bf16.msra.mxu0 0
  %720 = vmatprep.mubr.bf16.mxu0 0
  %721 = vmatmul.mubr.bf16.gmra.mxu0 %v686
  %v722 = vpop.f32.mrf.mxu0
  %v723 = vadd.f32 0.0, %v722
  %v724 = vpop.f32.mrf.mxu0
  %v725 = vpop.f32.mrf.mxu0
  %v726 = vadd.f32 0.0, %v725
  %v727 = vpop.f32.mrf.mxu0
  %728 = vdwg.mxu0
  %v729 = vadd.f32 %v679, %v723
  %v730 = vadd.f32 %v680, %v726
  %v731 = vxor.u32 %v729, 2147483648
  %v732 = vxor.u32 %v730, 2147483648
  %v733 = vmul.f32 %v731, 1.442695
  %v734 = vpow.pop %v733
  %v735 = vmul.f32 %v732, 1.442695
  %v736 = vpow.pop %v735
  %v737 = vadd.f32 %v734, 1.0
  %v738 = vadd.f32 %v736, 1.0
  %v739 = vrcp.pop %v737
  %v740 = vmul.f32 1.0, %v739
  %v741 = vrcp.pop %v738
  %v742 = vmul.f32 1.0, %v741
  %v743 = vtanh.pop %v729
  %v744 = vtanh.pop %v730
  %v745 = vmul.f32 %v740, %v664
  %v746 = vmul.f32 %v742, %v665
  %749 = vrot.lane.b32.xlu0 %v743, 64
  %v750 = vpop.permute.xlu0 %749
  %751 = vrot.lane.b32.xlu0 %v744, 64
  %v752 = vpop.permute.xlu0 %751
  %v755 = vmul.f32 %v740, %v750
  %v756 = vmul.f32 %v742, %v752
  %759 = vrot.lane.b32.xlu0 %v755, 32
  %v760 = vpop.permute.xlu0 %759
  %761 = vrot.lane.b32.xlu0 %v756, 32
  %v762 = vpop.permute.xlu0 %761
  %v765 = vadd.f32 %v745, %v760
  %v766 = vadd.f32 %v746, %v762
  %v767 = vtanh.pop %v765
  %v768 = vtanh.pop %v766
  %771 = vrot.lane.b32.xlu0 %v767, 64
  %v772 = vpop.permute.xlu0 %771
  %773 = vrot.lane.b32.xlu0 %v768, 64
  %v774 = vpop.permute.xlu0 %773
  %v777 = vmul.f32 %v740, %v772
  %v778 = vmul.f32 %v742, %v774
  %s779 = scalar_lea.vmem [#allocation4], 80
  %v780 = vld [vmem:[%s779] sm:$0xff]
  %v781 = vld [vmem:[%s779 + $0x8] sm:$0xff]
  %v782 = vpack.c.bf16 %v778, %v777
  %784 = vrot.lane.b32.xlu0 %v782, 32
  %v785 = vpop.permute.xlu0 %784
  %v787 = vsel %vm112, %v785, 0
  %789 = vmatprep.subr.bf16.mxu0 0
  %790 = vmatpush1.bf16.msra.mxu0 0
  %791 = vmatprep.subr.bf16.mxu0 0
  %792 = vmatpush1.bf16.msra.mxu0 0
  %793 = vmatprep.subr.bf16.mxu0 0
  %794 = vmatpush1.bf16.msra.mxu0 0
  %795 = vmatprep.subr.bf16.mxu0 0
  %796 = vmatpush1.bf16.msra.mxu0 0
  %797 = vmatprep.subr.bf16.mxu0 0
  %798 = vmatpush1.bf16.msra.mxu0 0
  %799 = vmatprep.subr.bf16.mxu0 0
  %800 = vmatpush1.bf16.msra.mxu0 0
  %801 = vmatprep.subr.bf16.mxu0 0
  %802 = vmatpush1.bf16.msra.mxu0 %v270
  %803 = vmatprep.subr.bf16.mxu0 0
  %804 = vmatpush1.bf16.msra.mxu0 %v269
  %805 = vmatprep.subr.bf16.mxu0 0
  %806 = vmatpush2.bf16.msra.mxu0 0
  %807 = vmatprep.subr.bf16.mxu0 0
  %808 = vmatpush2.bf16.msra.mxu0 0
  %809 = vmatprep.subr.bf16.mxu0 0
  %810 = vmatpush2.bf16.msra.mxu0 0
  %811 = vmatprep.subr.bf16.mxu0 0
  %812 = vmatpush2.bf16.msra.mxu0 0
  %813 = vmatprep.subr.bf16.mxu0 0
  %814 = vmatpush2.bf16.msra.mxu0 0
  %815 = vmatprep.subr.bf16.mxu0 0
  %816 = vmatpush2.bf16.msra.mxu0 0
  %817 = vmatprep.subr.bf16.mxu0 0
  %818 = vmatpush2.bf16.msra.mxu0 0
  %819 = vmatprep.subr.bf16.mxu0 0
  %820 = vmatpush2.bf16.msra.mxu0 0
  %821 = vmatprep.mubr.bf16.mxu0 0
  %822 = vmatmul.mubr.bf16.gmra.mxu0 %v787
  %v823 = vpop.f32.mrf.mxu0
  %v824 = vadd.f32 0.0, %v823
  %v825 = vpop.f32.mrf.mxu0
  %v826 = vpop.f32.mrf.mxu0
  %v827 = vadd.f32 0.0, %v826
  %v828 = vpop.f32.mrf.mxu0
  %829 = vdwg.mxu0
  %v830 = vadd.f32 %v780, %v824
  %v831 = vadd.f32 %v781, %v827
  %v832 = vxor.u32 %v830, 2147483648
  %v833 = vxor.u32 %v831, 2147483648
  %v834 = vmul.f32 %v832, 1.442695
  %v835 = vpow.pop %v834
  %v836 = vmul.f32 %v833, 1.442695
  %v837 = vpow.pop %v836
  %v838 = vadd.f32 %v835, 1.0
  %v839 = vadd.f32 %v837, 1.0
  %v840 = vrcp.pop %v838
  %v841 = vmul.f32 1.0, %v840
  %v842 = vrcp.pop %v839
  %v843 = vmul.f32 1.0, %v842
  %v844 = vtanh.pop %v830
  %v845 = vtanh.pop %v831
  %v846 = vmul.f32 %v841, %v765
  %v847 = vmul.f32 %v843, %v766
  %850 = vrot.lane.b32.xlu0 %v844, 64
  %v851 = vpop.permute.xlu0 %850
  %852 = vrot.lane.b32.xlu0 %v845, 64
  %v853 = vpop.permute.xlu0 %852
  %v856 = vmul.f32 %v841, %v851
  %v857 = vmul.f32 %v843, %v853
  %860 = vrot.lane.b32.xlu0 %v856, 32
  %v861 = vpop.permute.xlu0 %860
  %862 = vrot.lane.b32.xlu0 %v857, 32
  %v863 = vpop.permute.xlu0 %862
  %v866 = vadd.f32 %v846, %v861
  %v867 = vadd.f32 %v847, %v863
  %v868 = vtanh.pop %v866
  %v869 = vtanh.pop %v867
  %872 = vrot.lane.b32.xlu0 %v868, 64
  %v873 = vpop.permute.xlu0 %872
  %874 = vrot.lane.b32.xlu0 %v869, 64
  %v875 = vpop.permute.xlu0 %874
  %v878 = vmul.f32 %v841, %v873
  %v879 = vmul.f32 %v843, %v875
  %s880 = scalar_lea.vmem [#allocation4], 96
  %v881 = vld [vmem:[%s880] sm:$0xff]
  %v882 = vld [vmem:[%s880 + $0x8] sm:$0xff]
  %v883 = vpack.c.bf16 %v879, %v878
  %885 = vrot.lane.b32.xlu0 %v883, 32
  %v886 = vpop.permute.xlu0 %885
  %v888 = vsel %vm112, %v886, 0
  %890 = vmatprep.subr.bf16.mxu0 0
  %891 = vmatpush1.bf16.msra.mxu0 0
  %892 = vmatprep.subr.bf16.mxu0 0
  %893 = vmatpush1.bf16.msra.mxu0 0
  %894 = vmatprep.subr.bf16.mxu0 0
  %895 = vmatpush1.bf16.msra.mxu0 0
  %896 = vmatprep.subr.bf16.mxu0 0
  %897 = vmatpush1.bf16.msra.mxu0 0
  %898 = vmatprep.subr.bf16.mxu0 0
  %899 = vmatpush1.bf16.msra.mxu0 0
  %900 = vmatprep.subr.bf16.mxu0 0
  %901 = vmatpush1.bf16.msra.mxu0 0
  %902 = vmatprep.subr.bf16.mxu0 0
  %903 = vmatpush1.bf16.msra.mxu0 %v270
  %904 = vmatprep.subr.bf16.mxu0 0
  %905 = vmatpush1.bf16.msra.mxu0 %v269
  %906 = vmatprep.subr.bf16.mxu0 0
  %907 = vmatpush2.bf16.msra.mxu0 0
  %908 = vmatprep.subr.bf16.mxu0 0
  %909 = vmatpush2.bf16.msra.mxu0 0
  %910 = vmatprep.subr.bf16.mxu0 0
  %911 = vmatpush2.bf16.msra.mxu0 0
  %912 = vmatprep.subr.bf16.mxu0 0
  %913 = vmatpush2.bf16.msra.mxu0 0
  %914 = vmatprep.subr.bf16.mxu0 0
  %915 = vmatpush2.bf16.msra.mxu0 0
  %916 = vmatprep.subr.bf16.mxu0 0
  %917 = vmatpush2.bf16.msra.mxu0 0
  %918 = vmatprep.subr.bf16.mxu0 0
  %919 = vmatpush2.bf16.msra.mxu0 0
  %920 = vmatprep.subr.bf16.mxu0 0
  %921 = vmatpush2.bf16.msra.mxu0 0
  %922 = vmatprep.mubr.bf16.mxu0 0
  %923 = vmatmul.mubr.bf16.gmra.mxu0 %v888
  %v924 = vpop.f32.mrf.mxu0
  %v925 = vadd.f32 0.0, %v924
  %v926 = vpop.f32.mrf.mxu0
  %v927 = vpop.f32.mrf.mxu0
  %v928 = vadd.f32 0.0, %v927
  %v929 = vpop.f32.mrf.mxu0
  %930 = vdwg.mxu0
  %v931 = vadd.f32 %v881, %v925
  %v932 = vadd.f32 %v882, %v928
  %v933 = vxor.u32 %v931, 2147483648
  %v934 = vxor.u32 %v932, 2147483648
  %v935 = vmul.f32 %v933, 1.442695
  %v936 = vpow.pop %v935
  %v937 = vmul.f32 %v934, 1.442695
  %v938 = vpow.pop %v937
  %v939 = vadd.f32 %v936, 1.0
  %v940 = vadd.f32 %v938, 1.0
  %v941 = vrcp.pop %v939
  %v942 = vmul.f32 1.0, %v941
  %v943 = vrcp.pop %v940
  %v944 = vmul.f32 1.0, %v943
  %v945 = vtanh.pop %v931
  %v946 = vtanh.pop %v932
  %v947 = vmul.f32 %v942, %v866
  %v948 = vmul.f32 %v944, %v867
  %951 = vrot.lane.b32.xlu0 %v945, 64
  %v952 = vpop.permute.xlu0 %951
  %953 = vrot.lane.b32.xlu0 %v946, 64
  %v954 = vpop.permute.xlu0 %953
  %v957 = vmul.f32 %v942, %v952
  %v958 = vmul.f32 %v944, %v954
  %961 = vrot.lane.b32.xlu0 %v957, 32
  %v962 = vpop.permute.xlu0 %961
  %963 = vrot.lane.b32.xlu0 %v958, 32
  %v964 = vpop.permute.xlu0 %963
  %v967 = vadd.f32 %v947, %v962
  %v968 = vadd.f32 %v948, %v964
  %v969 = vtanh.pop %v967
  %v970 = vtanh.pop %v968
  %973 = vrot.lane.b32.xlu0 %v969, 64
  %v974 = vpop.permute.xlu0 %973
  %975 = vrot.lane.b32.xlu0 %v970, 64
  %v976 = vpop.permute.xlu0 %975
  %v979 = vmul.f32 %v942, %v974
  %v980 = vmul.f32 %v944, %v976
  %s981 = scalar_lea.vmem [#allocation4], 112
  %v982 = vld [vmem:[%s981] sm:$0xff]
  %v983 = vld [vmem:[%s981 + $0x8] sm:$0xff]
  %v984 = vpack.c.bf16 %v980, %v979
  %986 = vrot.lane.b32.xlu0 %v984, 32
  %v987 = vpop.permute.xlu0 %986
  %v989 = vsel %vm112, %v987, 0
  %991 = vmatprep.subr.bf16.mxu0 0
  %992 = vmatpush1.bf16.msra.mxu0 0
  %993 = vmatprep.subr.bf16.mxu0 0
  %994 = vmatpush1.bf16.msra.mxu0 0
  %995 = vmatprep.subr.bf16.mxu0 0
  %996 = vmatpush1.bf16.msra.mxu0 0
  %997 = vmatprep.subr.bf16.mxu0 0
  %998 = vmatpush1.bf16.msra.mxu0 0
  %999 = vmatprep.subr.bf16.mxu0 0
  %1000 = vmatpush1.bf16.msra.mxu0 0
  %1001 = vmatprep.subr.bf16.mxu0 0
  %1002 = vmatpush1.bf16.msra.mxu0 0
  %1003 = vmatprep.subr.bf16.mxu0 0
  %1004 = vmatpush1.bf16.msra.mxu0 %v270
  %1005 = vmatprep.subr.bf16.mxu0 0
  %1006 = vmatpush1.bf16.msra.mxu0 %v269
  %1007 = vmatprep.subr.bf16.mxu0 0
  %1008 = vmatpush2.bf16.msra.mxu0 0
  %1009 = vmatprep.subr.bf16.mxu0 0
  %1010 = vmatpush2.bf16.msra.mxu0 0
  %1011 = vmatprep.subr.bf16.mxu0 0
  %1012 = vmatpush2.bf16.msra.mxu0 0
  %1013 = vmatprep.subr.bf16.mxu0 0
  %1014 = vmatpush2.bf16.msra.mxu0 0
  %1015 = vmatprep.subr.bf16.mxu0 0
  %1016 = vmatpush2.bf16.msra.mxu0 0
  %1017 = vmatprep.subr.bf16.mxu0 0
  %1018 = vmatpush2.bf16.msra.mxu0 0
  %1019 = vmatprep.subr.bf16.mxu0 0
  %1020 = vmatpush2.bf16.msra.mxu0 0
  %1021 = vmatprep.subr.bf16.mxu0 0
  %1022 = vmatpush2.bf16.msra.mxu0 0
  %1023 = vmatprep.mubr.bf16.mxu0 0
  %1024 = vmatmul.mubr.bf16.gmra.mxu0 %v989
  %v1025 = vpop.f32.mrf.mxu0
  %v1026 = vadd.f32 0.0, %v1025
  %v1027 = vpop.f32.mrf.mxu0
  %v1028 = vpop.f32.mrf.mxu0
  %v1029 = vadd.f32 0.0, %v1028
  %v1030 = vpop.f32.mrf.mxu0
  %1031 = vdwg.mxu0
  %v1032 = vadd.f32 %v982, %v1026
  %v1033 = vadd.f32 %v983, %v1029
  %v1034 = vxor.u32 %v1032, 2147483648
  %v1035 = vxor.u32 %v1033, 2147483648
  %v1036 = vmul.f32 %v1034, 1.442695
  %v1037 = vpow.pop %v1036
  %v1038 = vmul.f32 %v1035, 1.442695
  %v1039 = vpow.pop %v1038
  %v1040 = vadd.f32 %v1037, 1.0
  %v1041 = vadd.f32 %v1039, 1.0
  %v1042 = vrcp.pop %v1040
  %v1043 = vmul.f32 1.0, %v1042
  %v1044 = vrcp.pop %v1041
  %v1045 = vmul.f32 1.0, %v1044
  %v1046 = vtanh.pop %v1032
  %v1047 = vtanh.pop %v1033
  %v1048 = vmul.f32 %v1043, %v967
  %v1049 = vmul.f32 %v1045, %v968
  %1052 = vrot.lane.b32.xlu0 %v1046, 64
  %v1053 = vpop.permute.xlu0 %1052
  %1054 = vrot.lane.b32.xlu0 %v1047, 64
  %v1055 = vpop.permute.xlu0 %1054
  %v1058 = vmul.f32 %v1043, %v1053
  %v1059 = vmul.f32 %v1045, %v1055
  %1062 = vrot.lane.b32.xlu0 %v1058, 32
  %v1063 = vpop.permute.xlu0 %1062
  %1064 = vrot.lane.b32.xlu0 %v1059, 32
  %v1065 = vpop.permute.xlu0 %1064
  %v1068 = vadd.f32 %v1048, %v1063
  %v1069 = vadd.f32 %v1049, %v1065
  %v1070 = vtanh.pop %v1068
  %v1071 = vtanh.pop %v1069
  %1074 = vrot.lane.b32.xlu0 %v1070, 64
  %v1075 = vpop.permute.xlu0 %1074
  %1076 = vrot.lane.b32.xlu0 %v1071, 64
  %v1077 = vpop.permute.xlu0 %1076
  %v1080 = vmul.f32 %v1043, %v1075
  %v1081 = vmul.f32 %v1045, %v1077
  %1084 = vrot.lane.b32.xlu0 %v1080, 32
  %v1085 = vpop.permute.xlu0 %1084
  %1086 = vrot.lane.b32.xlu0 %v1081, 32
  %v1087 = vpop.permute.xlu0 %1086
  %1090 = vst.msk [vmem:[#allocation2] sm:$0xff] %vm112, %v1085
  %1091 = vst.msk [vmem:[#allocation2 + $0x8] sm:$0xff] %vm112, %v1087
  %1094 = vrot.lane.b32.xlu0 %v1068, 96
  %v1095 = vpop.permute.xlu0 %1094
  %1096 = vrot.lane.b32.xlu0 %v1069, 96
  %v1097 = vpop.permute.xlu0 %1096
  %1100 = vst.msk [vmem:[#allocation3] sm:$0xff] %vm112, %v1095
  %1101 = vst.msk [vmem:[#allocation3 + $0x8] sm:$0xff] %vm112, %v1097
  // Predicated region
  $region30: #{lstm_model_forward.3} parent=0 // pred_check
    %p1102 = pneg %p24
  $region31: #{lstm_model_forward.3} parent=0 // pred_check_branch
    %1104 = sbr.rel (%p1102) target = $region33
  $region32: #{lstm_model_forward.3} parent=0 // pred_region
    %v1105 = vpack.c.bf16 %v1081, %v1080
    %v1106 = vld [vmem:[%s4] sm:$0xf]
    %v1107 = vld [vmem:[%s4 + $0x4] sm:$0xf]
    %v1108 = vld [vmem:[%s4 + $0x8] sm:$0xf]
    %v1109 = vld [vmem:[%s4 + $0xc] sm:$0xf]
    %v1110 = vld [vmem:[%s5] sm:$0x1]
    %v1112 = vlaneseq
    %v1113 = vshrl.u32 %v1112, 7
    %v1114 = vsub.s32 0, %v1113
    %v1115 = vrot.slane %v1110, %v1114
    %1118 = vrot.lane.b32.xlu0 %v1105, 32
    %v1119 = vpop.permute.xlu0 %1118
    %v1124 = vunpack.c.l.b16 %v1106
    %v1125 = vunpack.c.l.b16 %v1107
    %v1126 = vunpack.c.l.b16 %v1108
    %v1127 = vunpack.c.l.b16 %v1109
    %v1128 = vpack.c.b16 %v1125, %v1124
    %v1129 = vpack.c.b16 %v1127, %v1126
    %v1133 = vsel %vm112, %v1119, 0
    %1135 = vmatprep.subr.bf16.mxu0 0
    %1136 = vmatpush1.bf16.msra.mxu0 0
    %1137 = vmatprep.subr.bf16.mxu0 0
    %1138 = vmatpush1.bf16.msra.mxu0 0
    %1139 = vmatprep.subr.bf16.mxu0 0
    %1140 = vmatpush1.bf16.msra.mxu0 0
    %1141 = vmatprep.subr.bf16.mxu0 0
    %1142 = vmatpush1.bf16.msra.mxu0 0
    %1143 = vmatprep.subr.bf16.mxu0 0
    %1144 = vmatpush1.bf16.msra.mxu0 0
    %1145 = vmatprep.subr.bf16.mxu0 0
    %1146 = vmatpush1.bf16.msra.mxu0 0
    %1147 = vmatprep.subr.bf16.mxu0 0
    %1148 = vmatpush1.bf16.msra.mxu0 %v1129
    %1149 = vmatprep.subr.bf16.mxu0 0
    %1150 = vmatpush1.bf16.msra.mxu0 %v1128
    %1151 = vmatprep.subr.bf16.mxu0 0
    %1152 = vmatpush2.bf16.msra.mxu0 0
    %1153 = vmatprep.subr.bf16.mxu0 0
    %1154 = vmatpush2.bf16.msra.mxu0 0
    %1155 = vmatprep.subr.bf16.mxu0 0
    %1156 = vmatpush2.bf16.msra.mxu0 0
    %1157 = vmatprep.subr.bf16.mxu0 0
    %1158 = vmatpush2.bf16.msra.mxu0 0
    %1159 = vmatprep.subr.bf16.mxu0 0
    %1160 = vmatpush2.bf16.msra.mxu0 0
    %1161 = vmatprep.subr.bf16.mxu0 0
    %1162 = vmatpush2.bf16.msra.mxu0 0
    %1163 = vmatprep.subr.bf16.mxu0 0
    %1164 = vmatpush2.bf16.msra.mxu0 0
    %1165 = vmatprep.subr.bf16.mxu0 0
    %1166 = vmatpush2.bf16.msra.mxu0 0
    %1167 = vmatprep.mubr.bf16.mxu0 0
    %1168 = vmatmul.mubr.bf16.gmra.mxu0 %v1133
    %v1169 = vpop.f32.mrf.mxu0
    %v1170 = vadd.f32 %v1115, %v1169
    %v1171 = vpop.f32.mrf.mxu0
    %v1172 = vpop.f32.mrf.mxu0
    %v1173 = vadd.f32 %v1115, %v1172
    %v1174 = vpop.f32.mrf.mxu0
    %1175 = vdwg.mxu0
    %vm1176 = vcmask 64512
    %1177 = vst.msk [vmem:[%s6] sm:$0xff] %vm1176, %v1170
    %1178 = vst.msk [vmem:[%s6 + $0x8] sm:$0xff] %vm1176, %v1173
  $region33: #{lstm_model_forward.3} parent=0 // pred_fallthru
    _
  // Predicated region
  $region34: #{lstm_model_forward.3} parent=0 // pred_check
    _
  $region35: #{lstm_model_forward.3} parent=0 // pred_check_branch
    %1180 = sbr.rel (0) target = $region37
  $region36: #{lstm_model_forward.3} parent=0 // pred_region
    _
  $region37: #{lstm_model_forward.3} parent=0 // pred_fallthru
    _
  // Predicated region
  $region38: #{lstm_model_forward.3} parent=0 // pred_check
    _
  $region39: #{lstm_model_forward.3} parent=0 // pred_check_branch
    %1182 = sbr.rel (0) target = $region41
  $region40: #{lstm_model_forward.3} parent=0 // pred_region
    _
  $region41: #{lstm_model_forward.3} parent=0 // pred_fallthru
    _

</llo_original>
